<compile_context>
chip_gen: v7x
topology: tpu7x:2x2x1
jax: 0.10.0
libtpu: 0.0.40
codegen_flags: <defaults>
</compile_context>

<pallas_src>
import numpy as np

import jax
import jax.numpy as jnp
from jax import lax
from jax.experimental import pallas as pl
from jax.experimental.pallas import tpu as pltpu


_STRIDES = (2, 1, 2, 1, 2)   # static architectural constants of Encoder.net
_KSIZE = 3


# ----------------------------------------------------------------------------
# In-kernel exact GELU:  0.5*x*(1+erf(x/sqrt(2)))
# erf via Abramowitz & Stegun 7.1.26 (max abs err 1.5e-7).  The divide is done
# with the EUP approximate reciprocal (free slot); everything else stays f32.
# ----------------------------------------------------------------------------
def _gelu_exact(x):
    u = x * 0.7071067811865476
    au = jnp.abs(u)
    t = pl.reciprocal(1.0 + 0.3275911 * au, approx=True)
    poly = t * (0.254829592 + t * (-0.284496736 + t * (1.421413741
              + t * (-1.453152027 + t * 1.061405429))))
    erf_abs = 1.0 - poly * jnp.exp(-au * au)
    erf = jnp.where(u < 0.0, -erf_abs, erf_abs)
    return 0.5 * x * (1.0 + erf)


# ----------------------------------------------------------------------------
# The single fused kernel.
#   x_ref                 : (N*H0, W0*C0)              bf16   rows=(n,h) cols=(w,c)
#   per conv layer l (5x) : S_l   (3, N*Ho, N*H)       f32    0/1 row selection
#                           WW_l  (W*Cin, 3*Wo*Cout)   bf16   lane-concat taps
#                           b_l   (1, Wo*Cout)         f32    bias tiled over Wo
#   head                  : WL    (H5*W5*C5, latent)   bf16   flattened linear W
#                           bl    (1, latent)          f32
#   output                : (N, latent)                f32
#   scratch               : flat  (N, H5*W5*C5)        bf16   flatten relayout
# ----------------------------------------------------------------------------
def _encoder_kernel(x_ref, *refs):
    n_conv = len(_STRIDES)
    conv_refs = refs[:3 * n_conv]
    wl_ref, bl_ref, o_ref, flat_ref = refs[3 * n_conv:]

    a = x_ref[...]                                     # bf16 (N*H, W*Cin)
    for l in range(n_conv):
        s_ref, ww_ref, b_ref = conv_refs[3 * l: 3 * l + 3]
        rows = s_ref.shape[1]                          # N*Ho
        wc_out = ww_ref.shape[1] // _KSIZE             # Wo*Cout

        # ONE wide MXU matmul for all three H-taps (lane-concatenated weights):
        #   u[:, kh*Wo*Cout:(kh+1)*Wo*Cout] == a @ WW_kh
        u = jnp.dot(a, ww_ref[...], preferred_element_type=jnp.float32)

        # Cheap per-tap row selection (H-stride / H-padding / batch separation)
        # on static, 128-aligned lane slices of u; kept in f32 so the result is
        # numerically identical to summing the per-tap bf16 matmuls.
        acc = jnp.zeros((rows, wc_out), jnp.float32)
        for kh in range(_KSIZE):
            u_kh = u[:, kh * wc_out:(kh + 1) * wc_out]
            if _STRIDES[l] == 1 and kh == 1:
                acc = acc + u_kh                       # centre tap, S == I
            else:
                acc = acc + jnp.dot(s_ref[kh], u_kh,
                                    preferred_element_type=jnp.float32)
        acc = _gelu_exact(acc + b_ref[...])            # bias + exact GELU, f32
        a = acc.astype(jnp.bfloat16)                   # next layer's operand

    # Flatten: relayout (N*H5, W5*C5) -> (N, H5*W5*C5) through a tiny bf16
    # VMEM scratch (static sub-tile stores), then ONE K=256 head matmul.
    n_img, latent = o_ref.shape
    h5 = a.shape[0] // n_img
    wc5 = a.shape[1]
    for img in range(n_img):
        for hh in range(h5):
            flat_ref[pl.ds(img, 1), pl.ds(hh * wc5, wc5)] = (
                a[img * h5 + hh: img * h5 + hh + 1, :])
    z = jnp.dot(flat_ref[...], wl_ref[...], preferred_element_type=jnp.float32)
    o_ref[...] = (z + bl_ref[...]).astype(o_ref.dtype)


# ----------------------------------------------------------------------------
# Forward wrapper: only trivial layout glue outside the kernel.
# ----------------------------------------------------------------------------
def encoder_forward(x_nchw, packed):
    n, c, h, w = x_nchw.shape
    # NCHW -> NHWC -> rows=(n,h), cols=(w,c); bf16 for MXU operands.
    x2d = jnp.transpose(x_nchw, (0, 2, 3, 1)).reshape(n * h, w * c)
    x2d = x2d.astype(jnp.bfloat16)

    args = [x2d]
    for s_mat, ww_mat, b_row in packed["convs"]:
        args.extend((s_mat, ww_mat, b_row))
    wl_mat, bl_row = packed["head"]
    args.extend((wl_mat, bl_row))

    flat_dim, latent = wl_mat.shape
    vmem = pl.BlockSpec(memory_space=pltpu.MemorySpace.VMEM)
    return pl.pallas_call(
        _encoder_kernel,
        out_shape=jax.ShapeDtypeStruct((n, latent), jnp.float32),
        in_specs=[vmem] * len(args),
        out_specs=vmem,
        scratch_shapes=[pltpu.VMEM((n, flat_dim), jnp.bfloat16)],
    )(*args)


# ----------------------------------------------------------------------------
# One-time host-side weight packing (outside the forward / jit path).
# ----------------------------------------------------------------------------
def pack_params(raw, batch, height, width, dtype=jnp.bfloat16):
    n, h, w = batch, height, width
    convs_packed = []
    for (wt, b), s in zip(raw["convs"], _STRIDES):
        wt = np.asarray(wt, np.float32)               # (Cout, Cin, 3, 3)
        b = np.asarray(b, np.float32)
        cout, cin, _, _ = wt.shape
        ho = (h + 2 - _KSIZE) // s + 1
        wo = (w + 2 - _KSIZE) // s + 1

        S = np.zeros((_KSIZE, n * ho, n * h), np.float32)
        WW = np.zeros((w * cin, _KSIZE * wo * cout), np.float32)
        for kh in range(_KSIZE):
            for img in range(n):
                for oh in range(ho):
                    hin = s * oh + kh - 1             # padded-H tap position
                    if 0 <= hin < h:
                        S[kh, img * ho + oh, img * h + hin] = 1.0
            base = kh * wo * cout
            for ow in range(wo):
                for kw in range(_KSIZE):
                    win = s * ow + kw - 1             # padded-W tap position
                    if 0 <= win < w:
                        WW[win * cin:(win + 1) * cin,
                           base + ow * cout: base + (ow + 1) * cout] = wt[:, :, kh, kw].T
        b_row = np.tile(b, wo).reshape(1, wo * cout)
        convs_packed.append((jnp.asarray(S, jnp.float32),      # f32 selection
                             jnp.asarray(WW, dtype),           # bf16 weights
                             jnp.asarray(b_row, jnp.float32)))
        h, w = ho, wo

    # Linear head.  PyTorch flatten order is (c, h, w); the kernel's flattened
    # rows are ordered (h, w, c) -> permute + flatten the weight once here.
    wl, bl = raw["linear"]                            # wl: (latent, C5*H5*W5)
    wl = np.asarray(wl, np.float32)
    bl = np.asarray(bl, np.float32)
    latent = wl.shape[0]
    c_last = np.asarray(raw["convs"][-1][0]).shape[0]
    wl_r = wl.reshape(latent, c_last, h, w)           # (j, c, h, w)
    wl_p = np.transpose(wl_r, (2, 3, 1, 0))           # (h, w, c, j)
    WL = wl_p.reshape(h * w * c_last, latent)         # (H5*W5*C5, latent)
    head = (jnp.asarray(WL, dtype), jnp.asarray(bl.reshape(1, latent), jnp.float32))
    return {"convs": convs_packed, "head": head}


# ----------------------------------------------------------------------------
# Deterministic synthetic parameters (shapes from Encoder.__init__).
# ----------------------------------------------------------------------------
def init_params(key, num_input_channels, c_hid, latent_dim):
    chans = [
        (num_input_channels, c_hid),
        (c_hid, c_hid),
        (c_hid, 2 * c_hid),
        (2 * c_hid, 2 * c_hid),
        (2 * c_hid, 2 * c_hid),
    ]
    keys = jax.random.split(key, 2 * len(chans) + 2)
    convs = []
    for i, (cin, cout) in enumerate(chans):
        wt = jax.random.normal(keys[2 * i], (cout, cin, 3, 3), jnp.float32) * 0.1
        b = jax.random.normal(keys[2 * i + 1], (cout,), jnp.float32) * 0.05
        convs.append((wt, b))
    in_feat = 2 * 16 * c_hid
    wl = jax.random.normal(keys[-2], (latent_dim, in_feat), jnp.float32) * 0.05
    bl = jax.random.normal(keys[-1], (latent_dim,), jnp.float32) * 0.05
    return {"convs": convs, "linear": (wl, bl)}


# ----------------------------------------------------------------------------
# Pure-JAX f32 reference (numerical sanity check).
# ----------------------------------------------------------------------------
def encoder_reference(x_nchw, raw):
    x = x_nchw
    for (wt, b), s in zip(raw["convs"], _STRIDES):
        x = lax.conv_general_dilated(
            x, wt, window_strides=(s, s), padding=((1, 1), (1, 1)),
            dimension_numbers=("NCHW", "OIHW", "NCHW"))
        x = x + b.reshape(1, -1, 1, 1)
        x = jax.nn.gelu(x, approximate=False)
    xf = x.reshape(x.shape[0], -1)                    # NCHW flatten (c, h, w)
    wl, bl = raw["linear"]
    return xf @ wl.T + bl


# ----------------------------------------------------------------------------
if __name__ == "__main__":
    # Spatial must be 32x32 so three stride-2 convs give 4x4 and Flatten yields
    # 2*16*c_hid features, matching nn.Linear(2*16*c_hid, latent_dim).
    batch, in_ch, c_hid, latent_dim, hw = 2, 3, 8, 16, 32

    key = jax.random.PRNGKey(0)
    k_x, k_p = jax.random.split(key)
    x = jax.random.normal(k_x, (batch, in_ch, hw, hw), jnp.float32)

    raw_params = init_params(k_p, in_ch, c_hid, latent_dim)
    packed = pack_params(raw_params, batch, hw, hw)

    fwd = jax.jit(encoder_forward)
    z = jax.block_until_ready(fwd(x, packed))
    assert z.shape == (batch, latent_dim), z.shape

    z_ref = encoder_reference(x, raw_params)
    max_err = float(jnp.max(jnp.abs(z - z_ref)))
    # bf16 MXU operands (f32 accumulation) => slightly looser tolerance.
    assert jnp.allclose(z, z_ref, rtol=3e-2, atol=3e-2), max_err

    print("KERNEL_OK")
</pallas_src>

<mosaic_0001>
module attributes {stable_mosaic.version = 11 : i64} {
  func.func @_encoder_kernel(%arg0: memref<64x96xbf16, #tpu.memory_space<vmem>>, %arg1: memref<3x32x64xf32, #tpu.memory_space<vmem>>, %arg2: memref<96x384xbf16, #tpu.memory_space<vmem>>, %arg3: memref<1x128xf32, #tpu.memory_space<vmem>>, %arg4: memref<3x32x32xf32, #tpu.memory_space<vmem>>, %arg5: memref<128x384xbf16, #tpu.memory_space<vmem>>, %arg6: memref<1x128xf32, #tpu.memory_space<vmem>>, %arg7: memref<3x16x32xf32, #tpu.memory_space<vmem>>, %arg8: memref<128x384xbf16, #tpu.memory_space<vmem>>, %arg9: memref<1x128xf32, #tpu.memory_space<vmem>>, %arg10: memref<3x16x16xf32, #tpu.memory_space<vmem>>, %arg11: memref<128x384xbf16, #tpu.memory_space<vmem>>, %arg12: memref<1x128xf32, #tpu.memory_space<vmem>>, %arg13: memref<3x8x16xf32, #tpu.memory_space<vmem>>, %arg14: memref<128x192xbf16, #tpu.memory_space<vmem>>, %arg15: memref<1x64xf32, #tpu.memory_space<vmem>>, %arg16: memref<256x16xbf16, #tpu.memory_space<vmem>>, %arg17: memref<1x16xf32, #tpu.memory_space<vmem>>, %arg18: memref<2x16xf32, #tpu.memory_space<vmem>>, %arg19: memref<2x256xbf16, #tpu.memory_space<vmem>>) attributes {dimension_semantics = [], scalar_prefetch = 0 : i64, scratch_operands = 1 : i64, tpu.core_type = #tpu.core_type<tc>} {
    %c0 = arith.constant 0 : index
    %c0_0 = arith.constant 0 : index
    %0 = vector.load %arg0[%c0, %c0_0] : memref<64x96xbf16, #tpu.memory_space<vmem>>, vector<64x96xbf16>
    %c0_1 = arith.constant 0 : index
    %c0_2 = arith.constant 0 : index
    %1 = vector.load %arg2[%c0_1, %c0_2] : memref<96x384xbf16, #tpu.memory_space<vmem>>, vector<96x384xbf16>
    %cst = arith.constant dense<0.000000e+00> : vector<64x384xf32>
    %2 = tpu.matmul %0, %1, %cst {dimension_numbers = #tpu.dot_dimension_numbers<[1], [0], [0], [1], [0, 0, 1, 1], [], []>} : vector<64x96xbf16>, vector<96x384xbf16>, vector<64x384xf32> -> vector<64x384xf32>
    %cst_3 = arith.constant 0.000000e+00 : f32
    %3 = vector.broadcast %cst_3 : f32 to vector<32x128xf32>
    %4 = vector.extract_strided_slice %2 {offsets = [0, 0], sizes = [64, 128], strides = [1, 1]} : vector<64x384xf32> to vector<64x128xf32>
    %c0_4 = arith.constant 0 : index
    %c0_5 = arith.constant 0 : index
    %c0_6 = arith.constant 0 : index
    %5 = vector.load %arg1[%c0_4, %c0_5, %c0_6] : memref<3x32x64xf32, #tpu.memory_space<vmem>>, vector<1x32x64xf32>
    %6 = vector.shape_cast %5 : vector<1x32x64xf32> to vector<32x64xf32>
    %cst_7 = arith.constant dense<0.000000e+00> : vector<32x128xf32>
    %7 = tpu.matmul %6, %4, %cst_7 {dimension_numbers = #tpu.dot_dimension_numbers<[1], [0], [0], [1], [0, 0, 1, 1], [], []>} : vector<32x64xf32>, vector<64x128xf32>, vector<32x128xf32> -> vector<32x128xf32>
    %8 = arith.addf %3, %7 : vector<32x128xf32>
    %9 = vector.extract_strided_slice %2 {offsets = [0, 128], sizes = [64, 128], strides = [1, 1]} : vector<64x384xf32> to vector<64x128xf32>
    %c1 = arith.constant 1 : index
    %c0_8 = arith.constant 0 : index
    %c0_9 = arith.constant 0 : index
    %10 = vector.load %arg1[%c1, %c0_8, %c0_9] : memref<3x32x64xf32, #tpu.memory_space<vmem>>, vector<1x32x64xf32>
    %11 = vector.shape_cast %10 : vector<1x32x64xf32> to vector<32x64xf32>
    %cst_10 = arith.constant dense<0.000000e+00> : vector<32x128xf32>
    %12 = tpu.matmul %11, %9, %cst_10 {dimension_numbers = #tpu.dot_dimension_numbers<[1], [0], [0], [1], [0, 0, 1, 1], [], []>} : vector<32x64xf32>, vector<64x128xf32>, vector<32x128xf32> -> vector<32x128xf32>
    %13 = arith.addf %8, %12 : vector<32x128xf32>
    %14 = vector.extract_strided_slice %2 {offsets = [0, 256], sizes = [64, 128], strides = [1, 1]} : vector<64x384xf32> to vector<64x128xf32>
    %c2 = arith.constant 2 : index
    %c0_11 = arith.constant 0 : index
    %c0_12 = arith.constant 0 : index
    %15 = vector.load %arg1[%c2, %c0_11, %c0_12] : memref<3x32x64xf32, #tpu.memory_space<vmem>>, vector<1x32x64xf32>
    %16 = vector.shape_cast %15 : vector<1x32x64xf32> to vector<32x64xf32>
    %cst_13 = arith.constant dense<0.000000e+00> : vector<32x128xf32>
    %17 = tpu.matmul %16, %14, %cst_13 {dimension_numbers = #tpu.dot_dimension_numbers<[1], [0], [0], [1], [0, 0, 1, 1], [], []>} : vector<32x64xf32>, vector<64x128xf32>, vector<32x128xf32> -> vector<32x128xf32>
    %18 = arith.addf %13, %17 : vector<32x128xf32>
    %c0_14 = arith.constant 0 : index
    %c0_15 = arith.constant 0 : index
    %19 = vector.load %arg3[%c0_14, %c0_15] : memref<1x128xf32, #tpu.memory_space<vmem>>, vector<1x128xf32>
    %20 = vector.broadcast %19 : vector<1x128xf32> to vector<32x128xf32>
    %21 = arith.addf %18, %20 : vector<32x128xf32>
    %cst_16 = arith.constant 0.707106769 : f32
    %22 = vector.broadcast %cst_16 : f32 to vector<32x128xf32>
    %23 = arith.mulf %21, %22 : vector<32x128xf32>
    %24 = math.absf %23 : vector<32x128xf32>
    %cst_17 = arith.constant 0.327591091 : f32
    %25 = vector.broadcast %cst_17 : f32 to vector<32x128xf32>
    %26 = arith.mulf %25, %24 : vector<32x128xf32>
    %cst_18 = arith.constant 1.000000e+00 : f32
    %27 = vector.broadcast %cst_18 : f32 to vector<32x128xf32>
    %28 = arith.addf %27, %26 : vector<32x128xf32>
    %29 = tpu.reciprocal %28 {approx = true} : vector<32x128xf32> -> vector<32x128xf32>
    %cst_19 = arith.constant 1.06140542 : f32
    %30 = vector.broadcast %cst_19 : f32 to vector<32x128xf32>
    %31 = arith.mulf %29, %30 : vector<32x128xf32>
    %cst_20 = arith.constant -1.45315206 : f32
    %32 = vector.broadcast %cst_20 : f32 to vector<32x128xf32>
    %33 = arith.addf %32, %31 : vector<32x128xf32>
    %34 = arith.mulf %29, %33 : vector<32x128xf32>
    %cst_21 = arith.constant 1.42141378 : f32
    %35 = vector.broadcast %cst_21 : f32 to vector<32x128xf32>
    %36 = arith.addf %35, %34 : vector<32x128xf32>
    %37 = arith.mulf %29, %36 : vector<32x128xf32>
    %cst_22 = arith.constant -0.284496725 : f32
    %38 = vector.broadcast %cst_22 : f32 to vector<32x128xf32>
    %39 = arith.addf %38, %37 : vector<32x128xf32>
    %40 = arith.mulf %29, %39 : vector<32x128xf32>
    %cst_23 = arith.constant 0.254829586 : f32
    %41 = vector.broadcast %cst_23 : f32 to vector<32x128xf32>
    %42 = arith.addf %41, %40 : vector<32x128xf32>
    %43 = arith.mulf %29, %42 : vector<32x128xf32>
    %cst_24 = arith.constant 0.000000e+00 : f32
    %44 = vector.broadcast %cst_24 : f32 to vector<32x128xf32>
    %45 = arith.subf %44, %24 : vector<32x128xf32>
    %46 = arith.mulf %45, %24 : vector<32x128xf32>
    %47 = math.exp %46 : vector<32x128xf32>
    %48 = arith.mulf %43, %47 : vector<32x128xf32>
    %cst_25 = arith.constant 1.000000e+00 : f32
    %49 = vector.broadcast %cst_25 : f32 to vector<32x128xf32>
    %50 = arith.subf %49, %48 : vector<32x128xf32>
    %cst_26 = arith.constant 0.000000e+00 : f32
    %51 = vector.broadcast %cst_26 : f32 to vector<32x128xf32>
    %52 = arith.cmpf olt, %23, %51 : vector<32x128xf32>
    %cst_27 = arith.constant 0.000000e+00 : f32
    %53 = vector.broadcast %cst_27 : f32 to vector<32x128xf32>
    %54 = arith.subf %53, %50 : vector<32x128xf32>
    %55 = arith.select %52, %54, %50 : vector<32x128xi1>, vector<32x128xf32>
    %cst_28 = arith.constant 5.000000e-01 : f32
    %56 = vector.broadcast %cst_28 : f32 to vector<32x128xf32>
    %57 = arith.mulf %56, %21 : vector<32x128xf32>
    %cst_29 = arith.constant 1.000000e+00 : f32
    %58 = vector.broadcast %cst_29 : f32 to vector<32x128xf32>
    %59 = arith.addf %58, %55 : vector<32x128xf32>
    %60 = arith.mulf %57, %59 : vector<32x128xf32>
    %61 = arith.truncf %60 : vector<32x128xf32> to vector<32x128xbf16>
    %c0_30 = arith.constant 0 : index
    %c0_31 = arith.constant 0 : index
    %62 = vector.load %arg5[%c0_30, %c0_31] : memref<128x384xbf16, #tpu.memory_space<vmem>>, vector<128x384xbf16>
    %cst_32 = arith.constant dense<0.000000e+00> : vector<32x384xf32>
    %63 = tpu.matmul %61, %62, %cst_32 {dimension_numbers = #tpu.dot_dimension_numbers<[1], [0], [0], [1], [0, 0, 1, 1], [], []>} : vector<32x128xbf16>, vector<128x384xbf16>, vector<32x384xf32> -> vector<32x384xf32>
    %cst_33 = arith.constant 0.000000e+00 : f32
    %64 = vector.broadcast %cst_33 : f32 to vector<32x128xf32>
    %65 = vector.extract_strided_slice %63 {offsets = [0, 0], sizes = [32, 128], strides = [1, 1]} : vector<32x384xf32> to vector<32x128xf32>
    %c0_34 = arith.constant 0 : index
    %c0_35 = arith.constant 0 : index
    %c0_36 = arith.constant 0 : index
    %66 = vector.load %arg4[%c0_34, %c0_35, %c0_36] : memref<3x32x32xf32, #tpu.memory_space<vmem>>, vector<1x32x32xf32>
    %67 = vector.shape_cast %66 : vector<1x32x32xf32> to vector<32x32xf32>
    %cst_37 = arith.constant dense<0.000000e+00> : vector<32x128xf32>
    %68 = tpu.matmul %67, %65, %cst_37 {dimension_numbers = #tpu.dot_dimension_numbers<[1], [0], [0], [1], [0, 0, 1, 1], [], []>} : vector<32x32xf32>, vector<32x128xf32>, vector<32x128xf32> -> vector<32x128xf32>
    %69 = arith.addf %64, %68 : vector<32x128xf32>
    %70 = vector.extract_strided_slice %63 {offsets = [0, 128], sizes = [32, 128], strides = [1, 1]} : vector<32x384xf32> to vector<32x128xf32>
    %71 = arith.addf %69, %70 : vector<32x128xf32>
    %72 = vector.extract_strided_slice %63 {offsets = [0, 256], sizes = [32, 128], strides = [1, 1]} : vector<32x384xf32> to vector<32x128xf32>
    %c2_38 = arith.constant 2 : index
    %c0_39 = arith.constant 0 : index
    %c0_40 = arith.constant 0 : index
    %73 = vector.load %arg4[%c2_38, %c0_39, %c0_40] : memref<3x32x32xf32, #tpu.memory_space<vmem>>, vector<1x32x32xf32>
    %74 = vector.shape_cast %73 : vector<1x32x32xf32> to vector<32x32xf32>
    %cst_41 = arith.constant dense<0.000000e+00> : vector<32x128xf32>
    %75 = tpu.matmul %74, %72, %cst_41 {dimension_numbers = #tpu.dot_dimension_numbers<[1], [0], [0], [1], [0, 0, 1, 1], [], []>} : vector<32x32xf32>, vector<32x128xf32>, vector<32x128xf32> -> vector<32x128xf32>
    %76 = arith.addf %71, %75 : vector<32x128xf32>
    %c0_42 = arith.constant 0 : index
    %c0_43 = arith.constant 0 : index
    %77 = vector.load %arg6[%c0_42, %c0_43] : memref<1x128xf32, #tpu.memory_space<vmem>>, vector<1x128xf32>
    %78 = vector.broadcast %77 : vector<1x128xf32> to vector<32x128xf32>
    %79 = arith.addf %76, %78 : vector<32x128xf32>
    %cst_44 = arith.constant 0.707106769 : f32
    %80 = vector.broadcast %cst_44 : f32 to vector<32x128xf32>
    %81 = arith.mulf %79, %80 : vector<32x128xf32>
    %82 = math.absf %81 : vector<32x128xf32>
    %cst_45 = arith.constant 0.327591091 : f32
    %83 = vector.broadcast %cst_45 : f32 to vector<32x128xf32>
    %84 = arith.mulf %83, %82 : vector<32x128xf32>
    %cst_46 = arith.constant 1.000000e+00 : f32
    %85 = vector.broadcast %cst_46 : f32 to vector<32x128xf32>
    %86 = arith.addf %85, %84 : vector<32x128xf32>
    %87 = tpu.reciprocal %86 {approx = true} : vector<32x128xf32> -> vector<32x128xf32>
    %cst_47 = arith.constant 1.06140542 : f32
    %88 = vector.broadcast %cst_47 : f32 to vector<32x128xf32>
    %89 = arith.mulf %87, %88 : vector<32x128xf32>
    %cst_48 = arith.constant -1.45315206 : f32
    %90 = vector.broadcast %cst_48 : f32 to vector<32x128xf32>
    %91 = arith.addf %90, %89 : vector<32x128xf32>
    %92 = arith.mulf %87, %91 : vector<32x128xf32>
    %cst_49 = arith.constant 1.42141378 : f32
    %93 = vector.broadcast %cst_49 : f32 to vector<32x128xf32>
    %94 = arith.addf %93, %92 : vector<32x128xf32>
    %95 = arith.mulf %87, %94 : vector<32x128xf32>
    %cst_50 = arith.constant -0.284496725 : f32
    %96 = vector.broadcast %cst_50 : f32 to vector<32x128xf32>
    %97 = arith.addf %96, %95 : vector<32x128xf32>
    %98 = arith.mulf %87, %97 : vector<32x128xf32>
    %cst_51 = arith.constant 0.254829586 : f32
    %99 = vector.broadcast %cst_51 : f32 to vector<32x128xf32>
    %100 = arith.addf %99, %98 : vector<32x128xf32>
    %101 = arith.mulf %87, %100 : vector<32x128xf32>
    %cst_52 = arith.constant 0.000000e+00 : f32
    %102 = vector.broadcast %cst_52 : f32 to vector<32x128xf32>
    %103 = arith.subf %102, %82 : vector<32x128xf32>
    %104 = arith.mulf %103, %82 : vector<32x128xf32>
    %105 = math.exp %104 : vector<32x128xf32>
    %106 = arith.mulf %101, %105 : vector<32x128xf32>
    %cst_53 = arith.constant 1.000000e+00 : f32
    %107 = vector.broadcast %cst_53 : f32 to vector<32x128xf32>
    %108 = arith.subf %107, %106 : vector<32x128xf32>
    %cst_54 = arith.constant 0.000000e+00 : f32
    %109 = vector.broadcast %cst_54 : f32 to vector<32x128xf32>
    %110 = arith.cmpf olt, %81, %109 : vector<32x128xf32>
    %cst_55 = arith.constant 0.000000e+00 : f32
    %111 = vector.broadcast %cst_55 : f32 to vector<32x128xf32>
    %112 = arith.subf %111, %108 : vector<32x128xf32>
    %113 = arith.select %110, %112, %108 : vector<32x128xi1>, vector<32x128xf32>
    %cst_56 = arith.constant 5.000000e-01 : f32
    %114 = vector.broadcast %cst_56 : f32 to vector<32x128xf32>
    %115 = arith.mulf %114, %79 : vector<32x128xf32>
    %cst_57 = arith.constant 1.000000e+00 : f32
    %116 = vector.broadcast %cst_57 : f32 to vector<32x128xf32>
    %117 = arith.addf %116, %113 : vector<32x128xf32>
    %118 = arith.mulf %115, %117 : vector<32x128xf32>
    %119 = arith.truncf %118 : vector<32x128xf32> to vector<32x128xbf16>
    %c0_58 = arith.constant 0 : index
    %c0_59 = arith.constant 0 : index
    %120 = vector.load %arg8[%c0_58, %c0_59] : memref<128x384xbf16, #tpu.memory_space<vmem>>, vector<128x384xbf16>
    %cst_60 = arith.constant dense<0.000000e+00> : vector<32x384xf32>
    %121 = tpu.matmul %119, %120, %cst_60 {dimension_numbers = #tpu.dot_dimension_numbers<[1], [0], [0], [1], [0, 0, 1, 1], [], []>} : vector<32x128xbf16>, vector<128x384xbf16>, vector<32x384xf32> -> vector<32x384xf32>
    %cst_61 = arith.constant 0.000000e+00 : f32
    %122 = vector.broadcast %cst_61 : f32 to vector<16x128xf32>
    %123 = vector.extract_strided_slice %121 {offsets = [0, 0], sizes = [32, 128], strides = [1, 1]} : vector<32x384xf32> to vector<32x128xf32>
    %c0_62 = arith.constant 0 : index
    %c0_63 = arith.constant 0 : index
    %c0_64 = arith.constant 0 : index
    %124 = vector.load %arg7[%c0_62, %c0_63, %c0_64] : memref<3x16x32xf32, #tpu.memory_space<vmem>>, vector<1x16x32xf32>
    %125 = vector.shape_cast %124 : vector<1x16x32xf32> to vector<16x32xf32>
    %cst_65 = arith.constant dense<0.000000e+00> : vector<16x128xf32>
    %126 = tpu.matmul %125, %123, %cst_65 {dimension_numbers = #tpu.dot_dimension_numbers<[1], [0], [0], [1], [0, 0, 1, 1], [], []>} : vector<16x32xf32>, vector<32x128xf32>, vector<16x128xf32> -> vector<16x128xf32>
    %127 = arith.addf %122, %126 : vector<16x128xf32>
    %128 = vector.extract_strided_slice %121 {offsets = [0, 128], sizes = [32, 128], strides = [1, 1]} : vector<32x384xf32> to vector<32x128xf32>
    %c1_66 = arith.constant 1 : index
    %c0_67 = arith.constant 0 : index
    %c0_68 = arith.constant 0 : index
    %129 = vector.load %arg7[%c1_66, %c0_67, %c0_68] : memref<3x16x32xf32, #tpu.memory_space<vmem>>, vector<1x16x32xf32>
    %130 = vector.shape_cast %129 : vector<1x16x32xf32> to vector<16x32xf32>
    %cst_69 = arith.constant dense<0.000000e+00> : vector<16x128xf32>
    %131 = tpu.matmul %130, %128, %cst_69 {dimension_numbers = #tpu.dot_dimension_numbers<[1], [0], [0], [1], [0, 0, 1, 1], [], []>} : vector<16x32xf32>, vector<32x128xf32>, vector<16x128xf32> -> vector<16x128xf32>
    %132 = arith.addf %127, %131 : vector<16x128xf32>
    %133 = vector.extract_strided_slice %121 {offsets = [0, 256], sizes = [32, 128], strides = [1, 1]} : vector<32x384xf32> to vector<32x128xf32>
    %c2_70 = arith.constant 2 : index
    %c0_71 = arith.constant 0 : index
    %c0_72 = arith.constant 0 : index
    %134 = vector.load %arg7[%c2_70, %c0_71, %c0_72] : memref<3x16x32xf32, #tpu.memory_space<vmem>>, vector<1x16x32xf32>
    %135 = vector.shape_cast %134 : vector<1x16x32xf32> to vector<16x32xf32>
    %cst_73 = arith.constant dense<0.000000e+00> : vector<16x128xf32>
    %136 = tpu.matmul %135, %133, %cst_73 {dimension_numbers = #tpu.dot_dimension_numbers<[1], [0], [0], [1], [0, 0, 1, 1], [], []>} : vector<16x32xf32>, vector<32x128xf32>, vector<16x128xf32> -> vector<16x128xf32>
    %137 = arith.addf %132, %136 : vector<16x128xf32>
    %c0_74 = arith.constant 0 : index
    %c0_75 = arith.constant 0 : index
    %138 = vector.load %arg9[%c0_74, %c0_75] : memref<1x128xf32, #tpu.memory_space<vmem>>, vector<1x128xf32>
    %139 = vector.broadcast %138 : vector<1x128xf32> to vector<16x128xf32>
    %140 = arith.addf %137, %139 : vector<16x128xf32>
    %cst_76 = arith.constant 0.707106769 : f32
    %141 = vector.broadcast %cst_76 : f32 to vector<16x128xf32>
    %142 = arith.mulf %140, %141 : vector<16x128xf32>
    %143 = math.absf %142 : vector<16x128xf32>
    %cst_77 = arith.constant 0.327591091 : f32
    %144 = vector.broadcast %cst_77 : f32 to vector<16x128xf32>
    %145 = arith.mulf %144, %143 : vector<16x128xf32>
    %cst_78 = arith.constant 1.000000e+00 : f32
    %146 = vector.broadcast %cst_78 : f32 to vector<16x128xf32>
    %147 = arith.addf %146, %145 : vector<16x128xf32>
    %148 = tpu.reciprocal %147 {approx = true} : vector<16x128xf32> -> vector<16x128xf32>
    %cst_79 = arith.constant 1.06140542 : f32
    %149 = vector.broadcast %cst_79 : f32 to vector<16x128xf32>
    %150 = arith.mulf %148, %149 : vector<16x128xf32>
    %cst_80 = arith.constant -1.45315206 : f32
    %151 = vector.broadcast %cst_80 : f32 to vector<16x128xf32>
    %152 = arith.addf %151, %150 : vector<16x128xf32>
    %153 = arith.mulf %148, %152 : vector<16x128xf32>
    %cst_81 = arith.constant 1.42141378 : f32
    %154 = vector.broadcast %cst_81 : f32 to vector<16x128xf32>
    %155 = arith.addf %154, %153 : vector<16x128xf32>
    %156 = arith.mulf %148, %155 : vector<16x128xf32>
    %cst_82 = arith.constant -0.284496725 : f32
    %157 = vector.broadcast %cst_82 : f32 to vector<16x128xf32>
    %158 = arith.addf %157, %156 : vector<16x128xf32>
    %159 = arith.mulf %148, %158 : vector<16x128xf32>
    %cst_83 = arith.constant 0.254829586 : f32
    %160 = vector.broadcast %cst_83 : f32 to vector<16x128xf32>
    %161 = arith.addf %160, %159 : vector<16x128xf32>
    %162 = arith.mulf %148, %161 : vector<16x128xf32>
    %cst_84 = arith.constant 0.000000e+00 : f32
    %163 = vector.broadcast %cst_84 : f32 to vector<16x128xf32>
    %164 = arith.subf %163, %143 : vector<16x128xf32>
    %165 = arith.mulf %164, %143 : vector<16x128xf32>
    %166 = math.exp %165 : vector<16x128xf32>
    %167 = arith.mulf %162, %166 : vector<16x128xf32>
    %cst_85 = arith.constant 1.000000e+00 : f32
    %168 = vector.broadcast %cst_85 : f32 to vector<16x128xf32>
    %169 = arith.subf %168, %167 : vector<16x128xf32>
    %cst_86 = arith.constant 0.000000e+00 : f32
    %170 = vector.broadcast %cst_86 : f32 to vector<16x128xf32>
    %171 = arith.cmpf olt, %142, %170 : vector<16x128xf32>
    %cst_87 = arith.constant 0.000000e+00 : f32
    %172 = vector.broadcast %cst_87 : f32 to vector<16x128xf32>
    %173 = arith.subf %172, %169 : vector<16x128xf32>
    %174 = arith.select %171, %173, %169 : vector<16x128xi1>, vector<16x128xf32>
    %cst_88 = arith.constant 5.000000e-01 : f32
    %175 = vector.broadcast %cst_88 : f32 to vector<16x128xf32>
    %176 = arith.mulf %175, %140 : vector<16x128xf32>
    %cst_89 = arith.constant 1.000000e+00 : f32
    %177 = vector.broadcast %cst_89 : f32 to vector<16x128xf32>
    %178 = arith.addf %177, %174 : vector<16x128xf32>
    %179 = arith.mulf %176, %178 : vector<16x128xf32>
    %180 = arith.truncf %179 : vector<16x128xf32> to vector<16x128xbf16>
    %c0_90 = arith.constant 0 : index
    %c0_91 = arith.constant 0 : index
    %181 = vector.load %arg11[%c0_90, %c0_91] : memref<128x384xbf16, #tpu.memory_space<vmem>>, vector<128x384xbf16>
    %cst_92 = arith.constant dense<0.000000e+00> : vector<16x384xf32>
    %182 = tpu.matmul %180, %181, %cst_92 {dimension_numbers = #tpu.dot_dimension_numbers<[1], [0], [0], [1], [0, 0, 1, 1], [], []>} : vector<16x128xbf16>, vector<128x384xbf16>, vector<16x384xf32> -> vector<16x384xf32>
    %cst_93 = arith.constant 0.000000e+00 : f32
    %183 = vector.broadcast %cst_93 : f32 to vector<16x128xf32>
    %184 = vector.extract_strided_slice %182 {offsets = [0, 0], sizes = [16, 128], strides = [1, 1]} : vector<16x384xf32> to vector<16x128xf32>
    %c0_94 = arith.constant 0 : index
    %c0_95 = arith.constant 0 : index
    %c0_96 = arith.constant 0 : index
    %185 = vector.load %arg10[%c0_94, %c0_95, %c0_96] : memref<3x16x16xf32, #tpu.memory_space<vmem>>, vector<1x16x16xf32>
    %186 = vector.shape_cast %185 : vector<1x16x16xf32> to vector<16x16xf32>
    %cst_97 = arith.constant dense<0.000000e+00> : vector<16x128xf32>
    %187 = tpu.matmul %186, %184, %cst_97 {dimension_numbers = #tpu.dot_dimension_numbers<[1], [0], [0], [1], [0, 0, 1, 1], [], []>} : vector<16x16xf32>, vector<16x128xf32>, vector<16x128xf32> -> vector<16x128xf32>
    %188 = arith.addf %183, %187 : vector<16x128xf32>
    %189 = vector.extract_strided_slice %182 {offsets = [0, 128], sizes = [16, 128], strides = [1, 1]} : vector<16x384xf32> to vector<16x128xf32>
    %190 = arith.addf %188, %189 : vector<16x128xf32>
    %191 = vector.extract_strided_slice %182 {offsets = [0, 256], sizes = [16, 128], strides = [1, 1]} : vector<16x384xf32> to vector<16x128xf32>
    %c2_98 = arith.constant 2 : index
    %c0_99 = arith.constant 0 : index
    %c0_100 = arith.constant 0 : index
    %192 = vector.load %arg10[%c2_98, %c0_99, %c0_100] : memref<3x16x16xf32, #tpu.memory_space<vmem>>, vector<1x16x16xf32>
    %193 = vector.shape_cast %192 : vector<1x16x16xf32> to vector<16x16xf32>
    %cst_101 = arith.constant dense<0.000000e+00> : vector<16x128xf32>
    %194 = tpu.matmul %193, %191, %cst_101 {dimension_numbers = #tpu.dot_dimension_numbers<[1], [0], [0], [1], [0, 0, 1, 1], [], []>} : vector<16x16xf32>, vector<16x128xf32>, vector<16x128xf32> -> vector<16x128xf32>
    %195 = arith.addf %190, %194 : vector<16x128xf32>
    %c0_102 = arith.constant 0 : index
    %c0_103 = arith.constant 0 : index
    %196 = vector.load %arg12[%c0_102, %c0_103] : memref<1x128xf32, #tpu.memory_space<vmem>>, vector<1x128xf32>
    %197 = vector.broadcast %196 : vector<1x128xf32> to vector<16x128xf32>
    %198 = arith.addf %195, %197 : vector<16x128xf32>
    %cst_104 = arith.constant 0.707106769 : f32
    %199 = vector.broadcast %cst_104 : f32 to vector<16x128xf32>
    %200 = arith.mulf %198, %199 : vector<16x128xf32>
    %201 = math.absf %200 : vector<16x128xf32>
    %cst_105 = arith.constant 0.327591091 : f32
    %202 = vector.broadcast %cst_105 : f32 to vector<16x128xf32>
    %203 = arith.mulf %202, %201 : vector<16x128xf32>
    %cst_106 = arith.constant 1.000000e+00 : f32
    %204 = vector.broadcast %cst_106 : f32 to vector<16x128xf32>
    %205 = arith.addf %204, %203 : vector<16x128xf32>
    %206 = tpu.reciprocal %205 {approx = true} : vector<16x128xf32> -> vector<16x128xf32>
    %cst_107 = arith.constant 1.06140542 : f32
    %207 = vector.broadcast %cst_107 : f32 to vector<16x128xf32>
    %208 = arith.mulf %206, %207 : vector<16x128xf32>
    %cst_108 = arith.constant -1.45315206 : f32
    %209 = vector.broadcast %cst_108 : f32 to vector<16x128xf32>
    %210 = arith.addf %209, %208 : vector<16x128xf32>
    %211 = arith.mulf %206, %210 : vector<16x128xf32>
    %cst_109 = arith.constant 1.42141378 : f32
    %212 = vector.broadcast %cst_109 : f32 to vector<16x128xf32>
    %213 = arith.addf %212, %211 : vector<16x128xf32>
    %214 = arith.mulf %206, %213 : vector<16x128xf32>
    %cst_110 = arith.constant -0.284496725 : f32
    %215 = vector.broadcast %cst_110 : f32 to vector<16x128xf32>
    %216 = arith.addf %215, %214 : vector<16x128xf32>
    %217 = arith.mulf %206, %216 : vector<16x128xf32>
    %cst_111 = arith.constant 0.254829586 : f32
    %218 = vector.broadcast %cst_111 : f32 to vector<16x128xf32>
    %219 = arith.addf %218, %217 : vector<16x128xf32>
    %220 = arith.mulf %206, %219 : vector<16x128xf32>
    %cst_112 = arith.constant 0.000000e+00 : f32
    %221 = vector.broadcast %cst_112 : f32 to vector<16x128xf32>
    %222 = arith.subf %221, %201 : vector<16x128xf32>
    %223 = arith.mulf %222, %201 : vector<16x128xf32>
    %224 = math.exp %223 : vector<16x128xf32>
    %225 = arith.mulf %220, %224 : vector<16x128xf32>
    %cst_113 = arith.constant 1.000000e+00 : f32
    %226 = vector.broadcast %cst_113 : f32 to vector<16x128xf32>
    %227 = arith.subf %226, %225 : vector<16x128xf32>
    %cst_114 = arith.constant 0.000000e+00 : f32
    %228 = vector.broadcast %cst_114 : f32 to vector<16x128xf32>
    %229 = arith.cmpf olt, %200, %228 : vector<16x128xf32>
    %cst_115 = arith.constant 0.000000e+00 : f32
    %230 = vector.broadcast %cst_115 : f32 to vector<16x128xf32>
    %231 = arith.subf %230, %227 : vector<16x128xf32>
    %232 = arith.select %229, %231, %227 : vector<16x128xi1>, vector<16x128xf32>
    %cst_116 = arith.constant 5.000000e-01 : f32
    %233 = vector.broadcast %cst_116 : f32 to vector<16x128xf32>
    %234 = arith.mulf %233, %198 : vector<16x128xf32>
    %cst_117 = arith.constant 1.000000e+00 : f32
    %235 = vector.broadcast %cst_117 : f32 to vector<16x128xf32>
    %236 = arith.addf %235, %232 : vector<16x128xf32>
    %237 = arith.mulf %234, %236 : vector<16x128xf32>
    %238 = arith.truncf %237 : vector<16x128xf32> to vector<16x128xbf16>
    %c0_118 = arith.constant 0 : index
    %c0_119 = arith.constant 0 : index
    %239 = vector.load %arg14[%c0_118, %c0_119] : memref<128x192xbf16, #tpu.memory_space<vmem>>, vector<128x192xbf16>
    %cst_120 = arith.constant dense<0.000000e+00> : vector<16x192xf32>
    %240 = tpu.matmul %238, %239, %cst_120 {dimension_numbers = #tpu.dot_dimension_numbers<[1], [0], [0], [1], [0, 0, 1, 1], [], []>} : vector<16x128xbf16>, vector<128x192xbf16>, vector<16x192xf32> -> vector<16x192xf32>
    %cst_121 = arith.constant 0.000000e+00 : f32
    %241 = vector.broadcast %cst_121 : f32 to vector<8x64xf32>
    %242 = vector.extract_strided_slice %240 {offsets = [0, 0], sizes = [16, 64], strides = [1, 1]} : vector<16x192xf32> to vector<16x64xf32>
    %c0_122 = arith.constant 0 : index
    %c0_123 = arith.constant 0 : index
    %c0_124 = arith.constant 0 : index
    %243 = vector.load %arg13[%c0_122, %c0_123, %c0_124] : memref<3x8x16xf32, #tpu.memory_space<vmem>>, vector<1x8x16xf32>
    %244 = vector.shape_cast %243 : vector<1x8x16xf32> to vector<8x16xf32>
    %cst_125 = arith.constant dense<0.000000e+00> : vector<8x64xf32>
    %245 = tpu.matmul %244, %242, %cst_125 {dimension_numbers = #tpu.dot_dimension_numbers<[1], [0], [0], [1], [0, 0, 1, 1], [], []>} : vector<8x16xf32>, vector<16x64xf32>, vector<8x64xf32> -> vector<8x64xf32>
    %246 = arith.addf %241, %245 : vector<8x64xf32>
    %247 = vector.extract_strided_slice %240 {offsets = [0, 64], sizes = [16, 64], strides = [1, 1]} : vector<16x192xf32> to vector<16x64xf32>
    %c1_126 = arith.constant 1 : index
    %c0_127 = arith.constant 0 : index
    %c0_128 = arith.constant 0 : index
    %248 = vector.load %arg13[%c1_126, %c0_127, %c0_128] : memref<3x8x16xf32, #tpu.memory_space<vmem>>, vector<1x8x16xf32>
    %249 = vector.shape_cast %248 : vector<1x8x16xf32> to vector<8x16xf32>
    %cst_129 = arith.constant dense<0.000000e+00> : vector<8x64xf32>
    %250 = tpu.matmul %249, %247, %cst_129 {dimension_numbers = #tpu.dot_dimension_numbers<[1], [0], [0], [1], [0, 0, 1, 1], [], []>} : vector<8x16xf32>, vector<16x64xf32>, vector<8x64xf32> -> vector<8x64xf32>
    %251 = arith.addf %246, %250 : vector<8x64xf32>
    %252 = vector.extract_strided_slice %240 {offsets = [0, 128], sizes = [16, 64], strides = [1, 1]} : vector<16x192xf32> to vector<16x64xf32>
    %c2_130 = arith.constant 2 : index
    %c0_131 = arith.constant 0 : index
    %c0_132 = arith.constant 0 : index
    %253 = vector.load %arg13[%c2_130, %c0_131, %c0_132] : memref<3x8x16xf32, #tpu.memory_space<vmem>>, vector<1x8x16xf32>
    %254 = vector.shape_cast %253 : vector<1x8x16xf32> to vector<8x16xf32>
    %cst_133 = arith.constant dense<0.000000e+00> : vector<8x64xf32>
    %255 = tpu.matmul %254, %252, %cst_133 {dimension_numbers = #tpu.dot_dimension_numbers<[1], [0], [0], [1], [0, 0, 1, 1], [], []>} : vector<8x16xf32>, vector<16x64xf32>, vector<8x64xf32> -> vector<8x64xf32>
    %256 = arith.addf %251, %255 : vector<8x64xf32>
    %c0_134 = arith.constant 0 : index
    %c0_135 = arith.constant 0 : index
    %257 = vector.load %arg15[%c0_134, %c0_135] : memref<1x64xf32, #tpu.memory_space<vmem>>, vector<1x64xf32>
    %258 = vector.broadcast %257 : vector<1x64xf32> to vector<8x64xf32>
    %259 = arith.addf %256, %258 : vector<8x64xf32>
    %cst_136 = arith.constant 0.707106769 : f32
    %260 = vector.broadcast %cst_136 : f32 to vector<8x64xf32>
    %261 = arith.mulf %259, %260 : vector<8x64xf32>
    %262 = math.absf %261 : vector<8x64xf32>
    %cst_137 = arith.constant 0.327591091 : f32
    %263 = vector.broadcast %cst_137 : f32 to vector<8x64xf32>
    %264 = arith.mulf %263, %262 : vector<8x64xf32>
    %cst_138 = arith.constant 1.000000e+00 : f32
    %265 = vector.broadcast %cst_138 : f32 to vector<8x64xf32>
    %266 = arith.addf %265, %264 : vector<8x64xf32>
    %267 = tpu.reciprocal %266 {approx = true} : vector<8x64xf32> -> vector<8x64xf32>
    %cst_139 = arith.constant 1.06140542 : f32
    %268 = vector.broadcast %cst_139 : f32 to vector<8x64xf32>
    %269 = arith.mulf %267, %268 : vector<8x64xf32>
    %cst_140 = arith.constant -1.45315206 : f32
    %270 = vector.broadcast %cst_140 : f32 to vector<8x64xf32>
    %271 = arith.addf %270, %269 : vector<8x64xf32>
    %272 = arith.mulf %267, %271 : vector<8x64xf32>
    %cst_141 = arith.constant 1.42141378 : f32
    %273 = vector.broadcast %cst_141 : f32 to vector<8x64xf32>
    %274 = arith.addf %273, %272 : vector<8x64xf32>
    %275 = arith.mulf %267, %274 : vector<8x64xf32>
    %cst_142 = arith.constant -0.284496725 : f32
    %276 = vector.broadcast %cst_142 : f32 to vector<8x64xf32>
    %277 = arith.addf %276, %275 : vector<8x64xf32>
    %278 = arith.mulf %267, %277 : vector<8x64xf32>
    %cst_143 = arith.constant 0.254829586 : f32
    %279 = vector.broadcast %cst_143 : f32 to vector<8x64xf32>
    %280 = arith.addf %279, %278 : vector<8x64xf32>
    %281 = arith.mulf %267, %280 : vector<8x64xf32>
    %cst_144 = arith.constant 0.000000e+00 : f32
    %282 = vector.broadcast %cst_144 : f32 to vector<8x64xf32>
    %283 = arith.subf %282, %262 : vector<8x64xf32>
    %284 = arith.mulf %283, %262 : vector<8x64xf32>
    %285 = math.exp %284 : vector<8x64xf32>
    %286 = arith.mulf %281, %285 : vector<8x64xf32>
    %cst_145 = arith.constant 1.000000e+00 : f32
    %287 = vector.broadcast %cst_145 : f32 to vector<8x64xf32>
    %288 = arith.subf %287, %286 : vector<8x64xf32>
    %cst_146 = arith.constant 0.000000e+00 : f32
    %289 = vector.broadcast %cst_146 : f32 to vector<8x64xf32>
    %290 = arith.cmpf olt, %261, %289 : vector<8x64xf32>
    %cst_147 = arith.constant 0.000000e+00 : f32
    %291 = vector.broadcast %cst_147 : f32 to vector<8x64xf32>
    %292 = arith.subf %291, %288 : vector<8x64xf32>
    %293 = arith.select %290, %292, %288 : vector<8x64xi1>, vector<8x64xf32>
    %cst_148 = arith.constant 5.000000e-01 : f32
    %294 = vector.broadcast %cst_148 : f32 to vector<8x64xf32>
    %295 = arith.mulf %294, %259 : vector<8x64xf32>
    %cst_149 = arith.constant 1.000000e+00 : f32
    %296 = vector.broadcast %cst_149 : f32 to vector<8x64xf32>
    %297 = arith.addf %296, %293 : vector<8x64xf32>
    %298 = arith.mulf %295, %297 : vector<8x64xf32>
    %299 = arith.truncf %298 : vector<8x64xf32> to vector<8x64xbf16>
    %300 = vector.extract_strided_slice %299 {offsets = [0, 0], sizes = [1, 64], strides = [1, 1]} : vector<8x64xbf16> to vector<1x64xbf16>
    %c0_150 = arith.constant 0 : index
    %c0_151 = arith.constant 0 : index
    %301 = vector.load %arg19[%c0_150, %c0_151] : memref<2x256xbf16, #tpu.memory_space<vmem>>, vector<1x64xbf16>
    tpu.vector_store %arg19[%c0_150, %c0_151], %300 {strides = array<i32>} : memref<2x256xbf16, #tpu.memory_space<vmem>>, vector<1x64xbf16>,
    %302 = vector.extract_strided_slice %299 {offsets = [1, 0], sizes = [1, 64], strides = [1, 1]} : vector<8x64xbf16> to vector<1x64xbf16>
    %c0_152 = arith.constant 0 : index
    %c64 = arith.constant 64 : index
    %303 = vector.load %arg19[%c0_152, %c64] : memref<2x256xbf16, #tpu.memory_space<vmem>>, vector<1x64xbf16>
    tpu.vector_store %arg19[%c0_152, %c64], %302 {strides = array<i32>} : memref<2x256xbf16, #tpu.memory_space<vmem>>, vector<1x64xbf16>,
    %304 = vector.extract_strided_slice %299 {offsets = [2, 0], sizes = [1, 64], strides = [1, 1]} : vector<8x64xbf16> to vector<1x64xbf16>
    %c0_153 = arith.constant 0 : index
    %c128 = arith.constant 128 : index
    %305 = vector.load %arg19[%c0_153, %c128] : memref<2x256xbf16, #tpu.memory_space<vmem>>, vector<1x64xbf16>
    tpu.vector_store %arg19[%c0_153, %c128], %304 {strides = array<i32>} : memref<2x256xbf16, #tpu.memory_space<vmem>>, vector<1x64xbf16>,
    %306 = vector.extract_strided_slice %299 {offsets = [3, 0], sizes = [1, 64], strides = [1, 1]} : vector<8x64xbf16> to vector<1x64xbf16>
    %c0_154 = arith.constant 0 : index
    %c192 = arith.constant 192 : index
    %307 = vector.load %arg19[%c0_154, %c192] : memref<2x256xbf16, #tpu.memory_space<vmem>>, vector<1x64xbf16>
    tpu.vector_store %arg19[%c0_154, %c192], %306 {strides = array<i32>} : memref<2x256xbf16, #tpu.memory_space<vmem>>, vector<1x64xbf16>,
    %308 = vector.extract_strided_slice %299 {offsets = [4, 0], sizes = [1, 64], strides = [1, 1]} : vector<8x64xbf16> to vector<1x64xbf16>
    %c1_155 = arith.constant 1 : index
    %c0_156 = arith.constant 0 : index
    %309 = vector.load %arg19[%c1_155, %c0_156] : memref<2x256xbf16, #tpu.memory_space<vmem>>, vector<1x64xbf16>
    tpu.vector_store %arg19[%c1_155, %c0_156], %308 {strides = array<i32>} : memref<2x256xbf16, #tpu.memory_space<vmem>>, vector<1x64xbf16>,
    %310 = vector.extract_strided_slice %299 {offsets = [5, 0], sizes = [1, 64], strides = [1, 1]} : vector<8x64xbf16> to vector<1x64xbf16>
    %c1_157 = arith.constant 1 : index
    %c64_158 = arith.constant 64 : index
    %311 = vector.load %arg19[%c1_157, %c64_158] : memref<2x256xbf16, #tpu.memory_space<vmem>>, vector<1x64xbf16>
    tpu.vector_store %arg19[%c1_157, %c64_158], %310 {strides = array<i32>} : memref<2x256xbf16, #tpu.memory_space<vmem>>, vector<1x64xbf16>,
    %312 = vector.extract_strided_slice %299 {offsets = [6, 0], sizes = [1, 64], strides = [1, 1]} : vector<8x64xbf16> to vector<1x64xbf16>
    %c1_159 = arith.constant 1 : index
    %c128_160 = arith.constant 128 : index
    %313 = vector.load %arg19[%c1_159, %c128_160] : memref<2x256xbf16, #tpu.memory_space<vmem>>, vector<1x64xbf16>
    tpu.vector_store %arg19[%c1_159, %c128_160], %312 {strides = array<i32>} : memref<2x256xbf16, #tpu.memory_space<vmem>>, vector<1x64xbf16>,
    %314 = vector.extract_strided_slice %299 {offsets = [7, 0], sizes = [1, 64], strides = [1, 1]} : vector<8x64xbf16> to vector<1x64xbf16>
    %c1_161 = arith.constant 1 : index
    %c192_162 = arith.constant 192 : index
    %315 = vector.load %arg19[%c1_161, %c192_162] : memref<2x256xbf16, #tpu.memory_space<vmem>>, vector<1x64xbf16>
    tpu.vector_store %arg19[%c1_161, %c192_162], %314 {strides = array<i32>} : memref<2x256xbf16, #tpu.memory_space<vmem>>, vector<1x64xbf16>,
    %c0_163 = arith.constant 0 : index
    %c0_164 = arith.constant 0 : index
    %316 = vector.load %arg19[%c0_163, %c0_164] : memref<2x256xbf16, #tpu.memory_space<vmem>>, vector<2x256xbf16>
    %c0_165 = arith.constant 0 : index
    %c0_166 = arith.constant 0 : index
    %317 = vector.load %arg16[%c0_165, %c0_166] : memref<256x16xbf16, #tpu.memory_space<vmem>>, vector<256x16xbf16>
    %cst_167 = arith.constant dense<0.000000e+00> : vector<2x16xf32>
    %318 = tpu.matmul %316, %317, %cst_167 {dimension_numbers = #tpu.dot_dimension_numbers<[1], [0], [0], [1], [0, 0, 1, 1], [], []>} : vector<2x256xbf16>, vector<256x16xbf16>, vector<2x16xf32> -> vector<2x16xf32>
    %c0_168 = arith.constant 0 : index
    %c0_169 = arith.constant 0 : index
    %319 = vector.load %arg17[%c0_168, %c0_169] : memref<1x16xf32, #tpu.memory_space<vmem>>, vector<1x16xf32>
    %320 = vector.broadcast %319 : vector<1x16xf32> to vector<2x16xf32>
    %321 = arith.addf %318, %320 : vector<2x16xf32>
    %c0_170 = arith.constant 0 : index
    %c0_171 = arith.constant 0 : index
    %322 = vector.load %arg18[%c0_170, %c0_171] : memref<2x16xf32, #tpu.memory_space<vmem>>, vector<2x16xf32>
    tpu.vector_store %arg18[%c0_170, %c0_171], %321 {strides = array<i32>} : memref<2x16xf32, #tpu.memory_space<vmem>>, vector<2x16xf32>,
    return
  }
}

</mosaic_0001>

<llo_original>
// kernel: encoder_forward.1
$region0: #{encoder_forward.1}
  #allocation0 [shape = 'u32[]', space=smem, size = 0x4, offset = 0x4, fixed_abs, tag = 'smem constant byte address 0x4 - core index']
  #allocation1 [shape = 'u32[144,128]{1,0:T(1,128)}', space=vmem, size = 0x12000, scoped, tag = 'internal scratch']
  #allocation2 [shape = 'bf16[2,256]{1,0:T(2,128)(2,1)}', space=vmem, size = 0x400, scoped, tag = 'scratch operand']
  %s0 = inlined_call_operand.vmem [shape: bf16[64,96], index: 0, kind: input, shape index: {}]
  %s1 = inlined_call_operand.vmem [shape: f32[3,32,64], index: 1, kind: input, shape index: {}]
  %s2 = inlined_call_operand.vmem [shape: bf16[96,384], index: 2, kind: input, shape index: {}]
  %s3 = inlined_call_operand.vmem [shape: f32[1,128], index: 3, kind: input, shape index: {}]
  %s4 = inlined_call_operand.vmem [shape: f32[3,32,32], index: 4, kind: input, shape index: {}]
  %s5 = inlined_call_operand.vmem [shape: bf16[128,384], index: 5, kind: input, shape index: {}]
  %s6 = inlined_call_operand.vmem [shape: f32[1,128], index: 6, kind: input, shape index: {}]
  %s7 = inlined_call_operand.vmem [shape: f32[3,16,32], index: 7, kind: input, shape index: {}]
  %s8 = inlined_call_operand.vmem [shape: bf16[128,384], index: 8, kind: input, shape index: {}]
  %s9 = inlined_call_operand.hbm [shape: f32[1,128], index: 9, kind: input, shape index: {}]
  %s10 = inlined_call_operand.vmem [shape: f32[3,16,16], index: 10, kind: input, shape index: {}]
  %s11 = inlined_call_operand.vmem [shape: bf16[128,384], index: 11, kind: input, shape index: {}]
  %s12 = inlined_call_operand.vmem [shape: f32[1,128], index: 12, kind: input, shape index: {}]
  %s13 = inlined_call_operand.hbm [shape: f32[3,8,16], index: 13, kind: input, shape index: {}]
  %s14 = inlined_call_operand.vmem [shape: bf16[128,192], index: 14, kind: input, shape index: {}]
  %s15 = inlined_call_operand.vmem [shape: f32[1,64], index: 15, kind: input, shape index: {}]
  %s16 = inlined_call_operand.vmem [shape: bf16[256,16], index: 16, kind: input, shape index: {}]
  %s17 = inlined_call_operand.vmem [shape: f32[1,16], index: 17, kind: input, shape index: {}]
  %s18 = inlined_call_operand.hbm [shape: f32[2,16], index: 18, kind: output, shape index: {}]
  %s19 = sld [smem:[#allocation0]]
  $region90: #{encoder_forward.1} parent=0
    _
  %s21 = ssub.s32 1, %s19
  %s22 = scalar_select 0, %s21, %s19
  $region1: #{encoder_forward.1} parent=0
    #allocation3 [shape = 'u8[512]{0}', space=vmem, size = 0x400, scoped, tag = 'input window, operand 9, single buffered']
    #allocation4 [shape = 's32[1]{0}', space=sflag, size = 0x4, scoped, tag = 'scoped memory for encoder_forward.1']
    #allocation5 [shape = 's32[1]{0}', space=sflag, size = 0x4, scoped, tag = 'scoped memory for encoder_forward.1']
    #allocation6 [shape = 'u8[12288]{0}', space=vmem, size = 0x3000, scoped, tag = 'input window, operand 13, single buffered']
    #allocation7 [shape = 's32[1]{0}', space=sflag, size = 0x4, scoped, tag = 'scoped memory for encoder_forward.1']
    #allocation8 [shape = 'u8[1024]{0}', space=vmem, size = 0x400, scoped, tag = 'output window, operand 0, single buffered']
    %23 = vsyncpa [#allocation4], 0
    %24 = vsyncpa [#allocation7], 0
    %25 = vsyncpa [#allocation5], 0
    // Predicated region
    $region2: #{encoder_forward.1} parent=1 // pred_check
      _
    $region3: #{encoder_forward.1} parent=1 // pred_check_branch
      %27 = sbr.rel (0) target = $region5
    $region4: #{encoder_forward.1} parent=1 // pred_region
      _
    $region5: #{encoder_forward.1} parent=1 // pred_fallthru
      _
    // Predicated region
    $region6: #{encoder_forward.1} parent=1 // pred_check
      _
    $region7: #{encoder_forward.1} parent=1 // pred_check_branch
      %29 = sbr.rel (0) target = $region9
    $region8: #{encoder_forward.1} parent=1 // pred_region
      _
    $region9: #{encoder_forward.1} parent=1 // pred_fallthru
      _
    // Predicated region
    $region10: #{encoder_forward.1} parent=1 // pred_check
      _
    $region11: #{encoder_forward.1} parent=1 // pred_check_branch
      %31 = sbr.rel (0) target = $region13
    $region12: #{encoder_forward.1} parent=1 // pred_region
      _
    $region13: #{encoder_forward.1} parent=1 // pred_fallthru
      _
    // Predicated region
    $region14: #{encoder_forward.1} parent=1 // pred_check
      _
    $region15: #{encoder_forward.1} parent=1 // pred_check_branch
      %33 = sbr.rel (0) target = $region17
    $region16: #{encoder_forward.1} parent=1 // pred_region
      _
    $region17: #{encoder_forward.1} parent=1 // pred_fallthru
      _
    // Predicated region
    $region18: #{encoder_forward.1} parent=1 // pred_check
      _
    $region19: #{encoder_forward.1} parent=1 // pred_check_branch
      %35 = sbr.rel (0) target = $region21
    $region20: #{encoder_forward.1} parent=1 // pred_region
      _
    $region21: #{encoder_forward.1} parent=1 // pred_fallthru
      _
    // Predicated region
    $region22: #{encoder_forward.1} parent=1 // pred_check
      _
    $region23: #{encoder_forward.1} parent=1 // pred_check_branch
      %37 = sbr.rel (0) target = $region25
    $region24: #{encoder_forward.1} parent=1 // pred_region
      _
    $region25: #{encoder_forward.1} parent=1 // pred_fallthru
      _
    // Predicated region
    $region26: #{encoder_forward.1} parent=1 // pred_check
      _
    $region27: #{encoder_forward.1} parent=1 // pred_check_branch
      %39 = sbr.rel (0) target = $region29
    $region28: #{encoder_forward.1} parent=1 // pred_region
      _
    $region29: #{encoder_forward.1} parent=1 // pred_fallthru
      _
    // Predicated region
    $region30: #{encoder_forward.1} parent=1 // pred_check
      _
    $region31: #{encoder_forward.1} parent=1 // pred_check_branch
      %41 = sbr.rel (0) target = $region33
    $region32: #{encoder_forward.1} parent=1 // pred_region
      _
    $region33: #{encoder_forward.1} parent=1 // pred_fallthru
      _
    // Predicated region
    $region34: #{encoder_forward.1} parent=1 // pred_check
      _
    $region35: #{encoder_forward.1} parent=1 // pred_check_branch
      %43 = sbr.rel (0) target = $region37
    $region36: #{encoder_forward.1} parent=1 // pred_region
      _
    $region37: #{encoder_forward.1} parent=1 // pred_fallthru
      _
    // Predicated region
    $region38: #{encoder_forward.1} parent=1 // pred_check
      _
    $region39: #{encoder_forward.1} parent=1 // pred_check_branch
      %45 = sbr.rel (0) target = $region41
    $region40: #{encoder_forward.1} parent=1 // pred_region
      %s47 = ssub.s32 16, 16
      %48 = vsyncadd [#allocation4], %s47
      %s50 = sshll.u32 [#allocation3], 4
      %s51 = int_to_ptr.vmem [resolvable:$true] %s50
      %53 = dma.hbm_to_vmem [thread:$0]  %s9, 16, %s51, [#allocation4]
    $region41: #{encoder_forward.1} parent=1 // pred_fallthru
      _
    // Predicated region
    $region42: #{encoder_forward.1} parent=1 // pred_check
      _
    $region43: #{encoder_forward.1} parent=1 // pred_check_branch
      %55 = sbr.rel (0) target = $region45
    $region44: #{encoder_forward.1} parent=1 // pred_region
      _
    $region45: #{encoder_forward.1} parent=1 // pred_fallthru
      _
    // Predicated region
    $region46: #{encoder_forward.1} parent=1 // pred_check
      _
    $region47: #{encoder_forward.1} parent=1 // pred_check_branch
      %57 = sbr.rel (0) target = $region49
    $region48: #{encoder_forward.1} parent=1 // pred_region
      _
    $region49: #{encoder_forward.1} parent=1 // pred_fallthru
      _
    // Predicated region
    $region50: #{encoder_forward.1} parent=1 // pred_check
      _
    $region51: #{encoder_forward.1} parent=1 // pred_check_branch
      %59 = sbr.rel (0) target = $region53
    $region52: #{encoder_forward.1} parent=1 // pred_region
      _
    $region53: #{encoder_forward.1} parent=1 // pred_fallthru
      _
    // Predicated region
    $region54: #{encoder_forward.1} parent=1 // pred_check
      _
    $region55: #{encoder_forward.1} parent=1 // pred_check_branch
      %61 = sbr.rel (0) target = $region57
    $region56: #{encoder_forward.1} parent=1 // pred_region
      %s63 = ssub.s32 384, 384
      %64 = vsyncadd [#allocation7], %s63
      %s65 = sshll.u32 [#allocation6], 4
      %s66 = int_to_ptr.vmem [resolvable:$true] %s65
      %71 = dma.hbm_to_vmem [thread:$0]  %s13, 384, %s66, [#allocation7], 128, 128, 8
    $region57: #{encoder_forward.1} parent=1 // pred_fallthru
      _
    // Predicated region
    $region58: #{encoder_forward.1} parent=1 // pred_check
      _
    $region59: #{encoder_forward.1} parent=1 // pred_check_branch
      %73 = sbr.rel (0) target = $region61
    $region60: #{encoder_forward.1} parent=1 // pred_region
      _
    $region61: #{encoder_forward.1} parent=1 // pred_fallthru
      _
    // Predicated region
    $region62: #{encoder_forward.1} parent=1 // pred_check
      _
    $region63: #{encoder_forward.1} parent=1 // pred_check_branch
      %75 = sbr.rel (0) target = $region65
    $region64: #{encoder_forward.1} parent=1 // pred_region
      _
    $region65: #{encoder_forward.1} parent=1 // pred_fallthru
      _
    // Predicated region
    $region66: #{encoder_forward.1} parent=1 // pred_check
      _
    $region67: #{encoder_forward.1} parent=1 // pred_check_branch
      %77 = sbr.rel (0) target = $region69
    $region68: #{encoder_forward.1} parent=1 // pred_region
      _
    $region69: #{encoder_forward.1} parent=1 // pred_fallthru
      _
    // Predicated region
    $region70: #{encoder_forward.1} parent=1 // pred_check
      _
    $region71: #{encoder_forward.1} parent=1 // pred_check_branch
      %79 = sbr.rel (0) target = $region73
    $region72: #{encoder_forward.1} parent=1 // pred_region
      _
    $region73: #{encoder_forward.1} parent=1 // pred_fallthru
      _
    // Predicated region
    $region74: #{encoder_forward.1} parent=1 // pred_check
      _
    $region75: #{encoder_forward.1} parent=1 // pred_check_branch
      %81 = sbr.rel (0) target = $region77
    $region76: #{encoder_forward.1} parent=1 // pred_region
      %82 = dma.done [#allocation4], 16
    $region77: #{encoder_forward.1} parent=1 // pred_fallthru
      _
    // Predicated region
    $region78: #{encoder_forward.1} parent=1 // pred_check
      _
    $region79: #{encoder_forward.1} parent=1 // pred_check_branch
      %84 = sbr.rel (0) target = $region81
    $region80: #{encoder_forward.1} parent=1 // pred_region
      %85 = dma.done [#allocation7], 384
    $region81: #{encoder_forward.1} parent=1 // pred_fallthru
      _
    %v87 = vld [vmem:[%s0] sm:$0xf]
    %v88 = vld [vmem:[%s0 + $0x4] sm:$0xf]
    %v89 = vld [vmem:[%s0 + $0x8] sm:$0xf]
    %v90 = vld [vmem:[%s0 + $0xc] sm:$0xf]
    %v91 = vld [vmem:[%s0 + $0x10] sm:$0xf]
    %v92 = vld [vmem:[%s0 + $0x14] sm:$0xf]
    %v93 = vld [vmem:[%s0 + $0x18] sm:$0xf]
    %v94 = vld [vmem:[%s0 + $0x1c] sm:$0xf]
    %v95 = vld [vmem:[%s2] sm:$0xff]
    %v96 = vld [vmem:[%s2 + $0x8] sm:$0xf]
    %v97 = vld [vmem:[%s2 + $0xc] sm:$0xff]
    %v98 = vld [vmem:[%s2 + $0x14] sm:$0xf]
    %v99 = vld [vmem:[%s2 + $0x18] sm:$0xff]
    %v100 = vld [vmem:[%s2 + $0x20] sm:$0xf]
    %v101 = vld [vmem:[%s2 + $0x24] sm:$0xff]
    %v102 = vld [vmem:[%s2 + $0x2c] sm:$0xf]
    %v103 = vld [vmem:[%s2 + $0x30] sm:$0xff]
    %v104 = vld [vmem:[%s2 + $0x38] sm:$0xf]
    %v105 = vld [vmem:[%s2 + $0x3c] sm:$0xff]
    %v106 = vld [vmem:[%s2 + $0x44] sm:$0xf]
    %v107 = vld [vmem:[%s2 + $0x48] sm:$0xff]
    %v108 = vld [vmem:[%s2 + $0x50] sm:$0xf]
    %v109 = vld [vmem:[%s2 + $0x54] sm:$0xff]
    %v110 = vld [vmem:[%s2 + $0x5c] sm:$0xf]
    %v111 = vld [vmem:[%s2 + $0x60] sm:$0xff]
    %v112 = vld [vmem:[%s2 + $0x68] sm:$0xf]
    %v113 = vld [vmem:[%s2 + $0x6c] sm:$0xff]
    %v114 = vld [vmem:[%s2 + $0x74] sm:$0xf]
    %v115 = vld [vmem:[%s2 + $0x78] sm:$0xff]
    %v116 = vld [vmem:[%s2 + $0x80] sm:$0xf]
    %v117 = vld [vmem:[%s2 + $0x84] sm:$0xff]
    %v118 = vld [vmem:[%s2 + $0x8c] sm:$0xf]
    %v127 = vunpack.c.l.b16 %v87
    %v128 = vunpack.c.l.b16 %v88
    %v129 = vunpack.c.l.b16 %v89
    %v130 = vunpack.c.l.b16 %v90
    %v131 = vunpack.c.l.b16 %v91
    %v132 = vunpack.c.l.b16 %v92
    %v133 = vunpack.c.l.b16 %v93
    %v134 = vunpack.c.l.b16 %v94
    %v135 = vpack.c.b16 %v128, %v127
    %v136 = vpack.c.b16 %v130, %v129
    %v137 = vpack.c.b16 %v132, %v131
    %v138 = vpack.c.b16 %v134, %v133
    %v163 = vunpack.c.l.b16 %v95
    %v164 = vunpack.c.h.b16 %v95
    %v165 = vunpack.c.l.b16 %v96
    %v166 = vunpack.c.l.b16 %v97
    %v167 = vunpack.c.h.b16 %v97
    %v168 = vunpack.c.l.b16 %v98
    %v169 = vunpack.c.l.b16 %v99
    %v170 = vunpack.c.h.b16 %v99
    %v171 = vunpack.c.l.b16 %v100
    %v172 = vunpack.c.l.b16 %v101
    %v173 = vunpack.c.h.b16 %v101
    %v174 = vunpack.c.l.b16 %v102
    %v175 = vunpack.c.l.b16 %v103
    %v176 = vunpack.c.h.b16 %v103
    %v177 = vunpack.c.l.b16 %v104
    %v178 = vunpack.c.l.b16 %v105
    %v179 = vunpack.c.h.b16 %v105
    %v180 = vunpack.c.l.b16 %v106
    %v181 = vunpack.c.l.b16 %v107
    %v182 = vunpack.c.h.b16 %v107
    %v183 = vunpack.c.l.b16 %v108
    %v184 = vunpack.c.l.b16 %v109
    %v185 = vunpack.c.h.b16 %v109
    %v186 = vunpack.c.l.b16 %v110
    %v187 = vunpack.c.l.b16 %v111
    %v188 = vunpack.c.h.b16 %v111
    %v189 = vunpack.c.l.b16 %v112
    %v190 = vunpack.c.l.b16 %v113
    %v191 = vunpack.c.h.b16 %v113
    %v192 = vunpack.c.l.b16 %v114
    %v193 = vunpack.c.l.b16 %v115
    %v194 = vunpack.c.h.b16 %v115
    %v195 = vunpack.c.l.b16 %v116
    %v196 = vunpack.c.l.b16 %v117
    %v197 = vunpack.c.h.b16 %v117
    %v198 = vunpack.c.l.b16 %v118
    %v199 = vpack.c.b16 %v166, %v163
    %v200 = vpack.c.b16 %v167, %v164
    %v201 = vpack.c.b16 %v168, %v165
    %v202 = vpack.c.b16 %v172, %v169
    %v203 = vpack.c.b16 %v173, %v170
    %v204 = vpack.c.b16 %v174, %v171
    %v205 = vpack.c.b16 %v178, %v175
    %v206 = vpack.c.b16 %v179, %v176
    %v207 = vpack.c.b16 %v180, %v177
    %v208 = vpack.c.b16 %v184, %v181
    %v209 = vpack.c.b16 %v185, %v182
    %v210 = vpack.c.b16 %v186, %v183
    %v211 = vpack.c.b16 %v190, %v187
    %v212 = vpack.c.b16 %v191, %v188
    %v213 = vpack.c.b16 %v192, %v189
    %v214 = vpack.c.b16 %v196, %v193
    %v215 = vpack.c.b16 %v197, %v194
    %v216 = vpack.c.b16 %v198, %v195
    %vm235 = vcmask 785408
    %v237 = vsel %vm235, %v135, 0
    %v240 = vsel %vm235, %v136, 0
    %v243 = vsel %vm235, %v137, 0
    %v246 = vsel %vm235, %v138, 0
    %248 = vmatprep.subr.bf16.mxu0 %v200
    %249 = vmatpush1.bf16.msra.mxu0 %v199
    %250 = vmatprep.subr.bf16.mxu0 %v203
    %251 = vmatpush1.bf16.msra.mxu0 %v202
    %252 = vmatprep.subr.bf16.mxu0 %v206
    %253 = vmatpush1.bf16.msra.mxu0 %v205
    %254 = vmatprep.subr.bf16.mxu0 %v209
    %255 = vmatpush1.bf16.msra.mxu0 %v208
    %256 = vmatprep.subr.bf16.mxu0 %v212
    %257 = vmatpush1.bf16.msra.mxu0 %v211
    %258 = vmatprep.subr.bf16.mxu0 %v215
    %259 = vmatpush1.bf16.msra.mxu0 %v214
    %260 = vmatprep.subr.bf16.mxu0 0
    %261 = vmatpush1.bf16.msra.mxu0 0
    %262 = vmatprep.subr.bf16.mxu0 0
    %263 = vmatpush1.bf16.msra.mxu0 0
    %264 = vmatprep.subr.bf16.mxu0 0
    %265 = vmatpush1.bf16.msra.mxu0 0
    %266 = vmatprep.subr.bf16.mxu0 0
    %267 = vmatpush1.bf16.msra.mxu0 0
    %268 = vmatprep.subr.bf16.mxu0 0
    %269 = vmatpush1.bf16.msra.mxu0 0
    %270 = vmatprep.subr.bf16.mxu0 0
    %271 = vmatpush1.bf16.msra.mxu0 0
    %272 = vmatprep.subr.bf16.mxu0 0
    %273 = vmatpush1.bf16.msra.mxu0 0
    %274 = vmatprep.subr.bf16.mxu0 0
    %275 = vmatpush1.bf16.msra.mxu0 0
    %276 = vmatprep.subr.bf16.mxu0 0
    %277 = vmatpush1.bf16.msra.mxu0 0
    %278 = vmatprep.subr.bf16.mxu0 0
    %279 = vmatpush1.bf16.msra.mxu0 0
    %280 = vmatprep.mubr.bf16.mxu0 0
    %281 = vmatmul.mubr.bf16.gmra.mrb[0].mxu0 %v237
    %v282 = vpop.f32.mrb[0].mxu0
    %v283 = vadd.f32 0.0, %v282
    %v284 = vpop.f32.mrb[0].mxu0
    %v285 = vadd.f32 0.0, %v284
    %v286 = vpop.f32.mrb[0].mxu0
    %v287 = vadd.f32 0.0, %v286
    %v288 = vpop.f32.mrb[0].mxu0
    %v289 = vadd.f32 0.0, %v288
    %290 = vmatprep.mubr.bf16.mxu0 0
    %291 = vmatmul.mubr.bf16.gmra.mrb[0].mxu0 %v240
    %v292 = vpop.f32.mrb[0].mxu0
    %v293 = vadd.f32 0.0, %v292
    %v294 = vpop.f32.mrb[0].mxu0
    %v295 = vadd.f32 0.0, %v294
    %v296 = vpop.f32.mrb[0].mxu0
    %v297 = vadd.f32 0.0, %v296
    %v298 = vpop.f32.mrb[0].mxu0
    %v299 = vadd.f32 0.0, %v298
    %300 = vmatprep.mubr.bf16.mxu0 0
    %301 = vmatmul.mubr.bf16.gmra.mrb[0].mxu0 %v243
    %v302 = vpop.f32.mrb[0].mxu0
    %v303 = vadd.f32 0.0, %v302
    %v304 = vpop.f32.mrb[0].mxu0
    %v305 = vadd.f32 0.0, %v304
    %v306 = vpop.f32.mrb[0].mxu0
    %v307 = vadd.f32 0.0, %v306
    %v308 = vpop.f32.mrb[0].mxu0
    %v309 = vadd.f32 0.0, %v308
    %310 = vmatprep.mubr.bf16.mxu0 0
    %311 = vmatmul.mubr.bf16.gmra.mrb[0].mxu0 %v246
    %v312 = vpop.f32.mrb[0].mxu0
    %v313 = vadd.f32 0.0, %v312
    %v314 = vpop.f32.mrb[0].mxu0
    %v315 = vadd.f32 0.0, %v314
    %v316 = vpop.f32.mrb[0].mxu0
    %v317 = vadd.f32 0.0, %v316
    %v318 = vpop.f32.mrb[0].mxu0
    %v319 = vadd.f32 0.0, %v318
    %320 = vdwg.mxu0
    %321 = vmatprep.subr.bf16.mxu0 0
    %322 = vmatpush1.bf16.msra.mxu0 %v201
    %323 = vmatprep.subr.bf16.mxu0 0
    %324 = vmatpush1.bf16.msra.mxu0 %v204
    %325 = vmatprep.subr.bf16.mxu0 0
    %326 = vmatpush1.bf16.msra.mxu0 %v207
    %327 = vmatprep.subr.bf16.mxu0 0
    %328 = vmatpush1.bf16.msra.mxu0 %v210
    %329 = vmatprep.subr.bf16.mxu0 0
    %330 = vmatpush1.bf16.msra.mxu0 %v213
    %331 = vmatprep.subr.bf16.mxu0 0
    %332 = vmatpush1.bf16.msra.mxu0 %v216
    %333 = vmatprep.subr.bf16.mxu0 0
    %334 = vmatpush1.bf16.msra.mxu0 0
    %335 = vmatprep.subr.bf16.mxu0 0
    %336 = vmatpush1.bf16.msra.mxu0 0
    %337 = vmatprep.subr.bf16.mxu0 0
    %338 = vmatpush1.bf16.msra.mxu0 0
    %339 = vmatprep.subr.bf16.mxu0 0
    %340 = vmatpush1.bf16.msra.mxu0 0
    %341 = vmatprep.subr.bf16.mxu0 0
    %342 = vmatpush1.bf16.msra.mxu0 0
    %343 = vmatprep.subr.bf16.mxu0 0
    %344 = vmatpush1.bf16.msra.mxu0 0
    %345 = vmatprep.subr.bf16.mxu0 0
    %346 = vmatpush1.bf16.msra.mxu0 0
    %347 = vmatprep.subr.bf16.mxu0 0
    %348 = vmatpush1.bf16.msra.mxu0 0
    %349 = vmatprep.subr.bf16.mxu0 0
    %350 = vmatpush1.bf16.msra.mxu0 0
    %351 = vmatprep.subr.bf16.mxu0 0
    %352 = vmatpush1.bf16.msra.mxu0 0
    %353 = vmatprep.mubr.bf16.mxu0 0
    %354 = vmatmul.mubr.bf16.gmra.mrb[0].mxu0 %v237
    %v355 = vpop.f32.mrb[0].mxu0
    %v356 = vadd.f32 0.0, %v355
    %v357 = vpop.f32.mrb[0].mxu0
    %v358 = vpop.f32.mrb[0].mxu0
    %v359 = vadd.f32 0.0, %v358
    %v360 = vpop.f32.mrb[0].mxu0
    %361 = vmatprep.mubr.bf16.mxu0 0
    %362 = vmatmul.mubr.bf16.gmra.mrb[0].mxu0 %v240
    %v363 = vpop.f32.mrb[0].mxu0
    %v364 = vadd.f32 0.0, %v363
    %v365 = vpop.f32.mrb[0].mxu0
    %v366 = vpop.f32.mrb[0].mxu0
    %v367 = vadd.f32 0.0, %v366
    %v368 = vpop.f32.mrb[0].mxu0
    %369 = vmatprep.mubr.bf16.mxu0 0
    %370 = vmatmul.mubr.bf16.gmra.mrb[0].mxu0 %v243
    %v371 = vpop.f32.mrb[0].mxu0
    %v372 = vadd.f32 0.0, %v371
    %v373 = vpop.f32.mrb[0].mxu0
    %v374 = vpop.f32.mrb[0].mxu0
    %v375 = vadd.f32 0.0, %v374
    %v376 = vpop.f32.mrb[0].mxu0
    %377 = vmatprep.mubr.bf16.mxu0 0
    %378 = vmatmul.mubr.bf16.gmra.mrb[0].mxu0 %v246
    %v379 = vpop.f32.mrb[0].mxu0
    %v380 = vadd.f32 0.0, %v379
    %v381 = vpop.f32.mrb[0].mxu0
    %v382 = vpop.f32.mrb[0].mxu0
    %v383 = vadd.f32 0.0, %v382
    %v384 = vpop.f32.mrb[0].mxu0
    %385 = vdwg.mxu0
    %v386 = vld [vmem:[%s1] sm:$0xff]
    %v387 = vld [vmem:[%s1 + $0x8] sm:$0xff]
    %v388 = vld [vmem:[%s1 + $0x10] sm:$0xff]
    %v389 = vld [vmem:[%s1 + $0x18] sm:$0xff]
    %s390 = scalar_lea.vmem %s1, 32
    %v391 = vld [vmem:[%s390] sm:$0xff]
    %v392 = vld [vmem:[%s390 + $0x8] sm:$0xff]
    %v393 = vld [vmem:[%s390 + $0x10] sm:$0xff]
    %v394 = vld [vmem:[%s390 + $0x18] sm:$0xff]
    %vm395 = vcmask 523264
    %v397 = vsel %vm395, %v391, 0
    %v400 = vsel %vm395, %v392, 0
    %v403 = vsel %vm395, %v393, 0
    %v406 = vsel %vm395, %v394, 0
    %408 = vmatprep.subr.mxu0 0.0
    %409 = vmatpush1.msra.mxu0 %v285
    %410 = vmatprep.subr.mxu0 0.0
    %411 = vmatpush1.msra.mxu0 %v289
    %412 = vmatprep.subr.mxu0 0.0
    %413 = vmatpush1.msra.mxu0 %v295
    %414 = vmatprep.subr.mxu0 0.0
    %415 = vmatpush1.msra.mxu0 %v299
    %416 = vmatprep.subr.mxu0 0.0
    %417 = vmatpush1.msra.mxu0 %v305
    %418 = vmatprep.subr.mxu0 0.0
    %419 = vmatpush1.msra.mxu0 %v309
    %420 = vmatprep.subr.mxu0 0.0
    %421 = vmatpush1.msra.mxu0 %v315
    %422 = vmatprep.subr.mxu0 0.0
    %423 = vmatpush1.msra.mxu0 %v319
    %424 = vmatprep.subr.mxu0 0.0
    %425 = vmatpush1.msra.mxu0 0.0
    %426 = vmatprep.subr.mxu0 0.0
    %427 = vmatpush1.msra.mxu0 0.0
    %428 = vmatprep.subr.mxu0 0.0
    %429 = vmatpush1.msra.mxu0 0.0
    %430 = vmatprep.subr.mxu0 0.0
    %431 = vmatpush1.msra.mxu0 0.0
    %432 = vmatprep.subr.mxu0 0.0
    %433 = vmatpush1.msra.mxu0 0.0
    %434 = vmatprep.subr.mxu0 0.0
    %435 = vmatpush1.msra.mxu0 0.0
    %436 = vmatprep.subr.mxu0 0.0
    %437 = vmatpush1.msra.mxu0 0.0
    %438 = vmatprep.subr.mxu0 0.0
    %439 = vmatpush1.msra.mxu0 0.0
    %440 = vmatprep.subr.mxu0 0.0
    %441 = vmatpush1.msra.mxu0 0.0
    %442 = vmatprep.subr.mxu0 0.0
    %443 = vmatpush1.msra.mxu0 0.0
    %444 = vmatprep.subr.mxu0 0.0
    %445 = vmatpush1.msra.mxu0 0.0
    %446 = vmatprep.subr.mxu0 0.0
    %447 = vmatpush1.msra.mxu0 0.0
    %448 = vmatprep.subr.mxu0 0.0
    %449 = vmatpush1.msra.mxu0 0.0
    %450 = vmatprep.subr.mxu0 0.0
    %451 = vmatpush1.msra.mxu0 0.0
    %452 = vmatprep.subr.mxu0 0.0
    %453 = vmatpush1.msra.mxu0 0.0
    %454 = vmatprep.subr.mxu0 0.0
    %455 = vmatpush1.msra.mxu0 0.0
    %456 = vmatprep.subr.mxu0 0.0
    %457 = vmatpush1.msra.mxu0 0.0
    %458 = vmatprep.subr.mxu0 0.0
    %459 = vmatpush1.msra.mxu0 0.0
    %460 = vmatprep.subr.mxu0 0.0
    %461 = vmatpush1.msra.mxu0 0.0
    %462 = vmatprep.subr.mxu0 0.0
    %463 = vmatpush1.msra.mxu0 0.0
    %464 = vmatprep.subr.mxu0 0.0
    %465 = vmatpush1.msra.mxu0 0.0
    %466 = vmatprep.subr.mxu0 0.0
    %467 = vmatpush1.msra.mxu0 0.0
    %468 = vmatprep.subr.mxu0 0.0
    %469 = vmatpush1.msra.mxu0 0.0
    %470 = vmatprep.subr.mxu0 0.0
    %471 = vmatpush1.msra.mxu0 0.0
    %472 = vmatprep.mubr.f32.mxu0 0.0
    %473 = vmatmul.mubr.f32.gmra.mrb[0].mxu0 %v397
    %v474 = vpop.f32.mrb[0].mxu0
    %v475 = vadd.f32 0.0, %v474
    %v476 = vpop.f32.mrb[0].mxu0
    %477 = vmatprep.mubr.f32.mxu0 0.0
    %478 = vmatmul.mubr.f32.gmra.mrb[0].mxu0 %v400
    %v479 = vpop.f32.mrb[0].mxu0
    %v480 = vadd.f32 0.0, %v479
    %v481 = vpop.f32.mrb[0].mxu0
    %482 = vmatprep.mubr.f32.mxu0 0.0
    %483 = vmatmul.mubr.f32.gmra.mrb[0].mxu0 %v403
    %v484 = vpop.f32.mrb[0].mxu0
    %v485 = vadd.f32 0.0, %v484
    %v486 = vpop.f32.mrb[0].mxu0
    %487 = vmatprep.mubr.f32.mxu0 0.0
    %488 = vmatmul.mubr.f32.gmra.mrb[0].mxu0 %v406
    %v489 = vpop.f32.mrb[0].mxu0
    %v490 = vadd.f32 0.0, %v489
    %v491 = vpop.f32.mrb[0].mxu0
    %492 = vdwg.mxu0
    %v494 = vsel %vm395, %v386, 0
    %v497 = vsel %vm395, %v387, 0
    %v500 = vsel %vm395, %v388, 0
    %v503 = vsel %vm395, %v389, 0
    %505 = vmatprep.subr.mxu0 0.0
    %506 = vmatpush1.msra.mxu0 %v283
    %507 = vmatprep.subr.mxu0 0.0
    %508 = vmatpush1.msra.mxu0 %v287
    %509 = vmatprep.subr.mxu0 0.0
    %510 = vmatpush1.msra.mxu0 %v293
    %511 = vmatprep.subr.mxu0 0.0
    %512 = vmatpush1.msra.mxu0 %v297
    %513 = vmatprep.subr.mxu0 0.0
    %514 = vmatpush1.msra.mxu0 %v303
    %515 = vmatprep.subr.mxu0 0.0
    %516 = vmatpush1.msra.mxu0 %v307
    %517 = vmatprep.subr.mxu0 0.0
    %518 = vmatpush1.msra.mxu0 %v313
    %519 = vmatprep.subr.mxu0 0.0
    %520 = vmatpush1.msra.mxu0 %v317
    %521 = vmatprep.subr.mxu0 0.0
    %522 = vmatpush1.msra.mxu0 0.0
    %523 = vmatprep.subr.mxu0 0.0
    %524 = vmatpush1.msra.mxu0 0.0
    %525 = vmatprep.subr.mxu0 0.0
    %526 = vmatpush1.msra.mxu0 0.0
    %527 = vmatprep.subr.mxu0 0.0
    %528 = vmatpush1.msra.mxu0 0.0
    %529 = vmatprep.subr.mxu0 0.0
    %530 = vmatpush1.msra.mxu0 0.0
    %531 = vmatprep.subr.mxu0 0.0
    %532 = vmatpush1.msra.mxu0 0.0
    %533 = vmatprep.subr.mxu0 0.0
    %534 = vmatpush1.msra.mxu0 0.0
    %535 = vmatprep.subr.mxu0 0.0
    %536 = vmatpush1.msra.mxu0 0.0
    %537 = vmatprep.subr.mxu0 0.0
    %538 = vmatpush1.msra.mxu0 0.0
    %539 = vmatprep.subr.mxu0 0.0
    %540 = vmatpush1.msra.mxu0 0.0
    %541 = vmatprep.subr.mxu0 0.0
    %542 = vmatpush1.msra.mxu0 0.0
    %543 = vmatprep.subr.mxu0 0.0
    %544 = vmatpush1.msra.mxu0 0.0
    %545 = vmatprep.subr.mxu0 0.0
    %546 = vmatpush1.msra.mxu0 0.0
    %547 = vmatprep.subr.mxu0 0.0
    %548 = vmatpush1.msra.mxu0 0.0
    %549 = vmatprep.subr.mxu0 0.0
    %550 = vmatpush1.msra.mxu0 0.0
    %551 = vmatprep.subr.mxu0 0.0
    %552 = vmatpush1.msra.mxu0 0.0
    %553 = vmatprep.subr.mxu0 0.0
    %554 = vmatpush1.msra.mxu0 0.0
    %555 = vmatprep.subr.mxu0 0.0
    %556 = vmatpush1.msra.mxu0 0.0
    %557 = vmatprep.subr.mxu0 0.0
    %558 = vmatpush1.msra.mxu0 0.0
    %559 = vmatprep.subr.mxu0 0.0
    %560 = vmatpush1.msra.mxu0 0.0
    %561 = vmatprep.subr.mxu0 0.0
    %562 = vmatpush1.msra.mxu0 0.0
    %563 = vmatprep.subr.mxu0 0.0
    %564 = vmatpush1.msra.mxu0 0.0
    %565 = vmatprep.subr.mxu0 0.0
    %566 = vmatpush1.msra.mxu0 0.0
    %567 = vmatprep.subr.mxu0 0.0
    %568 = vmatpush1.msra.mxu0 0.0
    %569 = vmatprep.mubr.f32.mxu0 0.0
    %570 = vmatmul.mubr.f32.gmra.mrb[0].mxu0 %v494
    %v571 = vpop.f32.mrb[0].mxu0
    %v572 = vadd.f32 %v475, %v571
    %v573 = vpop.f32.mrb[0].mxu0
    %574 = vmatprep.mubr.f32.mxu0 0.0
    %575 = vmatmul.mubr.f32.gmra.mrb[0].mxu0 %v497
    %v576 = vpop.f32.mrb[0].mxu0
    %v577 = vadd.f32 %v480, %v576
    %v578 = vpop.f32.mrb[0].mxu0
    %579 = vmatprep.mubr.f32.mxu0 0.0
    %580 = vmatmul.mubr.f32.gmra.mrb[0].mxu0 %v500
    %v581 = vpop.f32.mrb[0].mxu0
    %v582 = vadd.f32 %v485, %v581
    %v583 = vpop.f32.mrb[0].mxu0
    %584 = vmatprep.mubr.f32.mxu0 0.0
    %585 = vmatmul.mubr.f32.gmra.mrb[0].mxu0 %v503
    %v586 = vpop.f32.mrb[0].mxu0
    %v587 = vadd.f32 %v490, %v586
    %v588 = vpop.f32.mrb[0].mxu0
    %589 = vdwg.mxu0
    %s590 = scalar_lea.vmem %s1, 64
    %v591 = vld [vmem:[%s590] sm:$0xff]
    %v592 = vld [vmem:[%s590 + $0x8] sm:$0xff]
    %v593 = vld [vmem:[%s590 + $0x10] sm:$0xff]
    %v594 = vld [vmem:[%s590 + $0x18] sm:$0xff]
    %v596 = vsel %vm395, %v591, 0
    %v599 = vsel %vm395, %v592, 0
    %v602 = vsel %vm395, %v593, 0
    %v605 = vsel %vm395, %v594, 0
    %607 = vmatprep.subr.mxu0 0.0
    %608 = vmatpush1.msra.mxu0 %v356
    %609 = vmatprep.subr.mxu0 0.0
    %610 = vmatpush1.msra.mxu0 %v359
    %611 = vmatprep.subr.mxu0 0.0
    %612 = vmatpush1.msra.mxu0 %v364
    %613 = vmatprep.subr.mxu0 0.0
    %614 = vmatpush1.msra.mxu0 %v367
    %615 = vmatprep.subr.mxu0 0.0
    %616 = vmatpush1.msra.mxu0 %v372
    %617 = vmatprep.subr.mxu0 0.0
    %618 = vmatpush1.msra.mxu0 %v375
    %619 = vmatprep.subr.mxu0 0.0
    %620 = vmatpush1.msra.mxu0 %v380
    %621 = vmatprep.subr.mxu0 0.0
    %622 = vmatpush1.msra.mxu0 %v383
    %623 = vmatprep.subr.mxu0 0.0
    %624 = vmatpush1.msra.mxu0 0.0
    %625 = vmatprep.subr.mxu0 0.0
    %626 = vmatpush1.msra.mxu0 0.0
    %627 = vmatprep.subr.mxu0 0.0
    %628 = vmatpush1.msra.mxu0 0.0
    %629 = vmatprep.subr.mxu0 0.0
    %630 = vmatpush1.msra.mxu0 0.0
    %631 = vmatprep.subr.mxu0 0.0
    %632 = vmatpush1.msra.mxu0 0.0
    %633 = vmatprep.subr.mxu0 0.0
    %634 = vmatpush1.msra.mxu0 0.0
    %635 = vmatprep.subr.mxu0 0.0
    %636 = vmatpush1.msra.mxu0 0.0
    %637 = vmatprep.subr.mxu0 0.0
    %638 = vmatpush1.msra.mxu0 0.0
    %639 = vmatprep.subr.mxu0 0.0
    %640 = vmatpush1.msra.mxu0 0.0
    %641 = vmatprep.subr.mxu0 0.0
    %642 = vmatpush1.msra.mxu0 0.0
    %643 = vmatprep.subr.mxu0 0.0
    %644 = vmatpush1.msra.mxu0 0.0
    %645 = vmatprep.subr.mxu0 0.0
    %646 = vmatpush1.msra.mxu0 0.0
    %647 = vmatprep.subr.mxu0 0.0
    %648 = vmatpush1.msra.mxu0 0.0
    %649 = vmatprep.subr.mxu0 0.0
    %650 = vmatpush1.msra.mxu0 0.0
    %651 = vmatprep.subr.mxu0 0.0
    %652 = vmatpush1.msra.mxu0 0.0
    %653 = vmatprep.subr.mxu0 0.0
    %654 = vmatpush1.msra.mxu0 0.0
    %655 = vmatprep.subr.mxu0 0.0
    %656 = vmatpush1.msra.mxu0 0.0
    %657 = vmatprep.subr.mxu0 0.0
    %658 = vmatpush1.msra.mxu0 0.0
    %659 = vmatprep.subr.mxu0 0.0
    %660 = vmatpush1.msra.mxu0 0.0
    %661 = vmatprep.subr.mxu0 0.0
    %662 = vmatpush1.msra.mxu0 0.0
    %663 = vmatprep.subr.mxu0 0.0
    %664 = vmatpush1.msra.mxu0 0.0
    %665 = vmatprep.subr.mxu0 0.0
    %666 = vmatpush1.msra.mxu0 0.0
    %667 = vmatprep.subr.mxu0 0.0
    %668 = vmatpush1.msra.mxu0 0.0
    %669 = vmatprep.subr.mxu0 0.0
    %670 = vmatpush1.msra.mxu0 0.0
    %671 = vmatprep.mubr.f32.mxu0 0.0
    %672 = vmatmul.mubr.f32.gmra.mrb[0].mxu0 %v596
    %v673 = vpop.f32.mrb[0].mxu0
    %v674 = vadd.f32 0.0, %v673
    %v675 = vpop.f32.mrb[0].mxu0
    %676 = vmatprep.mubr.f32.mxu0 0.0
    %677 = vmatmul.mubr.f32.gmra.mrb[0].mxu0 %v599
    %v678 = vpop.f32.mrb[0].mxu0
    %v679 = vadd.f32 0.0, %v678
    %v680 = vpop.f32.mrb[0].mxu0
    %681 = vmatprep.mubr.f32.mxu0 0.0
    %682 = vmatmul.mubr.f32.gmra.mrb[0].mxu0 %v602
    %v683 = vpop.f32.mrb[0].mxu0
    %v684 = vadd.f32 0.0, %v683
    %v685 = vpop.f32.mrb[0].mxu0
    %686 = vmatprep.mubr.f32.mxu0 0.0
    %687 = vmatmul.mubr.f32.gmra.mrb[0].mxu0 %v605
    %v688 = vpop.f32.mrb[0].mxu0
    %v689 = vadd.f32 0.0, %v688
    %v690 = vpop.f32.mrb[0].mxu0
    %691 = vdwg.mxu0
    %v692 = vadd.f32 %v572, %v674
    %v693 = vadd.f32 %v577, %v679
    %v694 = vadd.f32 %v582, %v684
    %v695 = vadd.f32 %v587, %v689
    %v696 = vld [vmem:[%s3] sm:$0x1]
    %v698 = vlaneseq
    %v699 = vshrl.u32 %v698, 7
    %v700 = vsub.s32 0, %v699
    %v701 = vrot.slane %v696, %v700
    %v703 = vadd.f32 %v692, %v701
    %v704 = vadd.f32 %v693, %v701
    %v705 = vadd.f32 %v694, %v701
    %v706 = vadd.f32 %v695, %v701
    %v707 = vmul.f32 %v703, 0.70710677
    %v708 = vmul.f32 %v704, 0.70710677
    %v709 = vmul.f32 %v705, 0.70710677
    %v710 = vmul.f32 %v706, 0.70710677
    %v711 = vand.u32 2147483647, %v707
    %v712 = vand.u32 2147483647, %v708
    %v713 = vand.u32 2147483647, %v709
    %v714 = vand.u32 2147483647, %v710
    %v715 = vmul.f32 %v711, 0.3275911
    %v716 = vmul.f32 %v712, 0.3275911
    %v717 = vmul.f32 %v713, 0.3275911
    %v718 = vmul.f32 %v714, 0.3275911
    %v719 = vadd.f32 %v715, 1.0
    %v720 = vadd.f32 %v716, 1.0
    %v721 = vadd.f32 %v717, 1.0
    %v722 = vadd.f32 %v718, 1.0
    %v723 = vrcp.pop %v719
    %v724 = vrcp.pop %v720
    %v725 = vrcp.pop %v721
    %v726 = vrcp.pop %v722
    %v727 = vmul.f32 %v723, 1.0614054
    %v728 = vmul.f32 %v724, 1.0614054
    %v729 = vmul.f32 %v725, 1.0614054
    %v730 = vmul.f32 %v726, 1.0614054
    %v731 = vadd.f32 %v727, -1.4531521
    %v732 = vadd.f32 %v728, -1.4531521
    %v733 = vadd.f32 %v729, -1.4531521
    %v734 = vadd.f32 %v730, -1.4531521
    %v735 = vmul.f32 %v723, %v731
    %v736 = vmul.f32 %v724, %v732
    %v737 = vmul.f32 %v725, %v733
    %v738 = vmul.f32 %v726, %v734
    %v739 = vadd.f32 %v735, 1.4214138
    %v740 = vadd.f32 %v736, 1.4214138
    %v741 = vadd.f32 %v737, 1.4214138
    %v742 = vadd.f32 %v738, 1.4214138
    %v743 = vmul.f32 %v723, %v739
    %v744 = vmul.f32 %v724, %v740
    %v745 = vmul.f32 %v725, %v741
    %v746 = vmul.f32 %v726, %v742
    %v747 = vadd.f32 %v743, -0.28449672
    %v748 = vadd.f32 %v744, -0.28449672
    %v749 = vadd.f32 %v745, -0.28449672
    %v750 = vadd.f32 %v746, -0.28449672
    %v751 = vmul.f32 %v723, %v747
    %v752 = vmul.f32 %v724, %v748
    %v753 = vmul.f32 %v725, %v749
    %v754 = vmul.f32 %v726, %v750
    %v755 = vadd.f32 %v751, 0.2548296
    %v756 = vadd.f32 %v752, 0.2548296
    %v757 = vadd.f32 %v753, 0.2548296
    %v758 = vadd.f32 %v754, 0.2548296
    %v759 = vmul.f32 %v723, %v755
    %v760 = vmul.f32 %v724, %v756
    %v761 = vmul.f32 %v725, %v757
    %v762 = vmul.f32 %v726, %v758
    %v763 = vsub.f32 0.0, %v711
    %v764 = vsub.f32 0.0, %v712
    %v765 = vsub.f32 0.0, %v713
    %v766 = vsub.f32 0.0, %v714
    %v767 = vmul.f32 %v763, %v711
    %v768 = vmul.f32 %v764, %v712
    %v769 = vmul.f32 %v765, %v713
    %v770 = vmul.f32 %v766, %v714
    %v771 = vmul.f32 %v767, 1.442695
    %v772 = vpow.pop %v771
    %v773 = vmul.f32 %v768, 1.442695
    %v774 = vpow.pop %v773
    %v775 = vmul.f32 %v769, 1.442695
    %v776 = vpow.pop %v775
    %v777 = vmul.f32 %v770, 1.442695
    %v778 = vpow.pop %v777
    %v779 = vmul.f32 %v759, %v772
    %v780 = vmul.f32 %v760, %v774
    %v781 = vmul.f32 %v761, %v776
    %v782 = vmul.f32 %v762, %v778
    %v783 = vsub.f32 1.0, %v779
    %v784 = vsub.f32 1.0, %v780
    %v785 = vsub.f32 1.0, %v781
    %v786 = vsub.f32 1.0, %v782
    %vm787 = vcmp.lt.f32.partialorder %v707, 0.0
    %vm788 = vcmp.lt.f32.partialorder %v708, 0.0
    %vm789 = vcmp.lt.f32.partialorder %v709, 0.0
    %vm790 = vcmp.lt.f32.partialorder %v710, 0.0
    %v791 = vsub.f32 0.0, %v783
    %v792 = vsub.f32 0.0, %v784
    %v793 = vsub.f32 0.0, %v785
    %v794 = vsub.f32 0.0, %v786
    %v795 = vsel %vm787, %v791, %v783
    %v796 = vsel %vm788, %v792, %v784
    %v797 = vsel %vm789, %v793, %v785
    %v798 = vsel %vm790, %v794, %v786
    %v799 = vmul.f32 %v703, 0.5
    %v800 = vmul.f32 %v704, 0.5
    %v801 = vmul.f32 %v705, 0.5
    %v802 = vmul.f32 %v706, 0.5
    %v803 = vadd.f32 %v795, 1.0
    %v804 = vadd.f32 %v796, 1.0
    %v805 = vadd.f32 %v797, 1.0
    %v806 = vadd.f32 %v798, 1.0
    %v807 = vmul.f32 %v799, %v803
    %v808 = vmul.f32 %v800, %v804
    %v809 = vmul.f32 %v801, %v805
    %v810 = vmul.f32 %v802, %v806
    %v811 = vpack.c.bf16 %v808, %v807
    %v812 = vpack.c.bf16 %v810, %v809
    %v813 = vld [vmem:[%s5] sm:$0xff]
    %v814 = vld [vmem:[%s5 + $0x8] sm:$0xf]
    %v815 = vld [vmem:[%s5 + $0xc] sm:$0xff]
    %v816 = vld [vmem:[%s5 + $0x14] sm:$0xf]
    %v817 = vld [vmem:[%s5 + $0x18] sm:$0xff]
    %v818 = vld [vmem:[%s5 + $0x20] sm:$0xf]
    %v819 = vld [vmem:[%s5 + $0x24] sm:$0xff]
    %v820 = vld [vmem:[%s5 + $0x2c] sm:$0xf]
    %v821 = vld [vmem:[%s5 + $0x30] sm:$0xff]
    %v822 = vld [vmem:[%s5 + $0x38] sm:$0xf]
    %v823 = vld [vmem:[%s5 + $0x3c] sm:$0xff]
    %v824 = vld [vmem:[%s5 + $0x44] sm:$0xf]
    %v825 = vld [vmem:[%s5 + $0x48] sm:$0xff]
    %v826 = vld [vmem:[%s5 + $0x50] sm:$0xf]
    %v827 = vld [vmem:[%s5 + $0x54] sm:$0xff]
    %v828 = vld [vmem:[%s5 + $0x5c] sm:$0xf]
    %v829 = vld [vmem:[%s5 + $0x60] sm:$0xff]
    %v830 = vld [vmem:[%s5 + $0x68] sm:$0xf]
    %v831 = vld [vmem:[%s5 + $0x6c] sm:$0xff]
    %v832 = vld [vmem:[%s5 + $0x74] sm:$0xf]
    %v833 = vld [vmem:[%s5 + $0x78] sm:$0xff]
    %v834 = vld [vmem:[%s5 + $0x80] sm:$0xf]
    %v835 = vld [vmem:[%s5 + $0x84] sm:$0xff]
    %v836 = vld [vmem:[%s5 + $0x8c] sm:$0xf]
    %v837 = vld [vmem:[%s5 + $0x90] sm:$0xff]
    %v838 = vld [vmem:[%s5 + $0x98] sm:$0xf]
    %v839 = vld [vmem:[%s5 + $0x9c] sm:$0xff]
    %v840 = vld [vmem:[%s5 + $0xa4] sm:$0xf]
    %v841 = vld [vmem:[%s5 + $0xa8] sm:$0xff]
    %v842 = vld [vmem:[%s5 + $0xb0] sm:$0xf]
    %v843 = vld [vmem:[%s5 + $0xb4] sm:$0xff]
    %v844 = vld [vmem:[%s5 + $0xbc] sm:$0xf]
    %v877 = vunpack.c.l.b16 %v813
    %v878 = vunpack.c.h.b16 %v813
    %v879 = vunpack.c.l.b16 %v814
    %v880 = vunpack.c.l.b16 %v815
    %v881 = vunpack.c.h.b16 %v815
    %v882 = vunpack.c.l.b16 %v816
    %v883 = vunpack.c.l.b16 %v817
    %v884 = vunpack.c.h.b16 %v817
    %v885 = vunpack.c.l.b16 %v818
    %v886 = vunpack.c.l.b16 %v819
    %v887 = vunpack.c.h.b16 %v819
    %v888 = vunpack.c.l.b16 %v820
    %v889 = vunpack.c.l.b16 %v821
    %v890 = vunpack.c.h.b16 %v821
    %v891 = vunpack.c.l.b16 %v822
    %v892 = vunpack.c.l.b16 %v823
    %v893 = vunpack.c.h.b16 %v823
    %v894 = vunpack.c.l.b16 %v824
    %v895 = vunpack.c.l.b16 %v825
    %v896 = vunpack.c.h.b16 %v825
    %v897 = vunpack.c.l.b16 %v826
    %v898 = vunpack.c.l.b16 %v827
    %v899 = vunpack.c.h.b16 %v827
    %v900 = vunpack.c.l.b16 %v828
    %v901 = vunpack.c.l.b16 %v829
    %v902 = vunpack.c.h.b16 %v829
    %v903 = vunpack.c.l.b16 %v830
    %v904 = vunpack.c.l.b16 %v831
    %v905 = vunpack.c.h.b16 %v831
    %v906 = vunpack.c.l.b16 %v832
    %v907 = vunpack.c.l.b16 %v833
    %v908 = vunpack.c.h.b16 %v833
    %v909 = vunpack.c.l.b16 %v834
    %v910 = vunpack.c.l.b16 %v835
    %v911 = vunpack.c.h.b16 %v835
    %v912 = vunpack.c.l.b16 %v836
    %v913 = vunpack.c.l.b16 %v837
    %v914 = vunpack.c.h.b16 %v837
    %v915 = vunpack.c.l.b16 %v838
    %v916 = vunpack.c.l.b16 %v839
    %v917 = vunpack.c.h.b16 %v839
    %v918 = vunpack.c.l.b16 %v840
    %v919 = vunpack.c.l.b16 %v841
    %v920 = vunpack.c.h.b16 %v841
    %v921 = vunpack.c.l.b16 %v842
    %v922 = vunpack.c.l.b16 %v843
    %v923 = vunpack.c.h.b16 %v843
    %v924 = vunpack.c.l.b16 %v844
    %v925 = vpack.c.b16 %v880, %v877
    %v926 = vpack.c.b16 %v881, %v878
    %v927 = vpack.c.b16 %v882, %v879
    %v928 = vpack.c.b16 %v886, %v883
    %v929 = vpack.c.b16 %v887, %v884
    %v930 = vpack.c.b16 %v888, %v885
    %v931 = vpack.c.b16 %v892, %v889
    %v932 = vpack.c.b16 %v893, %v890
    %v933 = vpack.c.b16 %v894, %v891
    %v934 = vpack.c.b16 %v898, %v895
    %v935 = vpack.c.b16 %v899, %v896
    %v936 = vpack.c.b16 %v900, %v897
    %v937 = vpack.c.b16 %v904, %v901
    %v938 = vpack.c.b16 %v905, %v902
    %v939 = vpack.c.b16 %v906, %v903
    %v940 = vpack.c.b16 %v910, %v907
    %v941 = vpack.c.b16 %v911, %v908
    %v942 = vpack.c.b16 %v912, %v909
    %v943 = vpack.c.b16 %v916, %v913
    %v944 = vpack.c.b16 %v917, %v914
    %v945 = vpack.c.b16 %v918, %v915
    %v946 = vpack.c.b16 %v922, %v919
    %v947 = vpack.c.b16 %v923, %v920
    %v948 = vpack.c.b16 %v924, %v921
    %973 = vmatprep.subr.bf16.mxu0 %v926
    %974 = vmatpush1.bf16.msra.mxu0 %v925
    %975 = vmatprep.subr.bf16.mxu0 %v929
    %976 = vmatpush1.bf16.msra.mxu0 %v928
    %977 = vmatprep.subr.bf16.mxu0 %v932
    %978 = vmatpush1.bf16.msra.mxu0 %v931
    %979 = vmatprep.subr.bf16.mxu0 %v935
    %980 = vmatpush1.bf16.msra.mxu0 %v934
    %981 = vmatprep.subr.bf16.mxu0 %v938
    %982 = vmatpush1.bf16.msra.mxu0 %v937
    %983 = vmatprep.subr.bf16.mxu0 %v941
    %984 = vmatpush1.bf16.msra.mxu0 %v940
    %985 = vmatprep.subr.bf16.mxu0 %v944
    %986 = vmatpush1.bf16.msra.mxu0 %v943
    %987 = vmatprep.subr.bf16.mxu0 %v947
    %988 = vmatpush1.bf16.msra.mxu0 %v946
    %989 = vmatprep.subr.bf16.mxu0 0
    %990 = vmatpush1.bf16.msra.mxu0 0
    %991 = vmatprep.subr.bf16.mxu0 0
    %992 = vmatpush1.bf16.msra.mxu0 0
    %993 = vmatprep.subr.bf16.mxu0 0
    %994 = vmatpush1.bf16.msra.mxu0 0
    %995 = vmatprep.subr.bf16.mxu0 0
    %996 = vmatpush1.bf16.msra.mxu0 0
    %997 = vmatprep.subr.bf16.mxu0 0
    %998 = vmatpush1.bf16.msra.mxu0 0
    %999 = vmatprep.subr.bf16.mxu0 0
    %1000 = vmatpush1.bf16.msra.mxu0 0
    %1001 = vmatprep.subr.bf16.mxu0 0
    %1002 = vmatpush1.bf16.msra.mxu0 0
    %1003 = vmatprep.subr.bf16.mxu0 0
    %1004 = vmatpush1.bf16.msra.mxu0 0
    %1005 = vmatprep.mubr.bf16.mxu0 0
    %1006 = vmatmul.mubr.bf16.gmra.mrb[0].mxu0 %v811
    %v1007 = vpop.f32.mrb[0].mxu0
    %v1008 = vadd.f32 0.0, %v1007
    %v1009 = vpop.f32.mrb[0].mxu0
    %v1010 = vadd.f32 0.0, %v1009
    %v1011 = vpop.f32.mrb[0].mxu0
    %v1012 = vadd.f32 0.0, %v1011
    %v1013 = vpop.f32.mrb[0].mxu0
    %v1014 = vadd.f32 0.0, %v1013
    %1015 = vmatprep.mubr.bf16.mxu0 0
    %1016 = vmatmul.mubr.bf16.gmra.mrb[0].mxu0 %v812
    %v1017 = vpop.f32.mrb[0].mxu0
    %v1018 = vadd.f32 0.0, %v1017
    %v1019 = vpop.f32.mrb[0].mxu0
    %v1020 = vadd.f32 0.0, %v1019
    %v1021 = vpop.f32.mrb[0].mxu0
    %v1022 = vadd.f32 0.0, %v1021
    %v1023 = vpop.f32.mrb[0].mxu0
    %v1024 = vadd.f32 0.0, %v1023
    %1025 = vdwg.mxu0
    %1026 = vmatprep.subr.bf16.mxu0 0
    %1027 = vmatpush1.bf16.msra.mxu0 %v927
    %1028 = vmatprep.subr.bf16.mxu0 0
    %1029 = vmatpush1.bf16.msra.mxu0 %v930
    %1030 = vmatprep.subr.bf16.mxu0 0
    %1031 = vmatpush1.bf16.msra.mxu0 %v933
    %1032 = vmatprep.subr.bf16.mxu0 0
    %1033 = vmatpush1.bf16.msra.mxu0 %v936
    %1034 = vmatprep.subr.bf16.mxu0 0
    %1035 = vmatpush1.bf16.msra.mxu0 %v939
    %1036 = vmatprep.subr.bf16.mxu0 0
    %1037 = vmatpush1.bf16.msra.mxu0 %v942
    %1038 = vmatprep.subr.bf16.mxu0 0
    %1039 = vmatpush1.bf16.msra.mxu0 %v945
    %1040 = vmatprep.subr.bf16.mxu0 0
    %1041 = vmatpush1.bf16.msra.mxu0 %v948
    %1042 = vmatprep.subr.bf16.mxu0 0
    %1043 = vmatpush1.bf16.msra.mxu0 0
    %1044 = vmatprep.subr.bf16.mxu0 0
    %1045 = vmatpush1.bf16.msra.mxu0 0
    %1046 = vmatprep.subr.bf16.mxu0 0
    %1047 = vmatpush1.bf16.msra.mxu0 0
    %1048 = vmatprep.subr.bf16.mxu0 0
    %1049 = vmatpush1.bf16.msra.mxu0 0
    %1050 = vmatprep.subr.bf16.mxu0 0
    %1051 = vmatpush1.bf16.msra.mxu0 0
    %1052 = vmatprep.subr.bf16.mxu0 0
    %1053 = vmatpush1.bf16.msra.mxu0 0
    %1054 = vmatprep.subr.bf16.mxu0 0
    %1055 = vmatpush1.bf16.msra.mxu0 0
    %1056 = vmatprep.subr.bf16.mxu0 0
    %1057 = vmatpush1.bf16.msra.mxu0 0
    %1058 = vmatprep.mubr.bf16.mxu0 0
    %1059 = vmatmul.mubr.bf16.gmra.mrb[0].mxu0 %v811
    %v1060 = vpop.f32.mrb[0].mxu0
    %v1061 = vadd.f32 0.0, %v1060
    %v1062 = vpop.f32.mrb[0].mxu0
    %v1063 = vpop.f32.mrb[0].mxu0
    %v1064 = vadd.f32 0.0, %v1063
    %v1065 = vpop.f32.mrb[0].mxu0
    %1066 = vmatprep.mubr.bf16.mxu0 0
    %1067 = vmatmul.mubr.bf16.gmra.mrb[0].mxu0 %v812
    %v1068 = vpop.f32.mrb[0].mxu0
    %v1069 = vadd.f32 0.0, %v1068
    %v1070 = vpop.f32.mrb[0].mxu0
    %v1071 = vpop.f32.mrb[0].mxu0
    %v1072 = vadd.f32 0.0, %v1071
    %v1073 = vpop.f32.mrb[0].mxu0
    %1074 = vdwg.mxu0
    %v1075 = vld [vmem:[%s4] sm:$0xff]
    %v1076 = vld [vmem:[%s4 + $0x8] sm:$0xff]
    %v1077 = vld [vmem:[%s4 + $0x10] sm:$0xff]
    %v1078 = vld [vmem:[%s4 + $0x18] sm:$0xff]
    %vm1079 = vcmask 261120
    %v1081 = vsel %vm1079, %v1075, 0
    %v1084 = vsel %vm1079, %v1076, 0
    %v1087 = vsel %vm1079, %v1077, 0
    %v1090 = vsel %vm1079, %v1078, 0
    %1092 = vmatprep.subr.mxu0 0.0
    %1093 = vmatpush1.msra.mxu0 %v1008
    %1094 = vmatprep.subr.mxu0 0.0
    %1095 = vmatpush1.msra.mxu0 %v1012
    %1096 = vmatprep.subr.mxu0 0.0
    %1097 = vmatpush1.msra.mxu0 %v1018
    %1098 = vmatprep.subr.mxu0 0.0
    %1099 = vmatpush1.msra.mxu0 %v1022
    %1100 = vmatprep.subr.mxu0 0.0
    %1101 = vmatpush1.msra.mxu0 0.0
    %1102 = vmatprep.subr.mxu0 0.0
    %1103 = vmatpush1.msra.mxu0 0.0
    %1104 = vmatprep.subr.mxu0 0.0
    %1105 = vmatpush1.msra.mxu0 0.0
    %1106 = vmatprep.subr.mxu0 0.0
    %1107 = vmatpush1.msra.mxu0 0.0
    %1108 = vmatprep.subr.mxu0 0.0
    %1109 = vmatpush1.msra.mxu0 0.0
    %1110 = vmatprep.subr.mxu0 0.0
    %1111 = vmatpush1.msra.mxu0 0.0
    %1112 = vmatprep.subr.mxu0 0.0
    %1113 = vmatpush1.msra.mxu0 0.0
    %1114 = vmatprep.subr.mxu0 0.0
    %1115 = vmatpush1.msra.mxu0 0.0
    %1116 = vmatprep.subr.mxu0 0.0
    %1117 = vmatpush1.msra.mxu0 0.0
    %1118 = vmatprep.subr.mxu0 0.0
    %1119 = vmatpush1.msra.mxu0 0.0
    %1120 = vmatprep.subr.mxu0 0.0
    %1121 = vmatpush1.msra.mxu0 0.0
    %1122 = vmatprep.subr.mxu0 0.0
    %1123 = vmatpush1.msra.mxu0 0.0
    %1124 = vmatprep.subr.mxu0 0.0
    %1125 = vmatpush1.msra.mxu0 0.0
    %1126 = vmatprep.subr.mxu0 0.0
    %1127 = vmatpush1.msra.mxu0 0.0
    %1128 = vmatprep.subr.mxu0 0.0
    %1129 = vmatpush1.msra.mxu0 0.0
    %1130 = vmatprep.subr.mxu0 0.0
    %1131 = vmatpush1.msra.mxu0 0.0
    %1132 = vmatprep.subr.mxu0 0.0
    %1133 = vmatpush1.msra.mxu0 0.0
    %1134 = vmatprep.subr.mxu0 0.0
    %1135 = vmatpush1.msra.mxu0 0.0
    %1136 = vmatprep.subr.mxu0 0.0
    %1137 = vmatpush1.msra.mxu0 0.0
    %1138 = vmatprep.subr.mxu0 0.0
    %1139 = vmatpush1.msra.mxu0 0.0
    %1140 = vmatprep.subr.mxu0 0.0
    %1141 = vmatpush1.msra.mxu0 0.0
    %1142 = vmatprep.subr.mxu0 0.0
    %1143 = vmatpush1.msra.mxu0 0.0
    %1144 = vmatprep.subr.mxu0 0.0
    %1145 = vmatpush1.msra.mxu0 0.0
    %1146 = vmatprep.subr.mxu0 0.0
    %1147 = vmatpush1.msra.mxu0 0.0
    %1148 = vmatprep.subr.mxu0 0.0
    %1149 = vmatpush1.msra.mxu0 0.0
    %1150 = vmatprep.subr.mxu0 0.0
    %1151 = vmatpush1.msra.mxu0 0.0
    %1152 = vmatprep.subr.mxu0 0.0
    %1153 = vmatpush1.msra.mxu0 0.0
    %1154 = vmatprep.subr.mxu0 0.0
    %1155 = vmatpush1.msra.mxu0 0.0
    %1156 = vmatprep.mubr.f32.mxu0 0.0
    %1157 = vmatmul.mubr.f32.gmra.mrb[0].mxu0 %v1081
    %v1158 = vpop.f32.mrb[0].mxu0
    %v1159 = vadd.f32 %v1010, %v1158
    %v1160 = vpop.f32.mrb[0].mxu0
    %1161 = vmatprep.mubr.f32.mxu0 0.0
    %1162 = vmatmul.mubr.f32.gmra.mrb[0].mxu0 %v1084
    %v1163 = vpop.f32.mrb[0].mxu0
    %v1164 = vadd.f32 %v1014, %v1163
    %v1165 = vpop.f32.mrb[0].mxu0
    %1166 = vmatprep.mubr.f32.mxu0 0.0
    %1167 = vmatmul.mubr.f32.gmra.mrb[0].mxu0 %v1087
    %v1168 = vpop.f32.mrb[0].mxu0
    %v1169 = vadd.f32 %v1020, %v1168
    %v1170 = vpop.f32.mrb[0].mxu0
    %1171 = vmatprep.mubr.f32.mxu0 0.0
    %1172 = vmatmul.mubr.f32.gmra.mrb[0].mxu0 %v1090
    %v1173 = vpop.f32.mrb[0].mxu0
    %v1174 = vadd.f32 %v1024, %v1173
    %v1175 = vpop.f32.mrb[0].mxu0
    %1176 = vdwg.mxu0
    %s1177 = scalar_lea.vmem %s4, 64
    %v1178 = vld [vmem:[%s1177] sm:$0xff]
    %v1179 = vld [vmem:[%s1177 + $0x8] sm:$0xff]
    %v1180 = vld [vmem:[%s1177 + $0x10] sm:$0xff]
    %v1181 = vld [vmem:[%s1177 + $0x18] sm:$0xff]
    %v1183 = vsel %vm1079, %v1178, 0
    %v1186 = vsel %vm1079, %v1179, 0
    %v1189 = vsel %vm1079, %v1180, 0
    %v1192 = vsel %vm1079, %v1181, 0
    %1194 = vmatprep.subr.mxu0 0.0
    %1195 = vmatpush1.msra.mxu0 %v1061
    %1196 = vmatprep.subr.mxu0 0.0
    %1197 = vmatpush1.msra.mxu0 %v1064
    %1198 = vmatprep.subr.mxu0 0.0
    %1199 = vmatpush1.msra.mxu0 %v1069
    %1200 = vmatprep.subr.mxu0 0.0
    %1201 = vmatpush1.msra.mxu0 %v1072
    %1202 = vmatprep.subr.mxu0 0.0
    %1203 = vmatpush1.msra.mxu0 0.0
    %1204 = vmatprep.subr.mxu0 0.0
    %1205 = vmatpush1.msra.mxu0 0.0
    %1206 = vmatprep.subr.mxu0 0.0
    %1207 = vmatpush1.msra.mxu0 0.0
    %1208 = vmatprep.subr.mxu0 0.0
    %1209 = vmatpush1.msra.mxu0 0.0
    %1210 = vmatprep.subr.mxu0 0.0
    %1211 = vmatpush1.msra.mxu0 0.0
    %1212 = vmatprep.subr.mxu0 0.0
    %1213 = vmatpush1.msra.mxu0 0.0
    %1214 = vmatprep.subr.mxu0 0.0
    %1215 = vmatpush1.msra.mxu0 0.0
    %1216 = vmatprep.subr.mxu0 0.0
    %1217 = vmatpush1.msra.mxu0 0.0
    %1218 = vmatprep.subr.mxu0 0.0
    %1219 = vmatpush1.msra.mxu0 0.0
    %1220 = vmatprep.subr.mxu0 0.0
    %1221 = vmatpush1.msra.mxu0 0.0
    %1222 = vmatprep.subr.mxu0 0.0
    %1223 = vmatpush1.msra.mxu0 0.0
    %1224 = vmatprep.subr.mxu0 0.0
    %1225 = vmatpush1.msra.mxu0 0.0
    %1226 = vmatprep.subr.mxu0 0.0
    %1227 = vmatpush1.msra.mxu0 0.0
    %1228 = vmatprep.subr.mxu0 0.0
    %1229 = vmatpush1.msra.mxu0 0.0
    %1230 = vmatprep.subr.mxu0 0.0
    %1231 = vmatpush1.msra.mxu0 0.0
    %1232 = vmatprep.subr.mxu0 0.0
    %1233 = vmatpush1.msra.mxu0 0.0
    %1234 = vmatprep.subr.mxu0 0.0
    %1235 = vmatpush1.msra.mxu0 0.0
    %1236 = vmatprep.subr.mxu0 0.0
    %1237 = vmatpush1.msra.mxu0 0.0
    %1238 = vmatprep.subr.mxu0 0.0
    %1239 = vmatpush1.msra.mxu0 0.0
    %1240 = vmatprep.subr.mxu0 0.0
    %1241 = vmatpush1.msra.mxu0 0.0
    %1242 = vmatprep.subr.mxu0 0.0
    %1243 = vmatpush1.msra.mxu0 0.0
    %1244 = vmatprep.subr.mxu0 0.0
    %1245 = vmatpush1.msra.mxu0 0.0
    %1246 = vmatprep.subr.mxu0 0.0
    %1247 = vmatpush1.msra.mxu0 0.0
    %1248 = vmatprep.subr.mxu0 0.0
    %1249 = vmatpush1.msra.mxu0 0.0
    %1250 = vmatprep.subr.mxu0 0.0
    %1251 = vmatpush1.msra.mxu0 0.0
    %1252 = vmatprep.subr.mxu0 0.0
    %1253 = vmatpush1.msra.mxu0 0.0
    %1254 = vmatprep.subr.mxu0 0.0
    %1255 = vmatpush1.msra.mxu0 0.0
    %1256 = vmatprep.subr.mxu0 0.0
    %1257 = vmatpush1.msra.mxu0 0.0
    %1258 = vmatprep.mubr.f32.mxu0 0.0
    %1259 = vmatmul.mubr.f32.gmra.mrb[0].mxu0 %v1183
    %v1260 = vpop.f32.mrb[0].mxu0
    %v1261 = vadd.f32 0.0, %v1260
    %v1262 = vpop.f32.mrb[0].mxu0
    %1263 = vmatprep.mubr.f32.mxu0 0.0
    %1264 = vmatmul.mubr.f32.gmra.mrb[0].mxu0 %v1186
    %v1265 = vpop.f32.mrb[0].mxu0
    %v1266 = vadd.f32 0.0, %v1265
    %v1267 = vpop.f32.mrb[0].mxu0
    %1268 = vmatprep.mubr.f32.mxu0 0.0
    %1269 = vmatmul.mubr.f32.gmra.mrb[0].mxu0 %v1189
    %v1270 = vpop.f32.mrb[0].mxu0
    %v1271 = vadd.f32 0.0, %v1270
    %v1272 = vpop.f32.mrb[0].mxu0
    %1273 = vmatprep.mubr.f32.mxu0 0.0
    %1274 = vmatmul.mubr.f32.gmra.mrb[0].mxu0 %v1192
    %v1275 = vpop.f32.mrb[0].mxu0
    %v1276 = vadd.f32 0.0, %v1275
    %v1277 = vpop.f32.mrb[0].mxu0
    %1278 = vdwg.mxu0
    %v1279 = vadd.f32 %v1159, %v1261
    %v1280 = vadd.f32 %v1164, %v1266
    %v1281 = vadd.f32 %v1169, %v1271
    %v1282 = vadd.f32 %v1174, %v1276
    %v1283 = vld [vmem:[%s6] sm:$0x1]
    %v1285 = vlaneseq
    %v1286 = vshrl.u32 %v1285, 7
    %v1287 = vsub.s32 0, %v1286
    %v1288 = vrot.slane %v1283, %v1287
    %v1290 = vadd.f32 %v1279, %v1288
    %v1291 = vadd.f32 %v1280, %v1288
    %v1292 = vadd.f32 %v1281, %v1288
    %v1293 = vadd.f32 %v1282, %v1288
    %v1294 = vmul.f32 %v1290, 0.70710677
    %v1295 = vmul.f32 %v1291, 0.70710677
    %v1296 = vmul.f32 %v1292, 0.70710677
    %v1297 = vmul.f32 %v1293, 0.70710677
    %v1298 = vand.u32 2147483647, %v1294
    %v1299 = vand.u32 2147483647, %v1295
    %v1300 = vand.u32 2147483647, %v1296
    %v1301 = vand.u32 2147483647, %v1297
    %v1302 = vmul.f32 %v1298, 0.3275911
    %v1303 = vmul.f32 %v1299, 0.3275911
    %v1304 = vmul.f32 %v1300, 0.3275911
    %v1305 = vmul.f32 %v1301, 0.3275911
    %v1306 = vadd.f32 %v1302, 1.0
    %v1307 = vadd.f32 %v1303, 1.0
    %v1308 = vadd.f32 %v1304, 1.0
    %v1309 = vadd.f32 %v1305, 1.0
    %v1310 = vrcp.pop %v1306
    %v1311 = vrcp.pop %v1307
    %v1312 = vrcp.pop %v1308
    %v1313 = vrcp.pop %v1309
    %v1314 = vmul.f32 %v1310, 1.0614054
    %v1315 = vmul.f32 %v1311, 1.0614054
    %v1316 = vmul.f32 %v1312, 1.0614054
    %v1317 = vmul.f32 %v1313, 1.0614054
    %v1318 = vadd.f32 %v1314, -1.4531521
    %v1319 = vadd.f32 %v1315, -1.4531521
    %v1320 = vadd.f32 %v1316, -1.4531521
    %v1321 = vadd.f32 %v1317, -1.4531521
    %v1322 = vmul.f32 %v1310, %v1318
    %v1323 = vmul.f32 %v1311, %v1319
    %v1324 = vmul.f32 %v1312, %v1320
    %v1325 = vmul.f32 %v1313, %v1321
    %v1326 = vadd.f32 %v1322, 1.4214138
    %v1327 = vadd.f32 %v1323, 1.4214138
    %v1328 = vadd.f32 %v1324, 1.4214138
    %v1329 = vadd.f32 %v1325, 1.4214138
    %v1330 = vmul.f32 %v1310, %v1326
    %v1331 = vmul.f32 %v1311, %v1327
    %v1332 = vmul.f32 %v1312, %v1328
    %v1333 = vmul.f32 %v1313, %v1329
    %v1334 = vadd.f32 %v1330, -0.28449672
    %v1335 = vadd.f32 %v1331, -0.28449672
    %v1336 = vadd.f32 %v1332, -0.28449672
    %v1337 = vadd.f32 %v1333, -0.28449672
    %v1338 = vmul.f32 %v1310, %v1334
    %v1339 = vmul.f32 %v1311, %v1335
    %v1340 = vmul.f32 %v1312, %v1336
    %v1341 = vmul.f32 %v1313, %v1337
    %v1342 = vadd.f32 %v1338, 0.2548296
    %v1343 = vadd.f32 %v1339, 0.2548296
    %v1344 = vadd.f32 %v1340, 0.2548296
    %v1345 = vadd.f32 %v1341, 0.2548296
    %v1346 = vmul.f32 %v1310, %v1342
    %v1347 = vmul.f32 %v1311, %v1343
    %v1348 = vmul.f32 %v1312, %v1344
    %v1349 = vmul.f32 %v1313, %v1345
    %v1350 = vsub.f32 0.0, %v1298
    %v1351 = vsub.f32 0.0, %v1299
    %v1352 = vsub.f32 0.0, %v1300
    %v1353 = vsub.f32 0.0, %v1301
    %v1354 = vmul.f32 %v1350, %v1298
    %v1355 = vmul.f32 %v1351, %v1299
    %v1356 = vmul.f32 %v1352, %v1300
    %v1357 = vmul.f32 %v1353, %v1301
    %v1358 = vmul.f32 %v1354, 1.442695
    %v1359 = vpow.pop %v1358
    %v1360 = vmul.f32 %v1355, 1.442695
    %v1361 = vpow.pop %v1360
    %v1362 = vmul.f32 %v1356, 1.442695
    %v1363 = vpow.pop %v1362
    %v1364 = vmul.f32 %v1357, 1.442695
    %v1365 = vpow.pop %v1364
    %v1366 = vmul.f32 %v1346, %v1359
    %v1367 = vmul.f32 %v1347, %v1361
    %v1368 = vmul.f32 %v1348, %v1363
    %v1369 = vmul.f32 %v1349, %v1365
    %v1370 = vsub.f32 1.0, %v1366
    %v1371 = vsub.f32 1.0, %v1367
    %v1372 = vsub.f32 1.0, %v1368
    %v1373 = vsub.f32 1.0, %v1369
    %vm1374 = vcmp.lt.f32.partialorder %v1294, 0.0
    %vm1375 = vcmp.lt.f32.partialorder %v1295, 0.0
    %vm1376 = vcmp.lt.f32.partialorder %v1296, 0.0
    %vm1377 = vcmp.lt.f32.partialorder %v1297, 0.0
    %v1378 = vsub.f32 0.0, %v1370
    %v1379 = vsub.f32 0.0, %v1371
    %v1380 = vsub.f32 0.0, %v1372
    %v1381 = vsub.f32 0.0, %v1373
    %v1382 = vsel %vm1374, %v1378, %v1370
    %v1383 = vsel %vm1375, %v1379, %v1371
    %v1384 = vsel %vm1376, %v1380, %v1372
    %v1385 = vsel %vm1377, %v1381, %v1373
    %v1386 = vmul.f32 %v1290, 0.5
    %v1387 = vmul.f32 %v1291, 0.5
    %v1388 = vmul.f32 %v1292, 0.5
    %v1389 = vmul.f32 %v1293, 0.5
    %v1390 = vadd.f32 %v1382, 1.0
    %v1391 = vadd.f32 %v1383, 1.0
    %v1392 = vadd.f32 %v1384, 1.0
    %v1393 = vadd.f32 %v1385, 1.0
    %v1394 = vmul.f32 %v1386, %v1390
    %v1395 = vmul.f32 %v1387, %v1391
    %v1396 = vmul.f32 %v1388, %v1392
    %v1397 = vmul.f32 %v1389, %v1393
    %v1398 = vpack.c.bf16 %v1395, %v1394
    %v1399 = vpack.c.bf16 %v1397, %v1396
    %v1400 = vld [vmem:[%s8] sm:$0xff]
    %v1401 = vld [vmem:[%s8 + $0x8] sm:$0xf]
    %v1402 = vld [vmem:[%s8 + $0xc] sm:$0xff]
    %v1403 = vld [vmem:[%s8 + $0x14] sm:$0xf]
    %v1404 = vld [vmem:[%s8 + $0x18] sm:$0xff]
    %v1405 = vld [vmem:[%s8 + $0x20] sm:$0xf]
    %v1406 = vld [vmem:[%s8 + $0x24] sm:$0xff]
    %v1407 = vld [vmem:[%s8 + $0x2c] sm:$0xf]
    %v1408 = vld [vmem:[%s8 + $0x30] sm:$0xff]
    %v1409 = vld [vmem:[%s8 + $0x38] sm:$0xf]
    %v1410 = vld [vmem:[%s8 + $0x3c] sm:$0xff]
    %v1411 = vld [vmem:[%s8 + $0x44] sm:$0xf]
    %v1412 = vld [vmem:[%s8 + $0x48] sm:$0xff]
    %v1413 = vld [vmem:[%s8 + $0x50] sm:$0xf]
    %v1414 = vld [vmem:[%s8 + $0x54] sm:$0xff]
    %v1415 = vld [vmem:[%s8 + $0x5c] sm:$0xf]
    %v1416 = vld [vmem:[%s8 + $0x60] sm:$0xff]
    %v1417 = vld [vmem:[%s8 + $0x68] sm:$0xf]
    %v1418 = vld [vmem:[%s8 + $0x6c] sm:$0xff]
    %v1419 = vld [vmem:[%s8 + $0x74] sm:$0xf]
    %v1420 = vld [vmem:[%s8 + $0x78] sm:$0xff]
    %v1421 = vld [vmem:[%s8 + $0x80] sm:$0xf]
    %v1422 = vld [vmem:[%s8 + $0x84] sm:$0xff]
    %v1423 = vld [vmem:[%s8 + $0x8c] sm:$0xf]
    %v1424 = vld [vmem:[%s8 + $0x90] sm:$0xff]
    %v1425 = vld [vmem:[%s8 + $0x98] sm:$0xf]
    %v1426 = vld [vmem:[%s8 + $0x9c] sm:$0xff]
    %v1427 = vld [vmem:[%s8 + $0xa4] sm:$0xf]
    %v1428 = vld [vmem:[%s8 + $0xa8] sm:$0xff]
    %v1429 = vld [vmem:[%s8 + $0xb0] sm:$0xf]
    %v1430 = vld [vmem:[%s8 + $0xb4] sm:$0xff]
    %v1431 = vld [vmem:[%s8 + $0xbc] sm:$0xf]
    %v1464 = vunpack.c.l.b16 %v1400
    %v1465 = vunpack.c.h.b16 %v1400
    %v1466 = vunpack.c.l.b16 %v1401
    %v1467 = vunpack.c.l.b16 %v1402
    %v1468 = vunpack.c.h.b16 %v1402
    %v1469 = vunpack.c.l.b16 %v1403
    %v1470 = vunpack.c.l.b16 %v1404
    %v1471 = vunpack.c.h.b16 %v1404
    %v1472 = vunpack.c.l.b16 %v1405
    %v1473 = vunpack.c.l.b16 %v1406
    %v1474 = vunpack.c.h.b16 %v1406
    %v1475 = vunpack.c.l.b16 %v1407
    %v1476 = vunpack.c.l.b16 %v1408
    %v1477 = vunpack.c.h.b16 %v1408
    %v1478 = vunpack.c.l.b16 %v1409
    %v1479 = vunpack.c.l.b16 %v1410
    %v1480 = vunpack.c.h.b16 %v1410
    %v1481 = vunpack.c.l.b16 %v1411
    %v1482 = vunpack.c.l.b16 %v1412
    %v1483 = vunpack.c.h.b16 %v1412
    %v1484 = vunpack.c.l.b16 %v1413
    %v1485 = vunpack.c.l.b16 %v1414
    %v1486 = vunpack.c.h.b16 %v1414
    %v1487 = vunpack.c.l.b16 %v1415
    %v1488 = vunpack.c.l.b16 %v1416
    %v1489 = vunpack.c.h.b16 %v1416
    %v1490 = vunpack.c.l.b16 %v1417
    %v1491 = vunpack.c.l.b16 %v1418
    %v1492 = vunpack.c.h.b16 %v1418
    %v1493 = vunpack.c.l.b16 %v1419
    %v1494 = vunpack.c.l.b16 %v1420
    %v1495 = vunpack.c.h.b16 %v1420
    %v1496 = vunpack.c.l.b16 %v1421
    %v1497 = vunpack.c.l.b16 %v1422
    %v1498 = vunpack.c.h.b16 %v1422
    %v1499 = vunpack.c.l.b16 %v1423
    %v1500 = vunpack.c.l.b16 %v1424
    %v1501 = vunpack.c.h.b16 %v1424
    %v1502 = vunpack.c.l.b16 %v1425
    %v1503 = vunpack.c.l.b16 %v1426
    %v1504 = vunpack.c.h.b16 %v1426
    %v1505 = vunpack.c.l.b16 %v1427
    %v1506 = vunpack.c.l.b16 %v1428
    %v1507 = vunpack.c.h.b16 %v1428
    %v1508 = vunpack.c.l.b16 %v1429
    %v1509 = vunpack.c.l.b16 %v1430
    %v1510 = vunpack.c.h.b16 %v1430
    %v1511 = vunpack.c.l.b16 %v1431
    %v1512 = vpack.c.b16 %v1467, %v1464
    %v1513 = vpack.c.b16 %v1468, %v1465
    %v1514 = vpack.c.b16 %v1469, %v1466
    %v1515 = vpack.c.b16 %v1473, %v1470
    %v1516 = vpack.c.b16 %v1474, %v1471
    %v1517 = vpack.c.b16 %v1475, %v1472
    %v1518 = vpack.c.b16 %v1479, %v1476
    %v1519 = vpack.c.b16 %v1480, %v1477
    %v1520 = vpack.c.b16 %v1481, %v1478
    %v1521 = vpack.c.b16 %v1485, %v1482
    %v1522 = vpack.c.b16 %v1486, %v1483
    %v1523 = vpack.c.b16 %v1487, %v1484
    %v1524 = vpack.c.b16 %v1491, %v1488
    %v1525 = vpack.c.b16 %v1492, %v1489
    %v1526 = vpack.c.b16 %v1493, %v1490
    %v1527 = vpack.c.b16 %v1497, %v1494
    %v1528 = vpack.c.b16 %v1498, %v1495
    %v1529 = vpack.c.b16 %v1499, %v1496
    %v1530 = vpack.c.b16 %v1503, %v1500
    %v1531 = vpack.c.b16 %v1504, %v1501
    %v1532 = vpack.c.b16 %v1505, %v1502
    %v1533 = vpack.c.b16 %v1509, %v1506
    %v1534 = vpack.c.b16 %v1510, %v1507
    %v1535 = vpack.c.b16 %v1511, %v1508
    %1560 = vmatprep.subr.bf16.mxu0 %v1513
    %1561 = vmatpush1.bf16.msra.mxu0 %v1512
    %1562 = vmatprep.subr.bf16.mxu0 %v1516
    %1563 = vmatpush1.bf16.msra.mxu0 %v1515
    %1564 = vmatprep.subr.bf16.mxu0 %v1519
    %1565 = vmatpush1.bf16.msra.mxu0 %v1518
    %1566 = vmatprep.subr.bf16.mxu0 %v1522
    %1567 = vmatpush1.bf16.msra.mxu0 %v1521
    %1568 = vmatprep.subr.bf16.mxu0 %v1525
    %1569 = vmatpush1.bf16.msra.mxu0 %v1524
    %1570 = vmatprep.subr.bf16.mxu0 %v1528
    %1571 = vmatpush1.bf16.msra.mxu0 %v1527
    %1572 = vmatprep.subr.bf16.mxu0 %v1531
    %1573 = vmatpush1.bf16.msra.mxu0 %v1530
    %1574 = vmatprep.subr.bf16.mxu0 %v1534
    %1575 = vmatpush1.bf16.msra.mxu0 %v1533
    %1576 = vmatprep.subr.bf16.mxu0 0
    %1577 = vmatpush1.bf16.msra.mxu0 0
    %1578 = vmatprep.subr.bf16.mxu0 0
    %1579 = vmatpush1.bf16.msra.mxu0 0
    %1580 = vmatprep.subr.bf16.mxu0 0
    %1581 = vmatpush1.bf16.msra.mxu0 0
    %1582 = vmatprep.subr.bf16.mxu0 0
    %1583 = vmatpush1.bf16.msra.mxu0 0
    %1584 = vmatprep.subr.bf16.mxu0 0
    %1585 = vmatpush1.bf16.msra.mxu0 0
    %1586 = vmatprep.subr.bf16.mxu0 0
    %1587 = vmatpush1.bf16.msra.mxu0 0
    %1588 = vmatprep.subr.bf16.mxu0 0
    %1589 = vmatpush1.bf16.msra.mxu0 0
    %1590 = vmatprep.subr.bf16.mxu0 0
    %1591 = vmatpush1.bf16.msra.mxu0 0
    %1592 = vmatprep.mubr.bf16.mxu0 0
    %1593 = vmatmul.mubr.bf16.gmra.mrb[0].mxu0 %v1398
    %v1594 = vpop.f32.mrb[0].mxu0
    %v1595 = vadd.f32 0.0, %v1594
    %v1596 = vpop.f32.mrb[0].mxu0
    %v1597 = vadd.f32 0.0, %v1596
    %v1598 = vpop.f32.mrb[0].mxu0
    %v1599 = vadd.f32 0.0, %v1598
    %v1600 = vpop.f32.mrb[0].mxu0
    %v1601 = vadd.f32 0.0, %v1600
    %1602 = vmatprep.mubr.bf16.mxu0 0
    %1603 = vmatmul.mubr.bf16.gmra.mrb[0].mxu0 %v1399
    %v1604 = vpop.f32.mrb[0].mxu0
    %v1605 = vadd.f32 0.0, %v1604
    %v1606 = vpop.f32.mrb[0].mxu0
    %v1607 = vadd.f32 0.0, %v1606
    %v1608 = vpop.f32.mrb[0].mxu0
    %v1609 = vadd.f32 0.0, %v1608
    %v1610 = vpop.f32.mrb[0].mxu0
    %v1611 = vadd.f32 0.0, %v1610
    %1612 = vdwg.mxu0
    %1613 = vmatprep.subr.bf16.mxu0 0
    %1614 = vmatpush1.bf16.msra.mxu0 %v1514
    %1615 = vmatprep.subr.bf16.mxu0 0
    %1616 = vmatpush1.bf16.msra.mxu0 %v1517
    %1617 = vmatprep.subr.bf16.mxu0 0
    %1618 = vmatpush1.bf16.msra.mxu0 %v1520
    %1619 = vmatprep.subr.bf16.mxu0 0
    %1620 = vmatpush1.bf16.msra.mxu0 %v1523
    %1621 = vmatprep.subr.bf16.mxu0 0
    %1622 = vmatpush1.bf16.msra.mxu0 %v1526
    %1623 = vmatprep.subr.bf16.mxu0 0
    %1624 = vmatpush1.bf16.msra.mxu0 %v1529
    %1625 = vmatprep.subr.bf16.mxu0 0
    %1626 = vmatpush1.bf16.msra.mxu0 %v1532
    %1627 = vmatprep.subr.bf16.mxu0 0
    %1628 = vmatpush1.bf16.msra.mxu0 %v1535
    %1629 = vmatprep.subr.bf16.mxu0 0
    %1630 = vmatpush1.bf16.msra.mxu0 0
    %1631 = vmatprep.subr.bf16.mxu0 0
    %1632 = vmatpush1.bf16.msra.mxu0 0
    %1633 = vmatprep.subr.bf16.mxu0 0
    %1634 = vmatpush1.bf16.msra.mxu0 0
    %1635 = vmatprep.subr.bf16.mxu0 0
    %1636 = vmatpush1.bf16.msra.mxu0 0
    %1637 = vmatprep.subr.bf16.mxu0 0
    %1638 = vmatpush1.bf16.msra.mxu0 0
    %1639 = vmatprep.subr.bf16.mxu0 0
    %1640 = vmatpush1.bf16.msra.mxu0 0
    %1641 = vmatprep.subr.bf16.mxu0 0
    %1642 = vmatpush1.bf16.msra.mxu0 0
    %1643 = vmatprep.subr.bf16.mxu0 0
    %1644 = vmatpush1.bf16.msra.mxu0 0
    %1645 = vmatprep.mubr.bf16.mxu0 0
    %1646 = vmatmul.mubr.bf16.gmra.mrb[0].mxu0 %v1398
    %v1647 = vpop.f32.mrb[0].mxu0
    %v1648 = vadd.f32 0.0, %v1647
    %v1649 = vpop.f32.mrb[0].mxu0
    %v1650 = vpop.f32.mrb[0].mxu0
    %v1651 = vadd.f32 0.0, %v1650
    %v1652 = vpop.f32.mrb[0].mxu0
    %1653 = vmatprep.mubr.bf16.mxu0 0
    %1654 = vmatmul.mubr.bf16.gmra.mrb[0].mxu0 %v1399
    %v1655 = vpop.f32.mrb[0].mxu0
    %v1656 = vadd.f32 0.0, %v1655
    %v1657 = vpop.f32.mrb[0].mxu0
    %v1658 = vpop.f32.mrb[0].mxu0
    %v1659 = vadd.f32 0.0, %v1658
    %v1660 = vpop.f32.mrb[0].mxu0
    %1661 = vdwg.mxu0
    %v1662 = vld [vmem:[%s7] sm:$0xff]
    %v1663 = vld [vmem:[%s7 + $0x8] sm:$0xff]
    %s1664 = scalar_lea.vmem %s7, 16
    %v1665 = vld [vmem:[%s1664] sm:$0xff]
    %v1666 = vld [vmem:[%s1664 + $0x8] sm:$0xff]
    %v1668 = vsel %vm1079, %v1665, 0
    %v1671 = vsel %vm1079, %v1666, 0
    %1673 = vmatprep.subr.mxu0 0.0
    %1674 = vmatpush1.msra.mxu0 %v1597
    %1675 = vmatprep.subr.mxu0 0.0
    %1676 = vmatpush1.msra.mxu0 %v1601
    %1677 = vmatprep.subr.mxu0 0.0
    %1678 = vmatpush1.msra.mxu0 %v1607
    %1679 = vmatprep.subr.mxu0 0.0
    %1680 = vmatpush1.msra.mxu0 %v1611
    %1681 = vmatprep.subr.mxu0 0.0
    %1682 = vmatpush1.msra.mxu0 0.0
    %1683 = vmatprep.subr.mxu0 0.0
    %1684 = vmatpush1.msra.mxu0 0.0
    %1685 = vmatprep.subr.mxu0 0.0
    %1686 = vmatpush1.msra.mxu0 0.0
    %1687 = vmatprep.subr.mxu0 0.0
    %1688 = vmatpush1.msra.mxu0 0.0
    %1689 = vmatprep.subr.mxu0 0.0
    %1690 = vmatpush1.msra.mxu0 0.0
    %1691 = vmatprep.subr.mxu0 0.0
    %1692 = vmatpush1.msra.mxu0 0.0
    %1693 = vmatprep.subr.mxu0 0.0
    %1694 = vmatpush1.msra.mxu0 0.0
    %1695 = vmatprep.subr.mxu0 0.0
    %1696 = vmatpush1.msra.mxu0 0.0
    %1697 = vmatprep.subr.mxu0 0.0
    %1698 = vmatpush1.msra.mxu0 0.0
    %1699 = vmatprep.subr.mxu0 0.0
    %1700 = vmatpush1.msra.mxu0 0.0
    %1701 = vmatprep.subr.mxu0 0.0
    %1702 = vmatpush1.msra.mxu0 0.0
    %1703 = vmatprep.subr.mxu0 0.0
    %1704 = vmatpush1.msra.mxu0 0.0
    %1705 = vmatprep.subr.mxu0 0.0
    %1706 = vmatpush1.msra.mxu0 0.0
    %1707 = vmatprep.subr.mxu0 0.0
    %1708 = vmatpush1.msra.mxu0 0.0
    %1709 = vmatprep.subr.mxu0 0.0
    %1710 = vmatpush1.msra.mxu0 0.0
    %1711 = vmatprep.subr.mxu0 0.0
    %1712 = vmatpush1.msra.mxu0 0.0
    %1713 = vmatprep.subr.mxu0 0.0
    %1714 = vmatpush1.msra.mxu0 0.0
    %1715 = vmatprep.subr.mxu0 0.0
    %1716 = vmatpush1.msra.mxu0 0.0
    %1717 = vmatprep.subr.mxu0 0.0
    %1718 = vmatpush1.msra.mxu0 0.0
    %1719 = vmatprep.subr.mxu0 0.0
    %1720 = vmatpush1.msra.mxu0 0.0
    %1721 = vmatprep.subr.mxu0 0.0
    %1722 = vmatpush1.msra.mxu0 0.0
    %1723 = vmatprep.subr.mxu0 0.0
    %1724 = vmatpush1.msra.mxu0 0.0
    %1725 = vmatprep.subr.mxu0 0.0
    %1726 = vmatpush1.msra.mxu0 0.0
    %1727 = vmatprep.subr.mxu0 0.0
    %1728 = vmatpush1.msra.mxu0 0.0
    %1729 = vmatprep.subr.mxu0 0.0
    %1730 = vmatpush1.msra.mxu0 0.0
    %1731 = vmatprep.subr.mxu0 0.0
    %1732 = vmatpush1.msra.mxu0 0.0
    %1733 = vmatprep.subr.mxu0 0.0
    %1734 = vmatpush1.msra.mxu0 0.0
    %1735 = vmatprep.subr.mxu0 0.0
    %1736 = vmatpush1.msra.mxu0 0.0
    %1737 = vmatprep.mubr.f32.mxu0 0.0
    %1738 = vmatmul.mubr.f32.gmra.mrb[0].mxu0 %v1668
    %v1739 = vpop.f32.mrb[0].mxu0
    %v1740 = vadd.f32 0.0, %v1739
    %v1741 = vpop.f32.mrb[0].mxu0
    %1742 = vmatprep.mubr.f32.mxu0 0.0
    %1743 = vmatmul.mubr.f32.gmra.mrb[0].mxu0 %v1671
    %v1744 = vpop.f32.mrb[0].mxu0
    %v1745 = vadd.f32 0.0, %v1744
    %v1746 = vpop.f32.mrb[0].mxu0
    %1747 = vdwg.mxu0
    %v1749 = vsel %vm1079, %v1662, 0
    %v1752 = vsel %vm1079, %v1663, 0
    %1754 = vmatprep.subr.mxu0 0.0
    %1755 = vmatpush1.msra.mxu0 %v1595
    %1756 = vmatprep.subr.mxu0 0.0
    %1757 = vmatpush1.msra.mxu0 %v1599
    %1758 = vmatprep.subr.mxu0 0.0
    %1759 = vmatpush1.msra.mxu0 %v1605
    %1760 = vmatprep.subr.mxu0 0.0
    %1761 = vmatpush1.msra.mxu0 %v1609
    %1762 = vmatprep.subr.mxu0 0.0
    %1763 = vmatpush1.msra.mxu0 0.0
    %1764 = vmatprep.subr.mxu0 0.0
    %1765 = vmatpush1.msra.mxu0 0.0
    %1766 = vmatprep.subr.mxu0 0.0
    %1767 = vmatpush1.msra.mxu0 0.0
    %1768 = vmatprep.subr.mxu0 0.0
    %1769 = vmatpush1.msra.mxu0 0.0
    %1770 = vmatprep.subr.mxu0 0.0
    %1771 = vmatpush1.msra.mxu0 0.0
    %1772 = vmatprep.subr.mxu0 0.0
    %1773 = vmatpush1.msra.mxu0 0.0
    %1774 = vmatprep.subr.mxu0 0.0
    %1775 = vmatpush1.msra.mxu0 0.0
    %1776 = vmatprep.subr.mxu0 0.0
    %1777 = vmatpush1.msra.mxu0 0.0
    %1778 = vmatprep.subr.mxu0 0.0
    %1779 = vmatpush1.msra.mxu0 0.0
    %1780 = vmatprep.subr.mxu0 0.0
    %1781 = vmatpush1.msra.mxu0 0.0
    %1782 = vmatprep.subr.mxu0 0.0
    %1783 = vmatpush1.msra.mxu0 0.0
    %1784 = vmatprep.subr.mxu0 0.0
    %1785 = vmatpush1.msra.mxu0 0.0
    %1786 = vmatprep.subr.mxu0 0.0
    %1787 = vmatpush1.msra.mxu0 0.0
    %1788 = vmatprep.subr.mxu0 0.0
    %1789 = vmatpush1.msra.mxu0 0.0
    %1790 = vmatprep.subr.mxu0 0.0
    %1791 = vmatpush1.msra.mxu0 0.0
    %1792 = vmatprep.subr.mxu0 0.0
    %1793 = vmatpush1.msra.mxu0 0.0
    %1794 = vmatprep.subr.mxu0 0.0
    %1795 = vmatpush1.msra.mxu0 0.0
    %1796 = vmatprep.subr.mxu0 0.0
    %1797 = vmatpush1.msra.mxu0 0.0
    %1798 = vmatprep.subr.mxu0 0.0
    %1799 = vmatpush1.msra.mxu0 0.0
    %1800 = vmatprep.subr.mxu0 0.0
    %1801 = vmatpush1.msra.mxu0 0.0
    %1802 = vmatprep.subr.mxu0 0.0
    %1803 = vmatpush1.msra.mxu0 0.0
    %1804 = vmatprep.subr.mxu0 0.0
    %1805 = vmatpush1.msra.mxu0 0.0
    %1806 = vmatprep.subr.mxu0 0.0
    %1807 = vmatpush1.msra.mxu0 0.0
    %1808 = vmatprep.subr.mxu0 0.0
    %1809 = vmatpush1.msra.mxu0 0.0
    %1810 = vmatprep.subr.mxu0 0.0
    %1811 = vmatpush1.msra.mxu0 0.0
    %1812 = vmatprep.subr.mxu0 0.0
    %1813 = vmatpush1.msra.mxu0 0.0
    %1814 = vmatprep.subr.mxu0 0.0
    %1815 = vmatpush1.msra.mxu0 0.0
    %1816 = vmatprep.subr.mxu0 0.0
    %1817 = vmatpush1.msra.mxu0 0.0
    %1818 = vmatprep.mubr.f32.mxu0 0.0
    %1819 = vmatmul.mubr.f32.gmra.mrb[0].mxu0 %v1749
    %v1820 = vpop.f32.mrb[0].mxu0
    %v1821 = vadd.f32 %v1740, %v1820
    %v1822 = vpop.f32.mrb[0].mxu0
    %1823 = vmatprep.mubr.f32.mxu0 0.0
    %1824 = vmatmul.mubr.f32.gmra.mrb[0].mxu0 %v1752
    %v1825 = vpop.f32.mrb[0].mxu0
    %v1826 = vadd.f32 %v1745, %v1825
    %v1827 = vpop.f32.mrb[0].mxu0
    %1828 = vdwg.mxu0
    %s1829 = scalar_lea.vmem %s7, 32
    %v1830 = vld [vmem:[%s1829] sm:$0xff]
    %v1831 = vld [vmem:[%s1829 + $0x8] sm:$0xff]
    %v1833 = vsel %vm1079, %v1830, 0
    %v1836 = vsel %vm1079, %v1831, 0
    %1838 = vmatprep.subr.mxu0 0.0
    %1839 = vmatpush1.msra.mxu0 %v1648
    %1840 = vmatprep.subr.mxu0 0.0
    %1841 = vmatpush1.msra.mxu0 %v1651
    %1842 = vmatprep.subr.mxu0 0.0
    %1843 = vmatpush1.msra.mxu0 %v1656
    %1844 = vmatprep.subr.mxu0 0.0
    %1845 = vmatpush1.msra.mxu0 %v1659
    %1846 = vmatprep.subr.mxu0 0.0
    %1847 = vmatpush1.msra.mxu0 0.0
    %1848 = vmatprep.subr.mxu0 0.0
    %1849 = vmatpush1.msra.mxu0 0.0
    %1850 = vmatprep.subr.mxu0 0.0
    %1851 = vmatpush1.msra.mxu0 0.0
    %1852 = vmatprep.subr.mxu0 0.0
    %1853 = vmatpush1.msra.mxu0 0.0
    %1854 = vmatprep.subr.mxu0 0.0
    %1855 = vmatpush1.msra.mxu0 0.0
    %1856 = vmatprep.subr.mxu0 0.0
    %1857 = vmatpush1.msra.mxu0 0.0
    %1858 = vmatprep.subr.mxu0 0.0
    %1859 = vmatpush1.msra.mxu0 0.0
    %1860 = vmatprep.subr.mxu0 0.0
    %1861 = vmatpush1.msra.mxu0 0.0
    %1862 = vmatprep.subr.mxu0 0.0
    %1863 = vmatpush1.msra.mxu0 0.0
    %1864 = vmatprep.subr.mxu0 0.0
    %1865 = vmatpush1.msra.mxu0 0.0
    %1866 = vmatprep.subr.mxu0 0.0
    %1867 = vmatpush1.msra.mxu0 0.0
    %1868 = vmatprep.subr.mxu0 0.0
    %1869 = vmatpush1.msra.mxu0 0.0
    %1870 = vmatprep.subr.mxu0 0.0
    %1871 = vmatpush1.msra.mxu0 0.0
    %1872 = vmatprep.subr.mxu0 0.0
    %1873 = vmatpush1.msra.mxu0 0.0
    %1874 = vmatprep.subr.mxu0 0.0
    %1875 = vmatpush1.msra.mxu0 0.0
    %1876 = vmatprep.subr.mxu0 0.0
    %1877 = vmatpush1.msra.mxu0 0.0
    %1878 = vmatprep.subr.mxu0 0.0
    %1879 = vmatpush1.msra.mxu0 0.0
    %1880 = vmatprep.subr.mxu0 0.0
    %1881 = vmatpush1.msra.mxu0 0.0
    %1882 = vmatprep.subr.mxu0 0.0
    %1883 = vmatpush1.msra.mxu0 0.0
    %1884 = vmatprep.subr.mxu0 0.0
    %1885 = vmatpush1.msra.mxu0 0.0
    %1886 = vmatprep.subr.mxu0 0.0
    %1887 = vmatpush1.msra.mxu0 0.0
    %1888 = vmatprep.subr.mxu0 0.0
    %1889 = vmatpush1.msra.mxu0 0.0
    %1890 = vmatprep.subr.mxu0 0.0
    %1891 = vmatpush1.msra.mxu0 0.0
    %1892 = vmatprep.subr.mxu0 0.0
    %1893 = vmatpush1.msra.mxu0 0.0
    %1894 = vmatprep.subr.mxu0 0.0
    %1895 = vmatpush1.msra.mxu0 0.0
    %1896 = vmatprep.subr.mxu0 0.0
    %1897 = vmatpush1.msra.mxu0 0.0
    %1898 = vmatprep.subr.mxu0 0.0
    %1899 = vmatpush1.msra.mxu0 0.0
    %1900 = vmatprep.subr.mxu0 0.0
    %1901 = vmatpush1.msra.mxu0 0.0
    %1902 = vmatprep.mubr.f32.mxu0 0.0
    %1903 = vmatmul.mubr.f32.gmra.mrb[0].mxu0 %v1833
    %v1904 = vpop.f32.mrb[0].mxu0
    %v1905 = vadd.f32 0.0, %v1904
    %v1906 = vpop.f32.mrb[0].mxu0
    %1907 = vmatprep.mubr.f32.mxu0 0.0
    %1908 = vmatmul.mubr.f32.gmra.mrb[0].mxu0 %v1836
    %v1909 = vpop.f32.mrb[0].mxu0
    %v1910 = vadd.f32 0.0, %v1909
    %v1911 = vpop.f32.mrb[0].mxu0
    %1912 = vdwg.mxu0
    %v1913 = vadd.f32 %v1821, %v1905
    %v1914 = vadd.f32 %v1826, %v1910
    %v1915 = vld [vmem:[#allocation3] sm:$0x1]
    %v1917 = vlaneseq
    %v1918 = vshrl.u32 %v1917, 7
    %v1919 = vsub.s32 0, %v1918
    %v1920 = vrot.slane %v1915, %v1919
    %v1922 = vadd.f32 %v1913, %v1920
    %v1923 = vadd.f32 %v1914, %v1920
    %v1924 = vmul.f32 %v1922, 0.70710677
    %v1925 = vmul.f32 %v1923, 0.70710677
    %v1926 = vand.u32 2147483647, %v1924
    %v1927 = vand.u32 2147483647, %v1925
    %v1928 = vmul.f32 %v1926, 0.3275911
    %v1929 = vmul.f32 %v1927, 0.3275911
    %v1930 = vadd.f32 %v1928, 1.0
    %v1931 = vadd.f32 %v1929, 1.0
    %v1932 = vrcp.pop %v1930
    %v1933 = vrcp.pop %v1931
    %v1934 = vmul.f32 %v1932, 1.0614054
    %v1935 = vmul.f32 %v1933, 1.0614054
    %v1936 = vadd.f32 %v1934, -1.4531521
    %v1937 = vadd.f32 %v1935, -1.4531521
    %v1938 = vmul.f32 %v1932, %v1936
    %v1939 = vmul.f32 %v1933, %v1937
    %v1940 = vadd.f32 %v1938, 1.4214138
    %v1941 = vadd.f32 %v1939, 1.4214138
    %v1942 = vmul.f32 %v1932, %v1940
    %v1943 = vmul.f32 %v1933, %v1941
    %v1944 = vadd.f32 %v1942, -0.28449672
    %v1945 = vadd.f32 %v1943, -0.28449672
    %v1946 = vmul.f32 %v1932, %v1944
    %v1947 = vmul.f32 %v1933, %v1945
    %v1948 = vadd.f32 %v1946, 0.2548296
    %v1949 = vadd.f32 %v1947, 0.2548296
    %v1950 = vmul.f32 %v1932, %v1948
    %v1951 = vmul.f32 %v1933, %v1949
    %v1952 = vsub.f32 0.0, %v1926
    %v1953 = vsub.f32 0.0, %v1927
    %v1954 = vmul.f32 %v1952, %v1926
    %v1955 = vmul.f32 %v1953, %v1927
    %v1956 = vmul.f32 %v1954, 1.442695
    %v1957 = vpow.pop %v1956
    %v1958 = vmul.f32 %v1955, 1.442695
    %v1959 = vpow.pop %v1958
    %v1960 = vmul.f32 %v1950, %v1957
    %v1961 = vmul.f32 %v1951, %v1959
    %v1962 = vsub.f32 1.0, %v1960
    %v1963 = vsub.f32 1.0, %v1961
    %vm1964 = vcmp.lt.f32.partialorder %v1924, 0.0
    %vm1965 = vcmp.lt.f32.partialorder %v1925, 0.0
    %v1966 = vsub.f32 0.0, %v1962
    %v1967 = vsub.f32 0.0, %v1963
    %v1968 = vsel %vm1964, %v1966, %v1962
    %v1969 = vsel %vm1965, %v1967, %v1963
    %v1970 = vmul.f32 %v1922, 0.5
    %v1971 = vmul.f32 %v1923, 0.5
    %v1972 = vadd.f32 %v1968, 1.0
    %v1973 = vadd.f32 %v1969, 1.0
    %v1974 = vmul.f32 %v1970, %v1972
    %v1975 = vmul.f32 %v1971, %v1973
    %v1976 = vpack.c.bf16 %v1975, %v1974
    %v1977 = vld [vmem:[%s11] sm:$0xff]
    %v1978 = vld [vmem:[%s11 + $0x8] sm:$0xf]
    %v1979 = vld [vmem:[%s11 + $0xc] sm:$0xff]
    %v1980 = vld [vmem:[%s11 + $0x14] sm:$0xf]
    %v1981 = vld [vmem:[%s11 + $0x18] sm:$0xff]
    %v1982 = vld [vmem:[%s11 + $0x20] sm:$0xf]
    %v1983 = vld [vmem:[%s11 + $0x24] sm:$0xff]
    %v1984 = vld [vmem:[%s11 + $0x2c] sm:$0xf]
    %v1985 = vld [vmem:[%s11 + $0x30] sm:$0xff]
    %v1986 = vld [vmem:[%s11 + $0x38] sm:$0xf]
    %v1987 = vld [vmem:[%s11 + $0x3c] sm:$0xff]
    %v1988 = vld [vmem:[%s11 + $0x44] sm:$0xf]
    %v1989 = vld [vmem:[%s11 + $0x48] sm:$0xff]
    %v1990 = vld [vmem:[%s11 + $0x50] sm:$0xf]
    %v1991 = vld [vmem:[%s11 + $0x54] sm:$0xff]
    %v1992 = vld [vmem:[%s11 + $0x5c] sm:$0xf]
    %v1993 = vld [vmem:[%s11 + $0x60] sm:$0xff]
    %v1994 = vld [vmem:[%s11 + $0x68] sm:$0xf]
    %v1995 = vld [vmem:[%s11 + $0x6c] sm:$0xff]
    %v1996 = vld [vmem:[%s11 + $0x74] sm:$0xf]
    %v1997 = vld [vmem:[%s11 + $0x78] sm:$0xff]
    %v1998 = vld [vmem:[%s11 + $0x80] sm:$0xf]
    %v1999 = vld [vmem:[%s11 + $0x84] sm:$0xff]
    %v2000 = vld [vmem:[%s11 + $0x8c] sm:$0xf]
    %v2001 = vld [vmem:[%s11 + $0x90] sm:$0xff]
    %v2002 = vld [vmem:[%s11 + $0x98] sm:$0xf]
    %v2003 = vld [vmem:[%s11 + $0x9c] sm:$0xff]
    %v2004 = vld [vmem:[%s11 + $0xa4] sm:$0xf]
    %v2005 = vld [vmem:[%s11 + $0xa8] sm:$0xff]
    %v2006 = vld [vmem:[%s11 + $0xb0] sm:$0xf]
    %v2007 = vld [vmem:[%s11 + $0xb4] sm:$0xff]
    %v2008 = vld [vmem:[%s11 + $0xbc] sm:$0xf]
    %v2041 = vunpack.c.l.b16 %v1977
    %v2042 = vunpack.c.h.b16 %v1977
    %v2043 = vunpack.c.l.b16 %v1978
    %v2044 = vunpack.c.l.b16 %v1979
    %v2045 = vunpack.c.h.b16 %v1979
    %v2046 = vunpack.c.l.b16 %v1980
    %v2047 = vunpack.c.l.b16 %v1981
    %v2048 = vunpack.c.h.b16 %v1981
    %v2049 = vunpack.c.l.b16 %v1982
    %v2050 = vunpack.c.l.b16 %v1983
    %v2051 = vunpack.c.h.b16 %v1983
    %v2052 = vunpack.c.l.b16 %v1984
    %v2053 = vunpack.c.l.b16 %v1985
    %v2054 = vunpack.c.h.b16 %v1985
    %v2055 = vunpack.c.l.b16 %v1986
    %v2056 = vunpack.c.l.b16 %v1987
    %v2057 = vunpack.c.h.b16 %v1987
    %v2058 = vunpack.c.l.b16 %v1988
    %v2059 = vunpack.c.l.b16 %v1989
    %v2060 = vunpack.c.h.b16 %v1989
    %v2061 = vunpack.c.l.b16 %v1990
    %v2062 = vunpack.c.l.b16 %v1991
    %v2063 = vunpack.c.h.b16 %v1991
    %v2064 = vunpack.c.l.b16 %v1992
    %v2065 = vunpack.c.l.b16 %v1993
    %v2066 = vunpack.c.h.b16 %v1993
    %v2067 = vunpack.c.l.b16 %v1994
    %v2068 = vunpack.c.l.b16 %v1995
    %v2069 = vunpack.c.h.b16 %v1995
    %v2070 = vunpack.c.l.b16 %v1996
    %v2071 = vunpack.c.l.b16 %v1997
    %v2072 = vunpack.c.h.b16 %v1997
    %v2073 = vunpack.c.l.b16 %v1998
    %v2074 = vunpack.c.l.b16 %v1999
    %v2075 = vunpack.c.h.b16 %v1999
    %v2076 = vunpack.c.l.b16 %v2000
    %v2077 = vunpack.c.l.b16 %v2001
    %v2078 = vunpack.c.h.b16 %v2001
    %v2079 = vunpack.c.l.b16 %v2002
    %v2080 = vunpack.c.l.b16 %v2003
    %v2081 = vunpack.c.h.b16 %v2003
    %v2082 = vunpack.c.l.b16 %v2004
    %v2083 = vunpack.c.l.b16 %v2005
    %v2084 = vunpack.c.h.b16 %v2005
    %v2085 = vunpack.c.l.b16 %v2006
    %v2086 = vunpack.c.l.b16 %v2007
    %v2087 = vunpack.c.h.b16 %v2007
    %v2088 = vunpack.c.l.b16 %v2008
    %v2089 = vpack.c.b16 %v2044, %v2041
    %v2090 = vpack.c.b16 %v2045, %v2042
    %v2091 = vpack.c.b16 %v2046, %v2043
    %v2092 = vpack.c.b16 %v2050, %v2047
    %v2093 = vpack.c.b16 %v2051, %v2048
    %v2094 = vpack.c.b16 %v2052, %v2049
    %v2095 = vpack.c.b16 %v2056, %v2053
    %v2096 = vpack.c.b16 %v2057, %v2054
    %v2097 = vpack.c.b16 %v2058, %v2055
    %v2098 = vpack.c.b16 %v2062, %v2059
    %v2099 = vpack.c.b16 %v2063, %v2060
    %v2100 = vpack.c.b16 %v2064, %v2061
    %v2101 = vpack.c.b16 %v2068, %v2065
    %v2102 = vpack.c.b16 %v2069, %v2066
    %v2103 = vpack.c.b16 %v2070, %v2067
    %v2104 = vpack.c.b16 %v2074, %v2071
    %v2105 = vpack.c.b16 %v2075, %v2072
    %v2106 = vpack.c.b16 %v2076, %v2073
    %v2107 = vpack.c.b16 %v2080, %v2077
    %v2108 = vpack.c.b16 %v2081, %v2078
    %v2109 = vpack.c.b16 %v2082, %v2079
    %v2110 = vpack.c.b16 %v2086, %v2083
    %v2111 = vpack.c.b16 %v2087, %v2084
    %v2112 = vpack.c.b16 %v2088, %v2085
    %2137 = vmatprep.subr.bf16.mxu0 %v2090
    %2138 = vmatpush1.bf16.msra.mxu0 %v2089
    %2139 = vmatprep.subr.bf16.mxu0 %v2093
    %2140 = vmatpush1.bf16.msra.mxu0 %v2092
    %2141 = vmatprep.subr.bf16.mxu0 %v2096
    %2142 = vmatpush1.bf16.msra.mxu0 %v2095
    %2143 = vmatprep.subr.bf16.mxu0 %v2099
    %2144 = vmatpush1.bf16.msra.mxu0 %v2098
    %2145 = vmatprep.subr.bf16.mxu0 %v2102
    %2146 = vmatpush1.bf16.msra.mxu0 %v2101
    %2147 = vmatprep.subr.bf16.mxu0 %v2105
    %2148 = vmatpush1.bf16.msra.mxu0 %v2104
    %2149 = vmatprep.subr.bf16.mxu0 %v2108
    %2150 = vmatpush1.bf16.msra.mxu0 %v2107
    %2151 = vmatprep.subr.bf16.mxu0 %v2111
    %2152 = vmatpush1.bf16.msra.mxu0 %v2110
    %2153 = vmatprep.subr.bf16.mxu0 0
    %2154 = vmatpush1.bf16.msra.mxu0 0
    %2155 = vmatprep.subr.bf16.mxu0 0
    %2156 = vmatpush1.bf16.msra.mxu0 0
    %2157 = vmatprep.subr.bf16.mxu0 0
    %2158 = vmatpush1.bf16.msra.mxu0 0
    %2159 = vmatprep.subr.bf16.mxu0 0
    %2160 = vmatpush1.bf16.msra.mxu0 0
    %2161 = vmatprep.subr.bf16.mxu0 0
    %2162 = vmatpush1.bf16.msra.mxu0 0
    %2163 = vmatprep.subr.bf16.mxu0 0
    %2164 = vmatpush1.bf16.msra.mxu0 0
    %2165 = vmatprep.subr.bf16.mxu0 0
    %2166 = vmatpush1.bf16.msra.mxu0 0
    %2167 = vmatprep.subr.bf16.mxu0 0
    %2168 = vmatpush1.bf16.msra.mxu0 0
    %2169 = vmatprep.mubr.bf16.mxu0 0
    %2170 = vmatmul.mubr.bf16.gmra.mrb[0].mxu0 %v1976
    %v2171 = vpop.f32.mrb[0].mxu0
    %v2172 = vadd.f32 0.0, %v2171
    %v2173 = vpop.f32.mrb[0].mxu0
    %v2174 = vadd.f32 0.0, %v2173
    %v2175 = vpop.f32.mrb[0].mxu0
    %v2176 = vadd.f32 0.0, %v2175
    %v2177 = vpop.f32.mrb[0].mxu0
    %v2178 = vadd.f32 0.0, %v2177
    %2179 = vdwg.mxu0
    %2180 = vmatprep.subr.bf16.mxu0 0
    %2181 = vmatpush1.bf16.msra.mxu0 %v2091
    %2182 = vmatprep.subr.bf16.mxu0 0
    %2183 = vmatpush1.bf16.msra.mxu0 %v2094
    %2184 = vmatprep.subr.bf16.mxu0 0
    %2185 = vmatpush1.bf16.msra.mxu0 %v2097
    %2186 = vmatprep.subr.bf16.mxu0 0
    %2187 = vmatpush1.bf16.msra.mxu0 %v2100
    %2188 = vmatprep.subr.bf16.mxu0 0
    %2189 = vmatpush1.bf16.msra.mxu0 %v2103
    %2190 = vmatprep.subr.bf16.mxu0 0
    %2191 = vmatpush1.bf16.msra.mxu0 %v2106
    %2192 = vmatprep.subr.bf16.mxu0 0
    %2193 = vmatpush1.bf16.msra.mxu0 %v2109
    %2194 = vmatprep.subr.bf16.mxu0 0
    %2195 = vmatpush1.bf16.msra.mxu0 %v2112
    %2196 = vmatprep.subr.bf16.mxu0 0
    %2197 = vmatpush1.bf16.msra.mxu0 0
    %2198 = vmatprep.subr.bf16.mxu0 0
    %2199 = vmatpush1.bf16.msra.mxu0 0
    %2200 = vmatprep.subr.bf16.mxu0 0
    %2201 = vmatpush1.bf16.msra.mxu0 0
    %2202 = vmatprep.subr.bf16.mxu0 0
    %2203 = vmatpush1.bf16.msra.mxu0 0
    %2204 = vmatprep.subr.bf16.mxu0 0
    %2205 = vmatpush1.bf16.msra.mxu0 0
    %2206 = vmatprep.subr.bf16.mxu0 0
    %2207 = vmatpush1.bf16.msra.mxu0 0
    %2208 = vmatprep.subr.bf16.mxu0 0
    %2209 = vmatpush1.bf16.msra.mxu0 0
    %2210 = vmatprep.subr.bf16.mxu0 0
    %2211 = vmatpush1.bf16.msra.mxu0 0
    %2212 = vmatprep.mubr.bf16.mxu0 0
    %2213 = vmatmul.mubr.bf16.gmra.mrb[0].mxu0 %v1976
    %v2214 = vpop.f32.mrb[0].mxu0
    %v2215 = vadd.f32 0.0, %v2214
    %v2216 = vpop.f32.mrb[0].mxu0
    %v2217 = vpop.f32.mrb[0].mxu0
    %v2218 = vadd.f32 0.0, %v2217
    %v2219 = vpop.f32.mrb[0].mxu0
    %2220 = vdwg.mxu0
    %v2221 = vld [vmem:[%s10] sm:$0xff]
    %v2222 = vld [vmem:[%s10 + $0x8] sm:$0xff]
    %vm2223 = vcmask 130048
    %v2225 = vsel %vm2223, %v2221, 0
    %v2228 = vsel %vm2223, %v2222, 0
    %2230 = vmatprep.subr.mxu0 0.0
    %2231 = vmatpush1.msra.mxu0 %v2172
    %2232 = vmatprep.subr.mxu0 0.0
    %2233 = vmatpush1.msra.mxu0 %v2176
    %2234 = vmatprep.subr.mxu0 0.0
    %2235 = vmatpush1.msra.mxu0 0.0
    %2236 = vmatprep.subr.mxu0 0.0
    %2237 = vmatpush1.msra.mxu0 0.0
    %2238 = vmatprep.subr.mxu0 0.0
    %2239 = vmatpush1.msra.mxu0 0.0
    %2240 = vmatprep.subr.mxu0 0.0
    %2241 = vmatpush1.msra.mxu0 0.0
    %2242 = vmatprep.subr.mxu0 0.0
    %2243 = vmatpush1.msra.mxu0 0.0
    %2244 = vmatprep.subr.mxu0 0.0
    %2245 = vmatpush1.msra.mxu0 0.0
    %2246 = vmatprep.subr.mxu0 0.0
    %2247 = vmatpush1.msra.mxu0 0.0
    %2248 = vmatprep.subr.mxu0 0.0
    %2249 = vmatpush1.msra.mxu0 0.0
    %2250 = vmatprep.subr.mxu0 0.0
    %2251 = vmatpush1.msra.mxu0 0.0
    %2252 = vmatprep.subr.mxu0 0.0
    %2253 = vmatpush1.msra.mxu0 0.0
    %2254 = vmatprep.subr.mxu0 0.0
    %2255 = vmatpush1.msra.mxu0 0.0
    %2256 = vmatprep.subr.mxu0 0.0
    %2257 = vmatpush1.msra.mxu0 0.0
    %2258 = vmatprep.subr.mxu0 0.0
    %2259 = vmatpush1.msra.mxu0 0.0
    %2260 = vmatprep.subr.mxu0 0.0
    %2261 = vmatpush1.msra.mxu0 0.0
    %2262 = vmatprep.subr.mxu0 0.0
    %2263 = vmatpush1.msra.mxu0 0.0
    %2264 = vmatprep.subr.mxu0 0.0
    %2265 = vmatpush1.msra.mxu0 0.0
    %2266 = vmatprep.subr.mxu0 0.0
    %2267 = vmatpush1.msra.mxu0 0.0
    %2268 = vmatprep.subr.mxu0 0.0
    %2269 = vmatpush1.msra.mxu0 0.0
    %2270 = vmatprep.subr.mxu0 0.0
    %2271 = vmatpush1.msra.mxu0 0.0
    %2272 = vmatprep.subr.mxu0 0.0
    %2273 = vmatpush1.msra.mxu0 0.0
    %2274 = vmatprep.subr.mxu0 0.0
    %2275 = vmatpush1.msra.mxu0 0.0
    %2276 = vmatprep.subr.mxu0 0.0
    %2277 = vmatpush1.msra.mxu0 0.0
    %2278 = vmatprep.subr.mxu0 0.0
    %2279 = vmatpush1.msra.mxu0 0.0
    %2280 = vmatprep.subr.mxu0 0.0
    %2281 = vmatpush1.msra.mxu0 0.0
    %2282 = vmatprep.subr.mxu0 0.0
    %2283 = vmatpush1.msra.mxu0 0.0
    %2284 = vmatprep.subr.mxu0 0.0
    %2285 = vmatpush1.msra.mxu0 0.0
    %2286 = vmatprep.subr.mxu0 0.0
    %2287 = vmatpush1.msra.mxu0 0.0
    %2288 = vmatprep.subr.mxu0 0.0
    %2289 = vmatpush1.msra.mxu0 0.0
    %2290 = vmatprep.subr.mxu0 0.0
    %2291 = vmatpush1.msra.mxu0 0.0
    %2292 = vmatprep.subr.mxu0 0.0
    %2293 = vmatpush1.msra.mxu0 0.0
    %2294 = vmatprep.mubr.f32.mxu0 0.0
    %2295 = vmatmul.mubr.f32.gmra.mrb[0].mxu0 %v2225
    %v2296 = vpop.f32.mrb[0].mxu0
    %v2297 = vadd.f32 %v2174, %v2296
    %v2298 = vpop.f32.mrb[0].mxu0
    %2299 = vmatprep.mubr.f32.mxu0 0.0
    %2300 = vmatmul.mubr.f32.gmra.mrb[0].mxu0 %v2228
    %v2301 = vpop.f32.mrb[0].mxu0
    %v2302 = vadd.f32 %v2178, %v2301
    %v2303 = vpop.f32.mrb[0].mxu0
    %2304 = vdwg.mxu0
    %s2305 = scalar_lea.vmem %s10, 32
    %v2306 = vld [vmem:[%s2305] sm:$0xff]
    %v2307 = vld [vmem:[%s2305 + $0x8] sm:$0xff]
    %v2309 = vsel %vm2223, %v2306, 0
    %v2312 = vsel %vm2223, %v2307, 0
    %2314 = vmatprep.subr.mxu0 0.0
    %2315 = vmatpush1.msra.mxu0 %v2215
    %2316 = vmatprep.subr.mxu0 0.0
    %2317 = vmatpush1.msra.mxu0 %v2218
    %2318 = vmatprep.subr.mxu0 0.0
    %2319 = vmatpush1.msra.mxu0 0.0
    %2320 = vmatprep.subr.mxu0 0.0
    %2321 = vmatpush1.msra.mxu0 0.0
    %2322 = vmatprep.subr.mxu0 0.0
    %2323 = vmatpush1.msra.mxu0 0.0
    %2324 = vmatprep.subr.mxu0 0.0
    %2325 = vmatpush1.msra.mxu0 0.0
    %2326 = vmatprep.subr.mxu0 0.0
    %2327 = vmatpush1.msra.mxu0 0.0
    %2328 = vmatprep.subr.mxu0 0.0
    %2329 = vmatpush1.msra.mxu0 0.0
    %2330 = vmatprep.subr.mxu0 0.0
    %2331 = vmatpush1.msra.mxu0 0.0
    %2332 = vmatprep.subr.mxu0 0.0
    %2333 = vmatpush1.msra.mxu0 0.0
    %2334 = vmatprep.subr.mxu0 0.0
    %2335 = vmatpush1.msra.mxu0 0.0
    %2336 = vmatprep.subr.mxu0 0.0
    %2337 = vmatpush1.msra.mxu0 0.0
    %2338 = vmatprep.subr.mxu0 0.0
    %2339 = vmatpush1.msra.mxu0 0.0
    %2340 = vmatprep.subr.mxu0 0.0
    %2341 = vmatpush1.msra.mxu0 0.0
    %2342 = vmatprep.subr.mxu0 0.0
    %2343 = vmatpush1.msra.mxu0 0.0
    %2344 = vmatprep.subr.mxu0 0.0
    %2345 = vmatpush1.msra.mxu0 0.0
    %2346 = vmatprep.subr.mxu0 0.0
    %2347 = vmatpush1.msra.mxu0 0.0
    %2348 = vmatprep.subr.mxu0 0.0
    %2349 = vmatpush1.msra.mxu0 0.0
    %2350 = vmatprep.subr.mxu0 0.0
    %2351 = vmatpush1.msra.mxu0 0.0
    %2352 = vmatprep.subr.mxu0 0.0
    %2353 = vmatpush1.msra.mxu0 0.0
    %2354 = vmatprep.subr.mxu0 0.0
    %2355 = vmatpush1.msra.mxu0 0.0
    %2356 = vmatprep.subr.mxu0 0.0
    %2357 = vmatpush1.msra.mxu0 0.0
    %2358 = vmatprep.subr.mxu0 0.0
    %2359 = vmatpush1.msra.mxu0 0.0
    %2360 = vmatprep.subr.mxu0 0.0
    %2361 = vmatpush1.msra.mxu0 0.0
    %2362 = vmatprep.subr.mxu0 0.0
    %2363 = vmatpush1.msra.mxu0 0.0
    %2364 = vmatprep.subr.mxu0 0.0
    %2365 = vmatpush1.msra.mxu0 0.0
    %2366 = vmatprep.subr.mxu0 0.0
    %2367 = vmatpush1.msra.mxu0 0.0
    %2368 = vmatprep.subr.mxu0 0.0
    %2369 = vmatpush1.msra.mxu0 0.0
    %2370 = vmatprep.subr.mxu0 0.0
    %2371 = vmatpush1.msra.mxu0 0.0
    %2372 = vmatprep.subr.mxu0 0.0
    %2373 = vmatpush1.msra.mxu0 0.0
    %2374 = vmatprep.subr.mxu0 0.0
    %2375 = vmatpush1.msra.mxu0 0.0
    %2376 = vmatprep.subr.mxu0 0.0
    %2377 = vmatpush1.msra.mxu0 0.0
    %2378 = vmatprep.mubr.f32.mxu0 0.0
    %2379 = vmatmul.mubr.f32.gmra.mrb[0].mxu0 %v2309
    %v2380 = vpop.f32.mrb[0].mxu0
    %v2381 = vadd.f32 0.0, %v2380
    %v2382 = vpop.f32.mrb[0].mxu0
    %2383 = vmatprep.mubr.f32.mxu0 0.0
    %2384 = vmatmul.mubr.f32.gmra.mrb[0].mxu0 %v2312
    %v2385 = vpop.f32.mrb[0].mxu0
    %v2386 = vadd.f32 0.0, %v2385
    %v2387 = vpop.f32.mrb[0].mxu0
    %2388 = vdwg.mxu0
    %v2389 = vadd.f32 %v2297, %v2381
    %v2390 = vadd.f32 %v2302, %v2386
    %v2391 = vld [vmem:[%s12] sm:$0x1]
    %v2393 = vlaneseq
    %v2394 = vshrl.u32 %v2393, 7
    %v2395 = vsub.s32 0, %v2394
    %v2396 = vrot.slane %v2391, %v2395
    %v2398 = vadd.f32 %v2389, %v2396
    %v2399 = vadd.f32 %v2390, %v2396
    %v2400 = vmul.f32 %v2398, 0.70710677
    %v2401 = vmul.f32 %v2399, 0.70710677
    %v2402 = vand.u32 2147483647, %v2400
    %v2403 = vand.u32 2147483647, %v2401
    %v2404 = vmul.f32 %v2402, 0.3275911
    %v2405 = vmul.f32 %v2403, 0.3275911
    %v2406 = vadd.f32 %v2404, 1.0
    %v2407 = vadd.f32 %v2405, 1.0
    %v2408 = vrcp.pop %v2406
    %v2409 = vrcp.pop %v2407
    %v2410 = vmul.f32 %v2408, 1.0614054
    %v2411 = vmul.f32 %v2409, 1.0614054
    %v2412 = vadd.f32 %v2410, -1.4531521
    %v2413 = vadd.f32 %v2411, -1.4531521
    %v2414 = vmul.f32 %v2408, %v2412
    %v2415 = vmul.f32 %v2409, %v2413
    %v2416 = vadd.f32 %v2414, 1.4214138
    %v2417 = vadd.f32 %v2415, 1.4214138
    %v2418 = vmul.f32 %v2408, %v2416
    %v2419 = vmul.f32 %v2409, %v2417
    %v2420 = vadd.f32 %v2418, -0.28449672
    %v2421 = vadd.f32 %v2419, -0.28449672
    %v2422 = vmul.f32 %v2408, %v2420
    %v2423 = vmul.f32 %v2409, %v2421
    %v2424 = vadd.f32 %v2422, 0.2548296
    %v2425 = vadd.f32 %v2423, 0.2548296
    %v2426 = vmul.f32 %v2408, %v2424
    %v2427 = vmul.f32 %v2409, %v2425
    %v2428 = vsub.f32 0.0, %v2402
    %v2429 = vsub.f32 0.0, %v2403
    %v2430 = vmul.f32 %v2428, %v2402
    %v2431 = vmul.f32 %v2429, %v2403
    %v2432 = vmul.f32 %v2430, 1.442695
    %v2433 = vpow.pop %v2432
    %v2434 = vmul.f32 %v2431, 1.442695
    %v2435 = vpow.pop %v2434
    %v2436 = vmul.f32 %v2426, %v2433
    %v2437 = vmul.f32 %v2427, %v2435
    %v2438 = vsub.f32 1.0, %v2436
    %v2439 = vsub.f32 1.0, %v2437
    %vm2440 = vcmp.lt.f32.partialorder %v2400, 0.0
    %vm2441 = vcmp.lt.f32.partialorder %v2401, 0.0
    %v2442 = vsub.f32 0.0, %v2438
    %v2443 = vsub.f32 0.0, %v2439
    %v2444 = vsel %vm2440, %v2442, %v2438
    %v2445 = vsel %vm2441, %v2443, %v2439
    %v2446 = vmul.f32 %v2398, 0.5
    %v2447 = vmul.f32 %v2399, 0.5
    %v2448 = vadd.f32 %v2444, 1.0
    %v2449 = vadd.f32 %v2445, 1.0
    %v2450 = vmul.f32 %v2446, %v2448
    %v2451 = vmul.f32 %v2447, %v2449
    %v2452 = vpack.c.bf16 %v2451, %v2450
    %v2453 = vld [vmem:[%s14] sm:$0xff]
    %v2454 = vld [vmem:[%s14 + $0x8] sm:$0xff]
    %v2455 = vld [vmem:[%s14 + $0x10] sm:$0xff]
    %v2456 = vld [vmem:[%s14 + $0x18] sm:$0xff]
    %v2457 = vld [vmem:[%s14 + $0x20] sm:$0xff]
    %v2458 = vld [vmem:[%s14 + $0x28] sm:$0xff]
    %v2459 = vld [vmem:[%s14 + $0x30] sm:$0xff]
    %v2460 = vld [vmem:[%s14 + $0x38] sm:$0xff]
    %v2461 = vld [vmem:[%s14 + $0x40] sm:$0xff]
    %v2462 = vld [vmem:[%s14 + $0x48] sm:$0xff]
    %v2463 = vld [vmem:[%s14 + $0x50] sm:$0xff]
    %v2464 = vld [vmem:[%s14 + $0x58] sm:$0xff]
    %v2465 = vld [vmem:[%s14 + $0x60] sm:$0xff]
    %v2466 = vld [vmem:[%s14 + $0x68] sm:$0xff]
    %v2467 = vld [vmem:[%s14 + $0x70] sm:$0xff]
    %v2468 = vld [vmem:[%s14 + $0x78] sm:$0xff]
    %v2485 = vunpack.c.l.b16 %v2453
    %v2486 = vunpack.c.h.b16 %v2453
    %v2487 = vunpack.c.l.b16 %v2454
    %v2488 = vunpack.c.h.b16 %v2454
    %v2489 = vunpack.c.l.b16 %v2455
    %v2490 = vunpack.c.h.b16 %v2455
    %v2491 = vunpack.c.l.b16 %v2456
    %v2492 = vunpack.c.h.b16 %v2456
    %v2493 = vunpack.c.l.b16 %v2457
    %v2494 = vunpack.c.h.b16 %v2457
    %v2495 = vunpack.c.l.b16 %v2458
    %v2496 = vunpack.c.h.b16 %v2458
    %v2497 = vunpack.c.l.b16 %v2459
    %v2498 = vunpack.c.h.b16 %v2459
    %v2499 = vunpack.c.l.b16 %v2460
    %v2500 = vunpack.c.h.b16 %v2460
    %v2501 = vunpack.c.l.b16 %v2461
    %v2502 = vunpack.c.h.b16 %v2461
    %v2503 = vunpack.c.l.b16 %v2462
    %v2504 = vunpack.c.h.b16 %v2462
    %v2505 = vunpack.c.l.b16 %v2463
    %v2506 = vunpack.c.h.b16 %v2463
    %v2507 = vunpack.c.l.b16 %v2464
    %v2508 = vunpack.c.h.b16 %v2464
    %v2509 = vunpack.c.l.b16 %v2465
    %v2510 = vunpack.c.h.b16 %v2465
    %v2511 = vunpack.c.l.b16 %v2466
    %v2512 = vunpack.c.h.b16 %v2466
    %v2513 = vunpack.c.l.b16 %v2467
    %v2514 = vunpack.c.h.b16 %v2467
    %v2515 = vunpack.c.l.b16 %v2468
    %v2516 = vunpack.c.h.b16 %v2468
    %v2517 = vpack.c.b16 %v2487, %v2485
    %v2518 = vpack.c.b16 %v2488, %v2486
    %v2519 = vpack.c.b16 %v2491, %v2489
    %v2520 = vpack.c.b16 %v2492, %v2490
    %v2521 = vpack.c.b16 %v2495, %v2493
    %v2522 = vpack.c.b16 %v2496, %v2494
    %v2523 = vpack.c.b16 %v2499, %v2497
    %v2524 = vpack.c.b16 %v2500, %v2498
    %v2525 = vpack.c.b16 %v2503, %v2501
    %v2526 = vpack.c.b16 %v2504, %v2502
    %v2527 = vpack.c.b16 %v2507, %v2505
    %v2528 = vpack.c.b16 %v2508, %v2506
    %v2529 = vpack.c.b16 %v2511, %v2509
    %v2530 = vpack.c.b16 %v2512, %v2510
    %v2531 = vpack.c.b16 %v2515, %v2513
    %v2532 = vpack.c.b16 %v2516, %v2514
    %2549 = vmatprep.subr.bf16.mxu0 %v2518
    %2550 = vmatpush1.bf16.msra.mxu0 %v2517
    %2551 = vmatprep.subr.bf16.mxu0 %v2520
    %2552 = vmatpush1.bf16.msra.mxu0 %v2519
    %2553 = vmatprep.subr.bf16.mxu0 %v2522
    %2554 = vmatpush1.bf16.msra.mxu0 %v2521
    %2555 = vmatprep.subr.bf16.mxu0 %v2524
    %2556 = vmatpush1.bf16.msra.mxu0 %v2523
    %2557 = vmatprep.subr.bf16.mxu0 %v2526
    %2558 = vmatpush1.bf16.msra.mxu0 %v2525
    %2559 = vmatprep.subr.bf16.mxu0 %v2528
    %2560 = vmatpush1.bf16.msra.mxu0 %v2527
    %2561 = vmatprep.subr.bf16.mxu0 %v2530
    %2562 = vmatpush1.bf16.msra.mxu0 %v2529
    %2563 = vmatprep.subr.bf16.mxu0 %v2532
    %2564 = vmatpush1.bf16.msra.mxu0 %v2531
    %2565 = vmatprep.subr.bf16.mxu0 0
    %2566 = vmatpush1.bf16.msra.mxu0 0
    %2567 = vmatprep.subr.bf16.mxu0 0
    %2568 = vmatpush1.bf16.msra.mxu0 0
    %2569 = vmatprep.subr.bf16.mxu0 0
    %2570 = vmatpush1.bf16.msra.mxu0 0
    %2571 = vmatprep.subr.bf16.mxu0 0
    %2572 = vmatpush1.bf16.msra.mxu0 0
    %2573 = vmatprep.subr.bf16.mxu0 0
    %2574 = vmatpush1.bf16.msra.mxu0 0
    %2575 = vmatprep.subr.bf16.mxu0 0
    %2576 = vmatpush1.bf16.msra.mxu0 0
    %2577 = vmatprep.subr.bf16.mxu0 0
    %2578 = vmatpush1.bf16.msra.mxu0 0
    %2579 = vmatprep.subr.bf16.mxu0 0
    %2580 = vmatpush1.bf16.msra.mxu0 0
    %2581 = vmatprep.mubr.bf16.mxu0 0
    %2582 = vmatmul.mubr.bf16.gmra.mrb[0].mxu0 %v2452
    %v2583 = vpop.f32.mrb[0].mxu0
    %v2584 = vadd.f32 0.0, %v2583
    %v2585 = vpop.f32.mrb[0].mxu0
    %v2586 = vadd.f32 0.0, %v2585
    %v2587 = vpop.f32.mrb[0].mxu0
    %v2588 = vadd.f32 0.0, %v2587
    %v2589 = vpop.f32.mrb[0].mxu0
    %v2590 = vadd.f32 0.0, %v2589
    %2591 = vdwg.mxu0
    %v2592 = vld [vmem:[#allocation6] sm:$0xff]
    %s2593 = scalar_lea.vmem [#allocation6], 8
    %v2594 = vld [vmem:[%s2593] sm:$0xff]
    %2597 = vrot.lane.b32.xlu0 %v2584, 64
    %v2598 = vpop.permute.xlu0 %2597
    %2599 = vrot.lane.b32.xlu0 %v2588, 64
    %v2600 = vpop.permute.xlu0 %2599
    %v2604 = vsel %vm2223, %v2594, 0
    %2606 = vmatprep.subr.mxu0 0.0
    %2607 = vmatpush1.msra.mxu0 %v2598
    %2608 = vmatprep.subr.mxu0 0.0
    %2609 = vmatpush1.msra.mxu0 %v2600
    %2610 = vmatprep.subr.mxu0 0.0
    %2611 = vmatpush1.msra.mxu0 0.0
    %2612 = vmatprep.subr.mxu0 0.0
    %2613 = vmatpush1.msra.mxu0 0.0
    %2614 = vmatprep.subr.mxu0 0.0
    %2615 = vmatpush1.msra.mxu0 0.0
    %2616 = vmatprep.subr.mxu0 0.0
    %2617 = vmatpush1.msra.mxu0 0.0
    %2618 = vmatprep.subr.mxu0 0.0
    %2619 = vmatpush1.msra.mxu0 0.0
    %2620 = vmatprep.subr.mxu0 0.0
    %2621 = vmatpush1.msra.mxu0 0.0
    %2622 = vmatprep.subr.mxu0 0.0
    %2623 = vmatpush1.msra.mxu0 0.0
    %2624 = vmatprep.subr.mxu0 0.0
    %2625 = vmatpush1.msra.mxu0 0.0
    %2626 = vmatprep.subr.mxu0 0.0
    %2627 = vmatpush1.msra.mxu0 0.0
    %2628 = vmatprep.subr.mxu0 0.0
    %2629 = vmatpush1.msra.mxu0 0.0
    %2630 = vmatprep.subr.mxu0 0.0
    %2631 = vmatpush1.msra.mxu0 0.0
    %2632 = vmatprep.subr.mxu0 0.0
    %2633 = vmatpush1.msra.mxu0 0.0
    %2634 = vmatprep.subr.mxu0 0.0
    %2635 = vmatpush1.msra.mxu0 0.0
    %2636 = vmatprep.subr.mxu0 0.0
    %2637 = vmatpush1.msra.mxu0 0.0
    %2638 = vmatprep.subr.mxu0 0.0
    %2639 = vmatpush1.msra.mxu0 0.0
    %2640 = vmatprep.subr.mxu0 0.0
    %2641 = vmatpush1.msra.mxu0 0.0
    %2642 = vmatprep.subr.mxu0 0.0
    %2643 = vmatpush1.msra.mxu0 0.0
    %2644 = vmatprep.subr.mxu0 0.0
    %2645 = vmatpush1.msra.mxu0 0.0
    %2646 = vmatprep.subr.mxu0 0.0
    %2647 = vmatpush1.msra.mxu0 0.0
    %2648 = vmatprep.subr.mxu0 0.0
    %2649 = vmatpush1.msra.mxu0 0.0
    %2650 = vmatprep.subr.mxu0 0.0
    %2651 = vmatpush1.msra.mxu0 0.0
    %2652 = vmatprep.subr.mxu0 0.0
    %2653 = vmatpush1.msra.mxu0 0.0
    %2654 = vmatprep.subr.mxu0 0.0
    %2655 = vmatpush1.msra.mxu0 0.0
    %2656 = vmatprep.subr.mxu0 0.0
    %2657 = vmatpush1.msra.mxu0 0.0
    %2658 = vmatprep.subr.mxu0 0.0
    %2659 = vmatpush1.msra.mxu0 0.0
    %2660 = vmatprep.subr.mxu0 0.0
    %2661 = vmatpush1.msra.mxu0 0.0
    %2662 = vmatprep.subr.mxu0 0.0
    %2663 = vmatpush1.msra.mxu0 0.0
    %2664 = vmatprep.subr.mxu0 0.0
    %2665 = vmatpush1.msra.mxu0 0.0
    %2666 = vmatprep.subr.mxu0 0.0
    %2667 = vmatpush1.msra.mxu0 0.0
    %2668 = vmatprep.subr.mxu0 0.0
    %2669 = vmatpush1.msra.mxu0 0.0
    %2670 = vmatprep.mubr.f32.mxu0 0.0
    %2671 = vmatmul.mubr.f32.gmra.mrb[0].mxu0 %v2604
    %v2672 = vpop.f32.mrb[0].mxu0
    %v2673 = vadd.f32 0.0, %v2672
    %v2674 = vpop.f32.mrb[0].mxu0
    %2675 = vdwg.mxu0
    %v2677 = vsel %vm2223, %v2592, 0
    %2679 = vmatprep.subr.mxu0 0.0
    %2680 = vmatpush1.msra.mxu0 %v2584
    %2681 = vmatprep.subr.mxu0 0.0
    %2682 = vmatpush1.msra.mxu0 %v2588
    %2683 = vmatprep.subr.mxu0 0.0
    %2684 = vmatpush1.msra.mxu0 0.0
    %2685 = vmatprep.subr.mxu0 0.0
    %2686 = vmatpush1.msra.mxu0 0.0
    %2687 = vmatprep.subr.mxu0 0.0
    %2688 = vmatpush1.msra.mxu0 0.0
    %2689 = vmatprep.subr.mxu0 0.0
    %2690 = vmatpush1.msra.mxu0 0.0
    %2691 = vmatprep.subr.mxu0 0.0
    %2692 = vmatpush1.msra.mxu0 0.0
    %2693 = vmatprep.subr.mxu0 0.0
    %2694 = vmatpush1.msra.mxu0 0.0
    %2695 = vmatprep.subr.mxu0 0.0
    %2696 = vmatpush1.msra.mxu0 0.0
    %2697 = vmatprep.subr.mxu0 0.0
    %2698 = vmatpush1.msra.mxu0 0.0
    %2699 = vmatprep.subr.mxu0 0.0
    %2700 = vmatpush1.msra.mxu0 0.0
    %2701 = vmatprep.subr.mxu0 0.0
    %2702 = vmatpush1.msra.mxu0 0.0
    %2703 = vmatprep.subr.mxu0 0.0
    %2704 = vmatpush1.msra.mxu0 0.0
    %2705 = vmatprep.subr.mxu0 0.0
    %2706 = vmatpush1.msra.mxu0 0.0
    %2707 = vmatprep.subr.mxu0 0.0
    %2708 = vmatpush1.msra.mxu0 0.0
    %2709 = vmatprep.subr.mxu0 0.0
    %2710 = vmatpush1.msra.mxu0 0.0
    %2711 = vmatprep.subr.mxu0 0.0
    %2712 = vmatpush1.msra.mxu0 0.0
    %2713 = vmatprep.subr.mxu0 0.0
    %2714 = vmatpush1.msra.mxu0 0.0
    %2715 = vmatprep.subr.mxu0 0.0
    %2716 = vmatpush1.msra.mxu0 0.0
    %2717 = vmatprep.subr.mxu0 0.0
    %2718 = vmatpush1.msra.mxu0 0.0
    %2719 = vmatprep.subr.mxu0 0.0
    %2720 = vmatpush1.msra.mxu0 0.0
    %2721 = vmatprep.subr.mxu0 0.0
    %2722 = vmatpush1.msra.mxu0 0.0
    %2723 = vmatprep.subr.mxu0 0.0
    %2724 = vmatpush1.msra.mxu0 0.0
    %2725 = vmatprep.subr.mxu0 0.0
    %2726 = vmatpush1.msra.mxu0 0.0
    %2727 = vmatprep.subr.mxu0 0.0
    %2728 = vmatpush1.msra.mxu0 0.0
    %2729 = vmatprep.subr.mxu0 0.0
    %2730 = vmatpush1.msra.mxu0 0.0
    %2731 = vmatprep.subr.mxu0 0.0
    %2732 = vmatpush1.msra.mxu0 0.0
    %2733 = vmatprep.subr.mxu0 0.0
    %2734 = vmatpush1.msra.mxu0 0.0
    %2735 = vmatprep.subr.mxu0 0.0
    %2736 = vmatpush1.msra.mxu0 0.0
    %2737 = vmatprep.subr.mxu0 0.0
    %2738 = vmatpush1.msra.mxu0 0.0
    %2739 = vmatprep.subr.mxu0 0.0
    %2740 = vmatpush1.msra.mxu0 0.0
    %2741 = vmatprep.subr.mxu0 0.0
    %2742 = vmatpush1.msra.mxu0 0.0
    %2743 = vmatprep.mubr.f32.mxu0 0.0
    %2744 = vmatmul.mubr.f32.gmra.mrb[0].mxu0 %v2677
    %v2745 = vpop.f32.mrb[0].mxu0
    %v2746 = vadd.f32 %v2673, %v2745
    %v2747 = vpop.f32.mrb[0].mxu0
    %2748 = vdwg.mxu0
    %s2749 = scalar_lea.vmem [#allocation6], 16
    %v2750 = vld [vmem:[%s2749] sm:$0xff]
    %v2752 = vsel %vm2223, %v2750, 0
    %2754 = vmatprep.subr.mxu0 0.0
    %2755 = vmatpush1.msra.mxu0 %v2586
    %2756 = vmatprep.subr.mxu0 0.0
    %2757 = vmatpush1.msra.mxu0 %v2590
    %2758 = vmatprep.subr.mxu0 0.0
    %2759 = vmatpush1.msra.mxu0 0.0
    %2760 = vmatprep.subr.mxu0 0.0
    %2761 = vmatpush1.msra.mxu0 0.0
    %2762 = vmatprep.subr.mxu0 0.0
    %2763 = vmatpush1.msra.mxu0 0.0
    %2764 = vmatprep.subr.mxu0 0.0
    %2765 = vmatpush1.msra.mxu0 0.0
    %2766 = vmatprep.subr.mxu0 0.0
    %2767 = vmatpush1.msra.mxu0 0.0
    %2768 = vmatprep.subr.mxu0 0.0
    %2769 = vmatpush1.msra.mxu0 0.0
    %2770 = vmatprep.subr.mxu0 0.0
    %2771 = vmatpush1.msra.mxu0 0.0
    %2772 = vmatprep.subr.mxu0 0.0
    %2773 = vmatpush1.msra.mxu0 0.0
    %2774 = vmatprep.subr.mxu0 0.0
    %2775 = vmatpush1.msra.mxu0 0.0
    %2776 = vmatprep.subr.mxu0 0.0
    %2777 = vmatpush1.msra.mxu0 0.0
    %2778 = vmatprep.subr.mxu0 0.0
    %2779 = vmatpush1.msra.mxu0 0.0
    %2780 = vmatprep.subr.mxu0 0.0
    %2781 = vmatpush1.msra.mxu0 0.0
    %2782 = vmatprep.subr.mxu0 0.0
    %2783 = vmatpush1.msra.mxu0 0.0
    %2784 = vmatprep.subr.mxu0 0.0
    %2785 = vmatpush1.msra.mxu0 0.0
    %2786 = vmatprep.subr.mxu0 0.0
    %2787 = vmatpush1.msra.mxu0 0.0
    %2788 = vmatprep.subr.mxu0 0.0
    %2789 = vmatpush1.msra.mxu0 0.0
    %2790 = vmatprep.subr.mxu0 0.0
    %2791 = vmatpush1.msra.mxu0 0.0
    %2792 = vmatprep.subr.mxu0 0.0
    %2793 = vmatpush1.msra.mxu0 0.0
    %2794 = vmatprep.subr.mxu0 0.0
    %2795 = vmatpush1.msra.mxu0 0.0
    %2796 = vmatprep.subr.mxu0 0.0
    %2797 = vmatpush1.msra.mxu0 0.0
    %2798 = vmatprep.subr.mxu0 0.0
    %2799 = vmatpush1.msra.mxu0 0.0
    %2800 = vmatprep.subr.mxu0 0.0
    %2801 = vmatpush1.msra.mxu0 0.0
    %2802 = vmatprep.subr.mxu0 0.0
    %2803 = vmatpush1.msra.mxu0 0.0
    %2804 = vmatprep.subr.mxu0 0.0
    %2805 = vmatpush1.msra.mxu0 0.0
    %2806 = vmatprep.subr.mxu0 0.0
    %2807 = vmatpush1.msra.mxu0 0.0
    %2808 = vmatprep.subr.mxu0 0.0
    %2809 = vmatpush1.msra.mxu0 0.0
    %2810 = vmatprep.subr.mxu0 0.0
    %2811 = vmatpush1.msra.mxu0 0.0
    %2812 = vmatprep.subr.mxu0 0.0
    %2813 = vmatpush1.msra.mxu0 0.0
    %2814 = vmatprep.subr.mxu0 0.0
    %2815 = vmatpush1.msra.mxu0 0.0
    %2816 = vmatprep.subr.mxu0 0.0
    %2817 = vmatpush1.msra.mxu0 0.0
    %2818 = vmatprep.mubr.f32.mxu0 0.0
    %2819 = vmatmul.mubr.f32.gmra.mrb[0].mxu0 %v2752
    %v2820 = vpop.f32.mrb[0].mxu0
    %v2821 = vadd.f32 0.0, %v2820
    %v2822 = vpop.f32.mrb[0].mxu0
    %2823 = vdwg.mxu0
    %v2824 = vadd.f32 %v2746, %v2821
    %v2825 = vld [vmem:[%s15] sm:$0x1]
    %v2827 = vlaneseq
    %v2828 = vshrl.u32 %v2827, 7
    %v2829 = vsub.s32 0, %v2828
    %v2830 = vrot.slane %v2825, %v2829
    %v2832 = vadd.f32 %v2824, %v2830
    %v2833 = vmul.f32 %v2832, 0.70710677
    %v2834 = vand.u32 2147483647, %v2833
    %v2835 = vmul.f32 %v2834, 0.3275911
    %v2836 = vadd.f32 %v2835, 1.0
    %v2837 = vrcp.pop %v2836
    %v2838 = vmul.f32 %v2837, 1.0614054
    %v2839 = vadd.f32 %v2838, -1.4531521
    %v2840 = vmul.f32 %v2837, %v2839
    %v2841 = vadd.f32 %v2840, 1.4214138
    %v2842 = vmul.f32 %v2837, %v2841
    %v2843 = vadd.f32 %v2842, -0.28449672
    %v2844 = vmul.f32 %v2837, %v2843
    %v2845 = vadd.f32 %v2844, 0.2548296
    %v2846 = vmul.f32 %v2837, %v2845
    %v2847 = vsub.f32 0.0, %v2834
    %v2848 = vmul.f32 %v2847, %v2834
    %v2849 = vmul.f32 %v2848, 1.442695
    %v2850 = vpow.pop %v2849
    %v2851 = vmul.f32 %v2846, %v2850
    %v2852 = vsub.f32 1.0, %v2851
    %vm2853 = vcmp.lt.f32.partialorder %v2833, 0.0
    %v2854 = vsub.f32 0.0, %v2852
    %v2855 = vsel %vm2853, %v2854, %v2852
    %v2856 = vmul.f32 %v2832, 0.5
    %v2857 = vadd.f32 %v2855, 1.0
    %v2858 = vmul.f32 %v2856, %v2857
    %v2859 = vpack.c.bf16 %v2858, %v2858
    %vm2860 = vcmask 516096
    %vm2861 = vsmask.f32 256
    %vm2862 = vmand %vm2860, %vm2861
    %v2863 = vld [vmem:[#allocation2] sm:$0x1]
    %v2864 = vsel %vm2862, %v2859, %v2863
    %2865 = vst [vmem:[#allocation2] sm:$0x1] %v2864
    %v2868 = vunpack.c.l.s4 1966171168
    %v2869 = vunpack.c.0.s8 %v2868
    %v2870 = vlaneseq
    %v2871 = vshrl.u32 %v2870, 7
    %v2872 = vsub.s32 %v2869, %v2871
    %v2873 = vrot.slane %v2859, %v2872
    %v2875 = vunpack.c.l.s4 1966171168
    %v2876 = vunpack.c.0.s8 %v2875
    %v2877 = vlaneseq
    %v2878 = vshrl.u32 %v2877, 7
    %v2879 = vsub.s32 %v2876, %v2878
    %v2880 = vrot.slane %v2873, %v2879
    %v2882 = vshrl.u32 %v2880, 16
    %v2884 = vrot.slane %v2882, 7
    %v2885 = vrot.slane %v2884, 1
    %2886 = vrot.lane.b32.xlu0 %v2885, 64
    %v2887 = vpop.permute.xlu0 %2886
    %vm2889 = vcmask 1040896
    %vm2890 = vmand %vm2889, %vm2861
    %v2891 = vld [vmem:[#allocation2] sm:$0x1]
    %v2892 = vsel %vm2890, %v2887, %v2891
    %2893 = vst [vmem:[#allocation2] sm:$0x1] %v2892
    %v2894 = vcombine.high %v2873, %v2873
    %v2896 = vunpack.c.l.s4 1966171168
    %v2897 = vunpack.c.0.s8 %v2896
    %v2898 = vlaneseq
    %v2899 = vshrl.u32 %v2898, 7
    %v2900 = vsub.s32 %v2897, %v2899
    %v2901 = vrot.slane %v2894, %v2900
    %v2903 = vld [vmem:[#allocation2 + $0x1] sm:$0x1]
    %v2904 = vsel %vm2862, %v2901, %v2903
    %2905 = vst [vmem:[#allocation2 + $0x1] sm:$0x1] %v2904
    %v2907 = vshrl.u32 %v2901, 16
    %v2909 = vrot.slane %v2907, 7
    %v2910 = vrot.slane %v2909, 1
    %2911 = vrot.lane.b32.xlu0 %v2910, 64
    %v2912 = vpop.permute.xlu0 %2911
    %v2914 = vld [vmem:[#allocation2 + $0x1] sm:$0x1]
    %v2915 = vsel %vm2890, %v2912, %v2914
    %2916 = vst [vmem:[#allocation2 + $0x1] sm:$0x1] %v2915
    %v2917 = vcombine.high %v2880, %v2880
    %v2919 = vshll.u32 %v2917, 16
    %vm2922 = vsmask.f32 7938
    %vm2923 = vmand %vm2860, %vm2922
    %v2924 = vld [vmem:[#allocation2] sm:$0x1]
    %v2925 = vsel %vm2923, %v2919, %v2924
    %2926 = vst [vmem:[#allocation2] sm:$0x1] %v2925
    %2927 = vrot.lane.b32.xlu0 %v2917, 64
    %v2928 = vpop.permute.xlu0 %2927
    %vm2930 = vmand %vm2889, %vm2922
    %v2931 = vld [vmem:[#allocation2] sm:$0x1]
    %v2932 = vsel %vm2930, %v2928, %v2931
    %2933 = vst [vmem:[#allocation2] sm:$0x1] %v2932
    %v2934 = vcombine.high %v2901, %v2901
    %v2936 = vshll.u32 %v2934, 16
    %v2939 = vld [vmem:[#allocation2 + $0x1] sm:$0x1]
    %v2940 = vsel %vm2923, %v2936, %v2939
    %2941 = vst [vmem:[#allocation2 + $0x1] sm:$0x1] %v2940
    %2942 = vrot.lane.b32.xlu0 %v2934, 64
    %v2943 = vpop.permute.xlu0 %2942
    %v2945 = vld [vmem:[#allocation2 + $0x1] sm:$0x1]
    %v2946 = vsel %vm2930, %v2943, %v2945
    %2947 = vst [vmem:[#allocation2 + $0x1] sm:$0x1] %v2946
    %v2948 = vld [vmem:[#allocation2] sm:$0x3]
    %v2949 = vld [vmem:[%s16] sm:$0xf]
    %v2950 = vld [vmem:[%s16 + $0x4] sm:$0xf]
    %v2951 = vld [vmem:[%s16 + $0x8] sm:$0xf]
    %v2952 = vld [vmem:[%s16 + $0xc] sm:$0xf]
    %v2953 = vld [vmem:[%s16 + $0x10] sm:$0xf]
    %v2954 = vld [vmem:[%s16 + $0x14] sm:$0xf]
    %v2955 = vld [vmem:[%s16 + $0x18] sm:$0xf]
    %v2956 = vld [vmem:[%s16 + $0x1c] sm:$0xf]
    %v2957 = vld [vmem:[%s16 + $0x20] sm:$0xf]
    %v2958 = vld [vmem:[%s16 + $0x24] sm:$0xf]
    %v2959 = vld [vmem:[%s16 + $0x28] sm:$0xf]
    %v2960 = vld [vmem:[%s16 + $0x2c] sm:$0xf]
    %v2961 = vld [vmem:[%s16 + $0x30] sm:$0xf]
    %v2962 = vld [vmem:[%s16 + $0x34] sm:$0xf]
    %v2963 = vld [vmem:[%s16 + $0x38] sm:$0xf]
    %v2964 = vld [vmem:[%s16 + $0x3c] sm:$0xf]
    %v2965 = vld [vmem:[%s16 + $0x40] sm:$0xf]
    %v2966 = vld [vmem:[%s16 + $0x44] sm:$0xf]
    %v2967 = vld [vmem:[%s16 + $0x48] sm:$0xf]
    %v2968 = vld [vmem:[%s16 + $0x4c] sm:$0xf]
    %v2969 = vld [vmem:[%s16 + $0x50] sm:$0xf]
    %v2970 = vld [vmem:[%s16 + $0x54] sm:$0xf]
    %v2971 = vld [vmem:[%s16 + $0x58] sm:$0xf]
    %v2972 = vld [vmem:[%s16 + $0x5c] sm:$0xf]
    %v2973 = vld [vmem:[%s16 + $0x60] sm:$0xf]
    %v2974 = vld [vmem:[%s16 + $0x64] sm:$0xf]
    %v2975 = vld [vmem:[%s16 + $0x68] sm:$0xf]
    %v2976 = vld [vmem:[%s16 + $0x6c] sm:$0xf]
    %v2977 = vld [vmem:[%s16 + $0x70] sm:$0xf]
    %v2978 = vld [vmem:[%s16 + $0x74] sm:$0xf]
    %v2979 = vld [vmem:[%s16 + $0x78] sm:$0xf]
    %v2980 = vld [vmem:[%s16 + $0x7c] sm:$0xf]
    %v2981 = vld [vmem:[%s17] sm:$0x1]
    %v2983 = vlaneseq
    %v2984 = vshrl.u32 %v2983, 7
    %v2985 = vsub.s32 0, %v2984
    %v2986 = vrot.slane %v2981, %v2985
    %v2990 = vunpack.c.l.s4 1966171168
    %v2991 = vunpack.c.0.s8 %v2990
    %v2992 = vlaneseq
    %v2993 = vshrl.u32 %v2992, 7
    %v2994 = vsub.s32 %v2991, %v2993
    %v2995 = vrot.slane %v2948, %v2994
    %v2996 = vcombine.high %v2995, %v2995
    %v2998 = vunpack.c.l.s4 1966171168
    %v2999 = vunpack.c.0.s8 %v2998
    %v3000 = vlaneseq
    %v3001 = vshrl.u32 %v3000, 7
    %v3002 = vsub.s32 %v2999, %v3001
    %v3003 = vrot.slane %v2995, %v3002
    %v3005 = vunpack.c.l.s4 1966171168
    %v3006 = vunpack.c.0.s8 %v3005
    %v3007 = vlaneseq
    %v3008 = vshrl.u32 %v3007, 7
    %v3009 = vsub.s32 %v3006, %v3008
    %v3010 = vrot.slane %v2996, %v3009
    %v3045 = vunpack.c.l.b16 %v2949
    %v3046 = vunpack.c.l.b16 %v2950
    %v3047 = vunpack.c.l.b16 %v2951
    %v3048 = vunpack.c.l.b16 %v2952
    %v3049 = vunpack.c.l.b16 %v2953
    %v3050 = vunpack.c.l.b16 %v2954
    %v3051 = vunpack.c.l.b16 %v2955
    %v3052 = vunpack.c.l.b16 %v2956
    %v3053 = vunpack.c.l.b16 %v2957
    %v3054 = vunpack.c.l.b16 %v2958
    %v3055 = vunpack.c.l.b16 %v2959
    %v3056 = vunpack.c.l.b16 %v2960
    %v3057 = vunpack.c.l.b16 %v2961
    %v3058 = vunpack.c.l.b16 %v2962
    %v3059 = vunpack.c.l.b16 %v2963
    %v3060 = vunpack.c.l.b16 %v2964
    %v3061 = vunpack.c.l.b16 %v2965
    %v3062 = vunpack.c.l.b16 %v2966
    %v3063 = vunpack.c.l.b16 %v2967
    %v3064 = vunpack.c.l.b16 %v2968
    %v3065 = vunpack.c.l.b16 %v2969
    %v3066 = vunpack.c.l.b16 %v2970
    %v3067 = vunpack.c.l.b16 %v2971
    %v3068 = vunpack.c.l.b16 %v2972
    %v3069 = vunpack.c.l.b16 %v2973
    %v3070 = vunpack.c.l.b16 %v2974
    %v3071 = vunpack.c.l.b16 %v2975
    %v3072 = vunpack.c.l.b16 %v2976
    %v3073 = vunpack.c.l.b16 %v2977
    %v3074 = vunpack.c.l.b16 %v2978
    %v3075 = vunpack.c.l.b16 %v2979
    %v3076 = vunpack.c.l.b16 %v2980
    %v3077 = vpack.c.b16 %v3046, %v3045
    %v3078 = vpack.c.b16 %v3048, %v3047
    %v3079 = vpack.c.b16 %v3050, %v3049
    %v3080 = vpack.c.b16 %v3052, %v3051
    %v3081 = vpack.c.b16 %v3054, %v3053
    %v3082 = vpack.c.b16 %v3056, %v3055
    %v3083 = vpack.c.b16 %v3058, %v3057
    %v3084 = vpack.c.b16 %v3060, %v3059
    %v3085 = vpack.c.b16 %v3062, %v3061
    %v3086 = vpack.c.b16 %v3064, %v3063
    %v3087 = vpack.c.b16 %v3066, %v3065
    %v3088 = vpack.c.b16 %v3068, %v3067
    %v3089 = vpack.c.b16 %v3070, %v3069
    %v3090 = vpack.c.b16 %v3072, %v3071
    %v3091 = vpack.c.b16 %v3074, %v3073
    %v3092 = vpack.c.b16 %v3076, %v3075
    %3109 = vmatprep.subr.bf16.mxu0 0
    %3110 = vmatpush1.bf16.msra.mxu0 %v3077
    %3111 = vmatprep.subr.bf16.mxu0 0
    %3112 = vmatpush1.bf16.msra.mxu0 %v3078
    %3113 = vmatprep.subr.bf16.mxu0 0
    %3114 = vmatpush1.bf16.msra.mxu0 %v3079
    %3115 = vmatprep.subr.bf16.mxu0 0
    %3116 = vmatpush1.bf16.msra.mxu0 %v3080
    %3117 = vmatprep.subr.bf16.mxu0 0
    %3118 = vmatpush1.bf16.msra.mxu0 %v3081
    %3119 = vmatprep.subr.bf16.mxu0 0
    %3120 = vmatpush1.bf16.msra.mxu0 %v3082
    %3121 = vmatprep.subr.bf16.mxu0 0
    %3122 = vmatpush1.bf16.msra.mxu0 %v3083
    %3123 = vmatprep.subr.bf16.mxu0 0
    %3124 = vmatpush1.bf16.msra.mxu0 %v3084
    %3125 = vmatprep.subr.bf16.mxu0 0
    %3126 = vmatpush1.bf16.msra.mxu0 %v3085
    %3127 = vmatprep.subr.bf16.mxu0 0
    %3128 = vmatpush1.bf16.msra.mxu0 %v3086
    %3129 = vmatprep.subr.bf16.mxu0 0
    %3130 = vmatpush1.bf16.msra.mxu0 %v3087
    %3131 = vmatprep.subr.bf16.mxu0 0
    %3132 = vmatpush1.bf16.msra.mxu0 %v3088
    %3133 = vmatprep.subr.bf16.mxu0 0
    %3134 = vmatpush1.bf16.msra.mxu0 %v3089
    %3135 = vmatprep.subr.bf16.mxu0 0
    %3136 = vmatpush1.bf16.msra.mxu0 %v3090
    %3137 = vmatprep.subr.bf16.mxu0 0
    %3138 = vmatpush1.bf16.msra.mxu0 %v3091
    %3139 = vmatprep.subr.bf16.mxu0 0
    %3140 = vmatpush1.bf16.msra.mxu0 %v3092
    %3141 = vmatprep.mubr.bf16.mxu0 %v3010
    %3142 = vmatmul.mubr.bf16.gmra.mrb[0].mxu0 %v3003
    %v3143 = vpop.f32.mrb[0].mxu0
    %v3144 = vadd.f32 %v2986, %v3143
    %v3145 = vpop.f32.mrb[0].mxu0
    %v3146 = vpop.f32.mrb[0].mxu0
    %v3147 = vpop.f32.mrb[0].mxu0
    %3148 = vdwg.mxu0
    %vm3149 = vcmask 123904
    %3150 = vst.msk [vmem:[#allocation8] sm:$0x3] %vm3149, %v3144
    // Predicated region
    $region82: #{encoder_forward.1} parent=1 // pred_check
      _
    $region83: #{encoder_forward.1} parent=1 // pred_check_branch
      %3152 = sbr.rel (0) target = $region85
    $region84: #{encoder_forward.1} parent=1 // pred_region
      %s3154 = ssub.s32 32, 32
      %3155 = vsyncadd [#allocation5], %s3154
      %s3157 = sshll.u32 [#allocation8], 4
      %s3158 = int_to_ptr.vmem [resolvable:$true] %s3157
      %3160 = dma.vmem_to_hbm [thread:$0]  %s3158, 32, %s18, [#allocation5]
    $region85: #{encoder_forward.1} parent=1 // pred_fallthru
      _
    // Predicated region
    $region86: #{encoder_forward.1} parent=1 // pred_check
      _
    $region87: #{encoder_forward.1} parent=1 // pred_check_branch
      %3162 = sbr.rel (0) target = $region89
    $region88: #{encoder_forward.1} parent=1 // pred_region
      %3163 = dma.done [#allocation5], 32
    $region89: #{encoder_forward.1} parent=1 // pred_fallthru
      _
    %3164 = vsyncpa [#allocation4], 1
    %3165 = vsyncpa [#allocation7], 1
    %3166 = vsyncpa [#allocation5], 1

</llo_original>
